<compile_context>
chip_gen: v6e
topology: v6e:2x2x1
jax: 0.10.0
libtpu: 0.0.40
codegen_flags: <defaults>
</compile_context>

<pallas_src>
import functools

import numpy as np

import jax
import jax.numpy as jnp
from jax.experimental import pallas as pl
from jax.experimental.pallas import tpu as pltpu

BN_EPS = 1e-5


# ----------------------------------------------------------------------------
# Fused Pallas kernel: 4 x (conv3x3 -> BN(train) -> ReLU -> maxpool2x2) -> linear
# ----------------------------------------------------------------------------
def _fused_kernel(spatial,            # static: conv-input spatial size of blocks 1..4
                  p1_ref, w1_ref, w234_ref, g_ref, b_ref,
                  m2_ref, m3_ref, m4_ref,
                  s1_ref, s2_ref, s3_ref, s4_ref,
                  wl_ref, bl_ref, out_ref):

    def bn_relu(y, blk):
        # Training-mode batch-norm over all rows (= N*H*W samples per channel),
        # biased variance, computed two-pass (sum of centered squares).
        rows = y.shape[0]
        mean = jnp.sum(y, axis=0, keepdims=True) * (1.0 / rows)
        cent = y - mean
        var = jnp.sum(cent * cent, axis=0, keepdims=True) * (1.0 / rows)
        scale = g_ref[blk:blk + 1, :] * jax.lax.rsqrt(var + BN_EPS)
        return jnp.maximum(cent * scale + b_ref[blk:blk + 1, :], 0.0)

    def pool2x2(z, s_ref, wa):
        # z rows are ordered (n, y, x).  zm[r] = max over the 2x2 window whose top-left
        # corner is row r; the 0/1 decimation matrix S keeps only the even-(y, x) rows,
        # producing rows ordered (n, y//2, x//2).
        rows = z.shape[0]
        zm = z
        for sft in (1, wa, wa + 1):
            zm = jnp.maximum(zm, pltpu.roll(z, (-sft) % rows, axis=0))
        return jnp.dot(s_ref[...], zm, preferred_element_type=jnp.float32)

    def patches(act, m_ref, wa):
        # In-kernel im2col of a (rows, Cin) activation (rows ordered (n, y, x)):
        # each 3x3 tap is a row-shift, zeroed at image borders by a precomputed mask.
        rows = act.shape[0]
        m = m_ref[...]
        cols = []
        for kh in range(3):
            for kw in range(3):
                sft = (kh - 1) * wa + (kw - 1)
                if sft == 0:
                    v = act                       # centre tap: always in-bounds
                else:
                    v = pltpu.roll(act, (-sft) % rows, axis=0)
                    v = v * m[:, kh * 3 + kw:kh * 3 + kw + 1]
                cols.append(v)
        return jnp.concatenate(cols, axis=-1).astype(jnp.bfloat16)

    # ---- block 1 (im2col pre-built on the host; conv bias cancelled by BN).
    y = jnp.dot(p1_ref[...], w1_ref[...], preferred_element_type=jnp.float32)
    act = pool2x2(bn_relu(y, 0), s1_ref, spatial[0])

    # ---- blocks 2..4 (activations stay on-chip).
    blk_cfg = ((m2_ref, s2_ref, spatial[1]),
               (m3_ref, s3_ref, spatial[2]),
               (m4_ref, s4_ref, spatial[3]))
    for k, (m_ref, s_ref, wa) in enumerate(blk_cfg):
        p = patches(act, m_ref, wa)
        y = jnp.dot(p, w234_ref[k], preferred_element_type=jnp.float32)
        act = pool2x2(bn_relu(y, k + 1), s_ref, wa)

    # ---- linear head (final feature map is 1x1, so `act` is already (N, NF)).
    out_ref[...] = (
        jnp.dot(act, wl_ref[...], preferred_element_type=jnp.float32) + bl_ref[...]
    ).astype(out_ref.dtype)


# ----------------------------------------------------------------------------
# Host-side glue (pure JAX / numpy constants)
# ----------------------------------------------------------------------------
def _im2col_rows(x_nhwc):
    """(N,H,W,C) -> (N*H*W, 9*C); 3x3 taps, pad=1; columns ordered (kh, kw, c)."""
    n, h, w, c = x_nhwc.shape
    xp = jnp.pad(x_nhwc, ((0, 0), (1, 1), (1, 1), (0, 0)))
    cols = [xp[:, kh:kh + h, kw:kw + w, :] for kh in range(3) for kw in range(3)]
    return jnp.concatenate(cols, axis=-1).reshape(n * h * w, 9 * c)


def _border_masks(n, h, w):
    """(n*h*w, 9) f32: 1 where the (kh, kw) tap of a row-shifted im2col is in-bounds."""
    yy, xx = np.meshgrid(np.arange(h), np.arange(w), indexing="ij")
    m = np.zeros((h, w, 9), np.float32)
    for kh in range(3):
        for kw in range(3):
            ok = ((yy + kh - 1 >= 0) & (yy + kh - 1 < h)
                  & (xx + kw - 1 >= 0) & (xx + kw - 1 < w))
            m[:, :, kh * 3 + kw] = ok.astype(np.float32)
    m = np.tile(m[None], (n, 1, 1, 1)).reshape(n * h * w, 9)
    return jnp.asarray(m)


def _pool_select(n, h, w):
    """(n*(h//2)*(w//2), n*h*w) 0/1 decimation matrix picking even-(y, x) rows."""
    h2, w2 = h // 2, w // 2
    s = np.zeros((n * h2 * w2, n * h * w), np.float32)
    for nn in range(n):
        for i in range(h2):
            for j in range(w2):
                s[(nn * h2 + i) * w2 + j, (nn * h + 2 * i) * w + 2 * j] = 1.0
    return jnp.asarray(s)


def _conv_w_mat(w):
    """(Cout, Cin, 3, 3) -> (9*Cin, Cout), matching the (kh, kw, c) patch columns."""
    cout, cin = w.shape[0], w.shape[1]
    return jnp.transpose(w, (2, 3, 1, 0)).reshape(9 * cin, cout)


def _full_spec(shape):
    nd = len(shape)

    def idx(i):
        return (0,) * nd

    return pl.BlockSpec(shape, idx)


def forward(x_nchw, params):
    """FewShotClassifier.forward as one fused Pallas TPU kernel call."""
    n, cin, h, w = x_nchw.shape
    nf = params["conv1.weight"].shape[0]
    k_way = params["logits.weight"].shape[0]

    # Fused kernel assumes every 2x2 pool sees an even spatial size and the final
    # feature map is 1x1 (e.g. 16x16 inputs), so final_layer_size == number_filters.
    # TODO(synk): generalize to odd-size (floor) pooling and final spatial > 1
    # (miniImageNet 84x84 -> 5x5), which needs a channel-major flatten for the head.
    assert h == w and h == 16, "fused kernel supports 16x16 inputs (final 1x1 map)"
    assert params["logits.weight"].shape[1] == nf

    spatial = (h, h // 2, h // 4, h // 8)          # conv-input size of blocks 1..4

    x_rows = jnp.transpose(x_nchw, (0, 2, 3, 1))   # NCHW -> NHWC
    p1 = _im2col_rows(x_rows).astype(jnp.bfloat16)                       # (n*h*w, 9*cin)

    w1 = _conv_w_mat(params["conv1.weight"]).astype(jnp.bfloat16)        # (9*cin, nf)
    w234 = jnp.stack(
        [_conv_w_mat(params[f"conv{k}.weight"]) for k in (2, 3, 4)]
    ).astype(jnp.bfloat16)                                               # (3, 9*nf, nf)
    g_all = jnp.stack([params[f"conv{k}.bn_weight"] for k in (1, 2, 3, 4)])  # (4, nf)
    b_all = jnp.stack([params[f"conv{k}.bn_bias"] for k in (1, 2, 3, 4)])    # (4, nf)

    m2 = _border_masks(n, spatial[1], spatial[1])
    m3 = _border_masks(n, spatial[2], spatial[2])
    m4 = _border_masks(n, spatial[3], spatial[3])
    s1 = _pool_select(n, spatial[0], spatial[0])
    s2 = _pool_select(n, spatial[1], spatial[1])
    s3 = _pool_select(n, spatial[2], spatial[2])
    s4 = _pool_select(n, spatial[3], spatial[3])

    wl = jnp.transpose(params["logits.weight"]).astype(jnp.float32)      # (nf, k_way)
    bl = params["logits.bias"].reshape(1, k_way).astype(jnp.float32)

    operands = (p1, w1, w234, g_all, b_all, m2, m3, m4, s1, s2, s3, s4, wl, bl)

    return pl.pallas_call(
        functools.partial(_fused_kernel, spatial),
        out_shape=jax.ShapeDtypeStruct((n, k_way), jnp.float32),
        grid=(1,),
        in_specs=[_full_spec(a.shape) for a in operands],
        out_specs=pl.BlockSpec((n, k_way), lambda i: (0, 0)),
        compiler_params=pltpu.CompilerParams(dimension_semantics=("arbitrary",)),
    )(*operands)


# ----------------------------------------------------------------------------
# Deterministic parameter init (synthetic; not a checkpoint load)
# ----------------------------------------------------------------------------
def init_params(key, num_input_channels, k_way, number_filters, final_layer_size):
    params = {}
    cin = num_input_channels
    for blk in range(1, 5):
        key, kw, kb, kg, kbt = jax.random.split(key, 5)
        params[f"conv{blk}.weight"] = 0.1 * jax.random.normal(
            kw, (number_filters, cin, 3, 3), jnp.float32)
        params[f"conv{blk}.bias"] = 0.05 * jax.random.normal(
            kb, (number_filters,), jnp.float32)
        params[f"conv{blk}.bn_weight"] = 1.0 + 0.05 * jax.random.normal(
            kg, (number_filters,), jnp.float32)
        params[f"conv{blk}.bn_bias"] = 0.05 * jax.random.normal(
            kbt, (number_filters,), jnp.float32)
        cin = number_filters
    key, kw, kb = jax.random.split(key, 3)
    params["logits.weight"] = 0.1 * jax.random.normal(
        kw, (k_way, final_layer_size), jnp.float32)
    params["logits.bias"] = 0.05 * jax.random.normal(kb, (k_way,), jnp.float32)
    return params


# ----------------------------------------------------------------------------
# Pure-JAX fp32 reference (PyTorch semantics, incl. conv bias) for a sanity check
# ----------------------------------------------------------------------------
def reference_forward(x, params):
    h = x
    for blk in range(1, 5):
        w = params[f"conv{blk}.weight"]
        b = params[f"conv{blk}.bias"]
        g = params[f"conv{blk}.bn_weight"]
        bb = params[f"conv{blk}.bn_bias"]
        h = jax.lax.conv_general_dilated(
            h, w, (1, 1), ((1, 1), (1, 1)),
            dimension_numbers=("NCHW", "OIHW", "NCHW"))
        h = h + b[None, :, None, None]
        mean = jnp.mean(h, axis=(0, 2, 3), keepdims=True)
        var = jnp.mean((h - mean) ** 2, axis=(0, 2, 3), keepdims=True)
        h = (h - mean) * jax.lax.rsqrt(var + BN_EPS)
        h = h * g[None, :, None, None] + bb[None, :, None, None]
        h = jnp.maximum(h, 0.0)
        h = jax.lax.reduce_window(
            h, -jnp.inf, jax.lax.max, (1, 1, 2, 2), (1, 1, 2, 2), "VALID")
    h = h.reshape(h.shape[0], -1)
    return h @ params["logits.weight"].T + params["logits.bias"]


# ----------------------------------------------------------------------------
if __name__ == "__main__":
    N, C_IN, IMG = 2, 3, 16          # 16 -> 8 -> 4 -> 2 -> 1 after the 4 blocks
    K_WAY, NUM_FILTERS = 5, 32
    FINAL_LAYER_SIZE = NUM_FILTERS * 1 * 1

    key = jax.random.PRNGKey(0)
    key, kx = jax.random.split(key)
    params = init_params(key, C_IN, K_WAY, NUM_FILTERS, FINAL_LAYER_SIZE)
    x = jax.random.normal(kx, (N, C_IN, IMG, IMG), jnp.float32)

    fwd = jax.jit(forward)
    logits = fwd(x, params)
    jax.block_until_ready(logits)

    assert logits.shape == (N, K_WAY), logits.shape
    ref = reference_forward(x, params)
    max_err = float(jnp.max(jnp.abs(logits - ref)))
    assert max_err < 0.2, f"Pallas output diverged from reference: {max_err}"

    print("KERNEL_OK")
</pallas_src>

<mosaic_0001>
module attributes {stable_mosaic.version = 11 : i64} {
  func.func @_fused_kernel(%arg0: i32, %arg1: memref<512x27xbf16, #tpu.memory_space<vmem>>, %arg2: memref<27x32xbf16, #tpu.memory_space<vmem>>, %arg3: memref<3x288x32xbf16, #tpu.memory_space<vmem>>, %arg4: memref<4x32xf32, #tpu.memory_space<vmem>>, %arg5: memref<4x32xf32, #tpu.memory_space<vmem>>, %arg6: memref<128x9xf32, #tpu.memory_space<vmem>>, %arg7: memref<32x9xf32, #tpu.memory_space<vmem>>, %arg8: memref<8x9xf32, #tpu.memory_space<vmem>>, %arg9: memref<128x512xf32, #tpu.memory_space<vmem>>, %arg10: memref<32x128xf32, #tpu.memory_space<vmem>>, %arg11: memref<8x32xf32, #tpu.memory_space<vmem>>, %arg12: memref<2x8xf32, #tpu.memory_space<vmem>>, %arg13: memref<32x5xf32, #tpu.memory_space<vmem>>, %arg14: memref<1x5xf32, #tpu.memory_space<vmem>>, %arg15: memref<2x5xf32, #tpu.memory_space<vmem>>) attributes {dimension_semantics = [#tpu.dimension_semantics<arbitrary>], iteration_bounds = array<i64: 1>, scalar_prefetch = 0 : i64, scratch_operands = 0 : i64, tpu.core_type = #tpu.core_type<tc>, window_params = [{pipeline_mode = #tpu.pipeline_mode<synchronous>, transform_indices = @transform_0, window_bounds = array<i64: 512, 27>}, {pipeline_mode = #tpu.pipeline_mode<synchronous>, transform_indices = @transform_1, window_bounds = array<i64: 27, 32>}, {pipeline_mode = #tpu.pipeline_mode<synchronous>, transform_indices = @transform_2, window_bounds = array<i64: 3, 288, 32>}, {pipeline_mode = #tpu.pipeline_mode<synchronous>, transform_indices = @transform_3, window_bounds = array<i64: 4, 32>}, {pipeline_mode = #tpu.pipeline_mode<synchronous>, transform_indices = @transform_4, window_bounds = array<i64: 4, 32>}, {pipeline_mode = #tpu.pipeline_mode<synchronous>, transform_indices = @transform_5, window_bounds = array<i64: 128, 9>}, {pipeline_mode = #tpu.pipeline_mode<synchronous>, transform_indices = @transform_6, window_bounds = array<i64: 32, 9>}, {pipeline_mode = #tpu.pipeline_mode<synchronous>, transform_indices = @transform_7, window_bounds = array<i64: 8, 9>}, {pipeline_mode = #tpu.pipeline_mode<synchronous>, transform_indices = @transform_8, window_bounds = array<i64: 128, 512>}, {pipeline_mode = #tpu.pipeline_mode<synchronous>, transform_indices = @transform_9, window_bounds = array<i64: 32, 128>}, {pipeline_mode = #tpu.pipeline_mode<synchronous>, transform_indices = @transform_10, window_bounds = array<i64: 8, 32>}, {pipeline_mode = #tpu.pipeline_mode<synchronous>, transform_indices = @transform_11, window_bounds = array<i64: 2, 8>}, {pipeline_mode = #tpu.pipeline_mode<synchronous>, transform_indices = @transform_12, window_bounds = array<i64: 32, 5>}, {pipeline_mode = #tpu.pipeline_mode<synchronous>, transform_indices = @transform_13, window_bounds = array<i64: 1, 5>}, {pipeline_mode = #tpu.pipeline_mode<synchronous>, transform_indices = @transform_14, window_bounds = array<i64: 2, 5>}]} {
    %c0 = arith.constant 0 : index
    %c0_0 = arith.constant 0 : index
    %0 = vector.load %arg1[%c0, %c0_0] : memref<512x27xbf16, #tpu.memory_space<vmem>>, vector<512x27xbf16>
    %c0_1 = arith.constant 0 : index
    %c0_2 = arith.constant 0 : index
    %1 = vector.load %arg2[%c0_1, %c0_2] : memref<27x32xbf16, #tpu.memory_space<vmem>>, vector<27x32xbf16>
    %cst = arith.constant dense<0.000000e+00> : vector<512x32xf32>
    %2 = tpu.matmul %0, %1, %cst {dimension_numbers = #tpu.dot_dimension_numbers<[1], [0], [0], [1], [0, 0, 1, 1], [], []>} : vector<512x27xbf16>, vector<27x32xbf16>, vector<512x32xf32> -> vector<512x32xf32>
    %cst_3 = arith.constant dense<0.000000e+00> : vector<32xf32>
    %3 = vector.multi_reduction <add>, %2, %cst_3 [0] : vector<512x32xf32> to vector<32xf32>
    %4 = vector.shape_cast %3 : vector<32xf32> to vector<1x32xf32>
    %cst_4 = arith.constant 0.001953125 : f32
    %5 = vector.broadcast %cst_4 : f32 to vector<1x32xf32>
    %6 = arith.mulf %4, %5 : vector<1x32xf32>
    %7 = vector.broadcast %6 : vector<1x32xf32> to vector<512x32xf32>
    %8 = arith.subf %2, %7 : vector<512x32xf32>
    %9 = arith.mulf %8, %8 : vector<512x32xf32>
    %cst_5 = arith.constant dense<0.000000e+00> : vector<32xf32>
    %10 = vector.multi_reduction <add>, %9, %cst_5 [0] : vector<512x32xf32> to vector<32xf32>
    %11 = vector.shape_cast %10 : vector<32xf32> to vector<1x32xf32>
    %cst_6 = arith.constant 0.001953125 : f32
    %12 = vector.broadcast %cst_6 : f32 to vector<1x32xf32>
    %13 = arith.mulf %11, %12 : vector<1x32xf32>
    %c0_7 = arith.constant 0 : index
    %c0_8 = arith.constant 0 : index
    %14 = vector.load %arg4[%c0_7, %c0_8] : memref<4x32xf32, #tpu.memory_space<vmem>>, vector<1x32xf32>
    %cst_9 = arith.constant 9.99999974E-6 : f32
    %15 = vector.broadcast %cst_9 : f32 to vector<1x32xf32>
    %16 = arith.addf %13, %15 : vector<1x32xf32>
    %17 = math.rsqrt %16 : vector<1x32xf32>
    %18 = arith.mulf %14, %17 : vector<1x32xf32>
    %19 = vector.broadcast %18 : vector<1x32xf32> to vector<512x32xf32>
    %20 = arith.mulf %8, %19 : vector<512x32xf32>
    %c0_10 = arith.constant 0 : index
    %c0_11 = arith.constant 0 : index
    %21 = vector.load %arg5[%c0_10, %c0_11] : memref<4x32xf32, #tpu.memory_space<vmem>>, vector<1x32xf32>
    %22 = vector.broadcast %21 : vector<1x32xf32> to vector<512x32xf32>
    %23 = arith.addf %20, %22 : vector<512x32xf32>
    %cst_12 = arith.constant 0.000000e+00 : f32
    %24 = vector.broadcast %cst_12 : f32 to vector<512x32xf32>
    %25 = arith.maximumf %23, %24 : vector<512x32xf32>
    %c511_i32 = arith.constant 511 : i32
    %26 = tpu.dynamic_rotate %25 by %c511_i32 dim 0 : vector<512x32xf32>, i32 -> vector<512x32xf32>
    %27 = arith.maximumf %25, %26 : vector<512x32xf32>
    %c496_i32 = arith.constant 496 : i32
    %28 = tpu.dynamic_rotate %25 by %c496_i32 dim 0 : vector<512x32xf32>, i32 -> vector<512x32xf32>
    %29 = arith.maximumf %27, %28 : vector<512x32xf32>
    %c495_i32 = arith.constant 495 : i32
    %30 = tpu.dynamic_rotate %25 by %c495_i32 dim 0 : vector<512x32xf32>, i32 -> vector<512x32xf32>
    %31 = arith.maximumf %29, %30 : vector<512x32xf32>
    %c0_13 = arith.constant 0 : index
    %c0_14 = arith.constant 0 : index
    %32 = vector.load %arg9[%c0_13, %c0_14] : memref<128x512xf32, #tpu.memory_space<vmem>>, vector<128x512xf32>
    %cst_15 = arith.constant dense<0.000000e+00> : vector<128x32xf32>
    %33 = tpu.matmul %32, %31, %cst_15 {dimension_numbers = #tpu.dot_dimension_numbers<[1], [0], [0], [1], [0, 0, 1, 1], [], []>} : vector<128x512xf32>, vector<512x32xf32>, vector<128x32xf32> -> vector<128x32xf32>
    %c0_16 = arith.constant 0 : index
    %c0_17 = arith.constant 0 : index
    %34 = vector.load %arg6[%c0_16, %c0_17] : memref<128x9xf32, #tpu.memory_space<vmem>>, vector<128x9xf32>
    %c9_i32 = arith.constant 9 : i32
    %35 = tpu.dynamic_rotate %33 by %c9_i32 dim 0 : vector<128x32xf32>, i32 -> vector<128x32xf32>
    %36 = vector.extract_strided_slice %34 {offsets = [0, 0], sizes = [128, 1], strides = [1, 1]} : vector<128x9xf32> to vector<128x1xf32>
    %37 = vector.broadcast %36 : vector<128x1xf32> to vector<128x32xf32>
    %38 = arith.mulf %35, %37 : vector<128x32xf32>
    %c8_i32 = arith.constant 8 : i32
    %39 = tpu.dynamic_rotate %33 by %c8_i32 dim 0 : vector<128x32xf32>, i32 -> vector<128x32xf32>
    %40 = vector.extract_strided_slice %34 {offsets = [0, 1], sizes = [128, 1], strides = [1, 1]} : vector<128x9xf32> to vector<128x1xf32>
    %41 = vector.broadcast %40 : vector<128x1xf32> to vector<128x32xf32>
    %42 = arith.mulf %39, %41 : vector<128x32xf32>
    %c7_i32 = arith.constant 7 : i32
    %43 = tpu.dynamic_rotate %33 by %c7_i32 dim 0 : vector<128x32xf32>, i32 -> vector<128x32xf32>
    %44 = vector.extract_strided_slice %34 {offsets = [0, 2], sizes = [128, 1], strides = [1, 1]} : vector<128x9xf32> to vector<128x1xf32>
    %45 = vector.broadcast %44 : vector<128x1xf32> to vector<128x32xf32>
    %46 = arith.mulf %43, %45 : vector<128x32xf32>
    %c1_i32 = arith.constant 1 : i32
    %47 = tpu.dynamic_rotate %33 by %c1_i32 dim 0 : vector<128x32xf32>, i32 -> vector<128x32xf32>
    %48 = vector.extract_strided_slice %34 {offsets = [0, 3], sizes = [128, 1], strides = [1, 1]} : vector<128x9xf32> to vector<128x1xf32>
    %49 = vector.broadcast %48 : vector<128x1xf32> to vector<128x32xf32>
    %50 = arith.mulf %47, %49 : vector<128x32xf32>
    %c127_i32 = arith.constant 127 : i32
    %51 = tpu.dynamic_rotate %33 by %c127_i32 dim 0 : vector<128x32xf32>, i32 -> vector<128x32xf32>
    %52 = vector.extract_strided_slice %34 {offsets = [0, 5], sizes = [128, 1], strides = [1, 1]} : vector<128x9xf32> to vector<128x1xf32>
    %53 = vector.broadcast %52 : vector<128x1xf32> to vector<128x32xf32>
    %54 = arith.mulf %51, %53 : vector<128x32xf32>
    %c121_i32 = arith.constant 121 : i32
    %55 = tpu.dynamic_rotate %33 by %c121_i32 dim 0 : vector<128x32xf32>, i32 -> vector<128x32xf32>
    %56 = vector.extract_strided_slice %34 {offsets = [0, 6], sizes = [128, 1], strides = [1, 1]} : vector<128x9xf32> to vector<128x1xf32>
    %57 = vector.broadcast %56 : vector<128x1xf32> to vector<128x32xf32>
    %58 = arith.mulf %55, %57 : vector<128x32xf32>
    %c120_i32 = arith.constant 120 : i32
    %59 = tpu.dynamic_rotate %33 by %c120_i32 dim 0 : vector<128x32xf32>, i32 -> vector<128x32xf32>
    %60 = vector.extract_strided_slice %34 {offsets = [0, 7], sizes = [128, 1], strides = [1, 1]} : vector<128x9xf32> to vector<128x1xf32>
    %61 = vector.broadcast %60 : vector<128x1xf32> to vector<128x32xf32>
    %62 = arith.mulf %59, %61 : vector<128x32xf32>
    %c119_i32 = arith.constant 119 : i32
    %63 = tpu.dynamic_rotate %33 by %c119_i32 dim 0 : vector<128x32xf32>, i32 -> vector<128x32xf32>
    %64 = vector.extract_strided_slice %34 {offsets = [0, 8], sizes = [128, 1], strides = [1, 1]} : vector<128x9xf32> to vector<128x1xf32>
    %65 = vector.broadcast %64 : vector<128x1xf32> to vector<128x32xf32>
    %66 = arith.mulf %63, %65 : vector<128x32xf32>
    %67 = tpu.concatenate %38, %42, %46, %50, %33, %54, %58, %62, %66 in 1 : vector<128x32xf32>, vector<128x32xf32>, vector<128x32xf32>, vector<128x32xf32>, vector<128x32xf32>, vector<128x32xf32>, vector<128x32xf32>, vector<128x32xf32>, vector<128x32xf32> -> vector<128x288xf32>
    %68 = arith.truncf %67 : vector<128x288xf32> to vector<128x288xbf16>
    %c0_18 = arith.constant 0 : index
    %c0_19 = arith.constant 0 : index
    %c0_20 = arith.constant 0 : index
    %69 = vector.load %arg3[%c0_18, %c0_19, %c0_20] : memref<3x288x32xbf16, #tpu.memory_space<vmem>>, vector<1x288x32xbf16>
    %70 = vector.shape_cast %69 : vector<1x288x32xbf16> to vector<288x32xbf16>
    %cst_21 = arith.constant dense<0.000000e+00> : vector<128x32xf32>
    %71 = tpu.matmul %68, %70, %cst_21 {dimension_numbers = #tpu.dot_dimension_numbers<[1], [0], [0], [1], [0, 0, 1, 1], [], []>} : vector<128x288xbf16>, vector<288x32xbf16>, vector<128x32xf32> -> vector<128x32xf32>
    %cst_22 = arith.constant dense<0.000000e+00> : vector<32xf32>
    %72 = vector.multi_reduction <add>, %71, %cst_22 [0] : vector<128x32xf32> to vector<32xf32>
    %73 = vector.shape_cast %72 : vector<32xf32> to vector<1x32xf32>
    %cst_23 = arith.constant 7.812500e-03 : f32
    %74 = vector.broadcast %cst_23 : f32 to vector<1x32xf32>
    %75 = arith.mulf %73, %74 : vector<1x32xf32>
    %76 = vector.broadcast %75 : vector<1x32xf32> to vector<128x32xf32>
    %77 = arith.subf %71, %76 : vector<128x32xf32>
    %78 = arith.mulf %77, %77 : vector<128x32xf32>
    %cst_24 = arith.constant dense<0.000000e+00> : vector<32xf32>
    %79 = vector.multi_reduction <add>, %78, %cst_24 [0] : vector<128x32xf32> to vector<32xf32>
    %80 = vector.shape_cast %79 : vector<32xf32> to vector<1x32xf32>
    %cst_25 = arith.constant 7.812500e-03 : f32
    %81 = vector.broadcast %cst_25 : f32 to vector<1x32xf32>
    %82 = arith.mulf %80, %81 : vector<1x32xf32>
    %c1 = arith.constant 1 : index
    %c0_26 = arith.constant 0 : index
    %83 = vector.load %arg4[%c1, %c0_26] : memref<4x32xf32, #tpu.memory_space<vmem>>, vector<1x32xf32>
    %cst_27 = arith.constant 9.99999974E-6 : f32
    %84 = vector.broadcast %cst_27 : f32 to vector<1x32xf32>
    %85 = arith.addf %82, %84 : vector<1x32xf32>
    %86 = math.rsqrt %85 : vector<1x32xf32>
    %87 = arith.mulf %83, %86 : vector<1x32xf32>
    %88 = vector.broadcast %87 : vector<1x32xf32> to vector<128x32xf32>
    %89 = arith.mulf %77, %88 : vector<128x32xf32>
    %c1_28 = arith.constant 1 : index
    %c0_29 = arith.constant 0 : index
    %90 = vector.load %arg5[%c1_28, %c0_29] : memref<4x32xf32, #tpu.memory_space<vmem>>, vector<1x32xf32>
    %91 = vector.broadcast %90 : vector<1x32xf32> to vector<128x32xf32>
    %92 = arith.addf %89, %91 : vector<128x32xf32>
    %cst_30 = arith.constant 0.000000e+00 : f32
    %93 = vector.broadcast %cst_30 : f32 to vector<128x32xf32>
    %94 = arith.maximumf %92, %93 : vector<128x32xf32>
    %c127_i32_31 = arith.constant 127 : i32
    %95 = tpu.dynamic_rotate %94 by %c127_i32_31 dim 0 : vector<128x32xf32>, i32 -> vector<128x32xf32>
    %96 = arith.maximumf %94, %95 : vector<128x32xf32>
    %c120_i32_32 = arith.constant 120 : i32
    %97 = tpu.dynamic_rotate %94 by %c120_i32_32 dim 0 : vector<128x32xf32>, i32 -> vector<128x32xf32>
    %98 = arith.maximumf %96, %97 : vector<128x32xf32>
    %c119_i32_33 = arith.constant 119 : i32
    %99 = tpu.dynamic_rotate %94 by %c119_i32_33 dim 0 : vector<128x32xf32>, i32 -> vector<128x32xf32>
    %100 = arith.maximumf %98, %99 : vector<128x32xf32>
    %c0_34 = arith.constant 0 : index
    %c0_35 = arith.constant 0 : index
    %101 = vector.load %arg10[%c0_34, %c0_35] : memref<32x128xf32, #tpu.memory_space<vmem>>, vector<32x128xf32>
    %cst_36 = arith.constant dense<0.000000e+00> : vector<32x32xf32>
    %102 = tpu.matmul %101, %100, %cst_36 {dimension_numbers = #tpu.dot_dimension_numbers<[1], [0], [0], [1], [0, 0, 1, 1], [], []>} : vector<32x128xf32>, vector<128x32xf32>, vector<32x32xf32> -> vector<32x32xf32>
    %c0_37 = arith.constant 0 : index
    %c0_38 = arith.constant 0 : index
    %103 = vector.load %arg7[%c0_37, %c0_38] : memref<32x9xf32, #tpu.memory_space<vmem>>, vector<32x9xf32>
    %c5_i32 = arith.constant 5 : i32
    %104 = tpu.dynamic_rotate %102 by %c5_i32 dim 0 : vector<32x32xf32>, i32 -> vector<32x32xf32>
    %105 = vector.extract_strided_slice %103 {offsets = [0, 0], sizes = [32, 1], strides = [1, 1]} : vector<32x9xf32> to vector<32x1xf32>
    %106 = vector.broadcast %105 : vector<32x1xf32> to vector<32x32xf32>
    %107 = arith.mulf %104, %106 : vector<32x32xf32>
    %c4_i32 = arith.constant 4 : i32
    %108 = tpu.dynamic_rotate %102 by %c4_i32 dim 0 : vector<32x32xf32>, i32 -> vector<32x32xf32>
    %109 = vector.extract_strided_slice %103 {offsets = [0, 1], sizes = [32, 1], strides = [1, 1]} : vector<32x9xf32> to vector<32x1xf32>
    %110 = vector.broadcast %109 : vector<32x1xf32> to vector<32x32xf32>
    %111 = arith.mulf %108, %110 : vector<32x32xf32>
    %c3_i32 = arith.constant 3 : i32
    %112 = tpu.dynamic_rotate %102 by %c3_i32 dim 0 : vector<32x32xf32>, i32 -> vector<32x32xf32>
    %113 = vector.extract_strided_slice %103 {offsets = [0, 2], sizes = [32, 1], strides = [1, 1]} : vector<32x9xf32> to vector<32x1xf32>
    %114 = vector.broadcast %113 : vector<32x1xf32> to vector<32x32xf32>
    %115 = arith.mulf %112, %114 : vector<32x32xf32>
    %c1_i32_39 = arith.constant 1 : i32
    %116 = tpu.dynamic_rotate %102 by %c1_i32_39 dim 0 : vector<32x32xf32>, i32 -> vector<32x32xf32>
    %117 = vector.extract_strided_slice %103 {offsets = [0, 3], sizes = [32, 1], strides = [1, 1]} : vector<32x9xf32> to vector<32x1xf32>
    %118 = vector.broadcast %117 : vector<32x1xf32> to vector<32x32xf32>
    %119 = arith.mulf %116, %118 : vector<32x32xf32>
    %c31_i32 = arith.constant 31 : i32
    %120 = tpu.dynamic_rotate %102 by %c31_i32 dim 0 : vector<32x32xf32>, i32 -> vector<32x32xf32>
    %121 = vector.extract_strided_slice %103 {offsets = [0, 5], sizes = [32, 1], strides = [1, 1]} : vector<32x9xf32> to vector<32x1xf32>
    %122 = vector.broadcast %121 : vector<32x1xf32> to vector<32x32xf32>
    %123 = arith.mulf %120, %122 : vector<32x32xf32>
    %c29_i32 = arith.constant 29 : i32
    %124 = tpu.dynamic_rotate %102 by %c29_i32 dim 0 : vector<32x32xf32>, i32 -> vector<32x32xf32>
    %125 = vector.extract_strided_slice %103 {offsets = [0, 6], sizes = [32, 1], strides = [1, 1]} : vector<32x9xf32> to vector<32x1xf32>
    %126 = vector.broadcast %125 : vector<32x1xf32> to vector<32x32xf32>
    %127 = arith.mulf %124, %126 : vector<32x32xf32>
    %c28_i32 = arith.constant 28 : i32
    %128 = tpu.dynamic_rotate %102 by %c28_i32 dim 0 : vector<32x32xf32>, i32 -> vector<32x32xf32>
    %129 = vector.extract_strided_slice %103 {offsets = [0, 7], sizes = [32, 1], strides = [1, 1]} : vector<32x9xf32> to vector<32x1xf32>
    %130 = vector.broadcast %129 : vector<32x1xf32> to vector<32x32xf32>
    %131 = arith.mulf %128, %130 : vector<32x32xf32>
    %c27_i32 = arith.constant 27 : i32
    %132 = tpu.dynamic_rotate %102 by %c27_i32 dim 0 : vector<32x32xf32>, i32 -> vector<32x32xf32>
    %133 = vector.extract_strided_slice %103 {offsets = [0, 8], sizes = [32, 1], strides = [1, 1]} : vector<32x9xf32> to vector<32x1xf32>
    %134 = vector.broadcast %133 : vector<32x1xf32> to vector<32x32xf32>
    %135 = arith.mulf %132, %134 : vector<32x32xf32>
    %136 = tpu.concatenate %107, %111, %115, %119, %102, %123, %127, %131, %135 in 1 : vector<32x32xf32>, vector<32x32xf32>, vector<32x32xf32>, vector<32x32xf32>, vector<32x32xf32>, vector<32x32xf32>, vector<32x32xf32>, vector<32x32xf32>, vector<32x32xf32> -> vector<32x288xf32>
    %137 = arith.truncf %136 : vector<32x288xf32> to vector<32x288xbf16>
    %c1_40 = arith.constant 1 : index
    %c0_41 = arith.constant 0 : index
    %c0_42 = arith.constant 0 : index
    %138 = vector.load %arg3[%c1_40, %c0_41, %c0_42] : memref<3x288x32xbf16, #tpu.memory_space<vmem>>, vector<1x288x32xbf16>
    %139 = vector.shape_cast %138 : vector<1x288x32xbf16> to vector<288x32xbf16>
    %cst_43 = arith.constant dense<0.000000e+00> : vector<32x32xf32>
    %140 = tpu.matmul %137, %139, %cst_43 {dimension_numbers = #tpu.dot_dimension_numbers<[1], [0], [0], [1], [0, 0, 1, 1], [], []>} : vector<32x288xbf16>, vector<288x32xbf16>, vector<32x32xf32> -> vector<32x32xf32>
    %cst_44 = arith.constant dense<0.000000e+00> : vector<32xf32>
    %141 = vector.multi_reduction <add>, %140, %cst_44 [0] : vector<32x32xf32> to vector<32xf32>
    %142 = vector.shape_cast %141 : vector<32xf32> to vector<1x32xf32>
    %cst_45 = arith.constant 3.125000e-02 : f32
    %143 = vector.broadcast %cst_45 : f32 to vector<1x32xf32>
    %144 = arith.mulf %142, %143 : vector<1x32xf32>
    %145 = vector.broadcast %144 : vector<1x32xf32> to vector<32x32xf32>
    %146 = arith.subf %140, %145 : vector<32x32xf32>
    %147 = arith.mulf %146, %146 : vector<32x32xf32>
    %cst_46 = arith.constant dense<0.000000e+00> : vector<32xf32>
    %148 = vector.multi_reduction <add>, %147, %cst_46 [0] : vector<32x32xf32> to vector<32xf32>
    %149 = vector.shape_cast %148 : vector<32xf32> to vector<1x32xf32>
    %cst_47 = arith.constant 3.125000e-02 : f32
    %150 = vector.broadcast %cst_47 : f32 to vector<1x32xf32>
    %151 = arith.mulf %149, %150 : vector<1x32xf32>
    %c2 = arith.constant 2 : index
    %c0_48 = arith.constant 0 : index
    %152 = vector.load %arg4[%c2, %c0_48] : memref<4x32xf32, #tpu.memory_space<vmem>>, vector<1x32xf32>
    %cst_49 = arith.constant 9.99999974E-6 : f32
    %153 = vector.broadcast %cst_49 : f32 to vector<1x32xf32>
    %154 = arith.addf %151, %153 : vector<1x32xf32>
    %155 = math.rsqrt %154 : vector<1x32xf32>
    %156 = arith.mulf %152, %155 : vector<1x32xf32>
    %157 = vector.broadcast %156 : vector<1x32xf32> to vector<32x32xf32>
    %158 = arith.mulf %146, %157 : vector<32x32xf32>
    %c2_50 = arith.constant 2 : index
    %c0_51 = arith.constant 0 : index
    %159 = vector.load %arg5[%c2_50, %c0_51] : memref<4x32xf32, #tpu.memory_space<vmem>>, vector<1x32xf32>
    %160 = vector.broadcast %159 : vector<1x32xf32> to vector<32x32xf32>
    %161 = arith.addf %158, %160 : vector<32x32xf32>
    %cst_52 = arith.constant 0.000000e+00 : f32
    %162 = vector.broadcast %cst_52 : f32 to vector<32x32xf32>
    %163 = arith.maximumf %161, %162 : vector<32x32xf32>
    %c31_i32_53 = arith.constant 31 : i32
    %164 = tpu.dynamic_rotate %163 by %c31_i32_53 dim 0 : vector<32x32xf32>, i32 -> vector<32x32xf32>
    %165 = arith.maximumf %163, %164 : vector<32x32xf32>
    %c28_i32_54 = arith.constant 28 : i32
    %166 = tpu.dynamic_rotate %163 by %c28_i32_54 dim 0 : vector<32x32xf32>, i32 -> vector<32x32xf32>
    %167 = arith.maximumf %165, %166 : vector<32x32xf32>
    %c27_i32_55 = arith.constant 27 : i32
    %168 = tpu.dynamic_rotate %163 by %c27_i32_55 dim 0 : vector<32x32xf32>, i32 -> vector<32x32xf32>
    %169 = arith.maximumf %167, %168 : vector<32x32xf32>
    %c0_56 = arith.constant 0 : index
    %c0_57 = arith.constant 0 : index
    %170 = vector.load %arg11[%c0_56, %c0_57] : memref<8x32xf32, #tpu.memory_space<vmem>>, vector<8x32xf32>
    %cst_58 = arith.constant dense<0.000000e+00> : vector<8x32xf32>
    %171 = tpu.matmul %170, %169, %cst_58 {dimension_numbers = #tpu.dot_dimension_numbers<[1], [0], [0], [1], [0, 0, 1, 1], [], []>} : vector<8x32xf32>, vector<32x32xf32>, vector<8x32xf32> -> vector<8x32xf32>
    %c0_59 = arith.constant 0 : index
    %c0_60 = arith.constant 0 : index
    %172 = vector.load %arg8[%c0_59, %c0_60] : memref<8x9xf32, #tpu.memory_space<vmem>>, vector<8x9xf32>
    %c3_i32_61 = arith.constant 3 : i32
    %173 = tpu.dynamic_rotate %171 by %c3_i32_61 dim 0 : vector<8x32xf32>, i32 -> vector<8x32xf32>
    %174 = vector.extract_strided_slice %172 {offsets = [0, 0], sizes = [8, 1], strides = [1, 1]} : vector<8x9xf32> to vector<8x1xf32>
    %175 = vector.broadcast %174 : vector<8x1xf32> to vector<8x32xf32>
    %176 = arith.mulf %173, %175 : vector<8x32xf32>
    %c2_i32 = arith.constant 2 : i32
    %177 = tpu.dynamic_rotate %171 by %c2_i32 dim 0 : vector<8x32xf32>, i32 -> vector<8x32xf32>
    %178 = vector.extract_strided_slice %172 {offsets = [0, 1], sizes = [8, 1], strides = [1, 1]} : vector<8x9xf32> to vector<8x1xf32>
    %179 = vector.broadcast %178 : vector<8x1xf32> to vector<8x32xf32>
    %180 = arith.mulf %177, %179 : vector<8x32xf32>
    %c1_i32_62 = arith.constant 1 : i32
    %181 = tpu.dynamic_rotate %171 by %c1_i32_62 dim 0 : vector<8x32xf32>, i32 -> vector<8x32xf32>
    %182 = vector.extract_strided_slice %172 {offsets = [0, 2], sizes = [8, 1], strides = [1, 1]} : vector<8x9xf32> to vector<8x1xf32>
    %183 = vector.broadcast %182 : vector<8x1xf32> to vector<8x32xf32>
    %184 = arith.mulf %181, %183 : vector<8x32xf32>
    %c1_i32_63 = arith.constant 1 : i32
    %185 = tpu.dynamic_rotate %171 by %c1_i32_63 dim 0 : vector<8x32xf32>, i32 -> vector<8x32xf32>
    %186 = vector.extract_strided_slice %172 {offsets = [0, 3], sizes = [8, 1], strides = [1, 1]} : vector<8x9xf32> to vector<8x1xf32>
    %187 = vector.broadcast %186 : vector<8x1xf32> to vector<8x32xf32>
    %188 = arith.mulf %185, %187 : vector<8x32xf32>
    %c7_i32_64 = arith.constant 7 : i32
    %189 = tpu.dynamic_rotate %171 by %c7_i32_64 dim 0 : vector<8x32xf32>, i32 -> vector<8x32xf32>
    %190 = vector.extract_strided_slice %172 {offsets = [0, 5], sizes = [8, 1], strides = [1, 1]} : vector<8x9xf32> to vector<8x1xf32>
    %191 = vector.broadcast %190 : vector<8x1xf32> to vector<8x32xf32>
    %192 = arith.mulf %189, %191 : vector<8x32xf32>
    %c7_i32_65 = arith.constant 7 : i32
    %193 = tpu.dynamic_rotate %171 by %c7_i32_65 dim 0 : vector<8x32xf32>, i32 -> vector<8x32xf32>
    %194 = vector.extract_strided_slice %172 {offsets = [0, 6], sizes = [8, 1], strides = [1, 1]} : vector<8x9xf32> to vector<8x1xf32>
    %195 = vector.broadcast %194 : vector<8x1xf32> to vector<8x32xf32>
    %196 = arith.mulf %193, %195 : vector<8x32xf32>
    %c6_i32 = arith.constant 6 : i32
    %197 = tpu.dynamic_rotate %171 by %c6_i32 dim 0 : vector<8x32xf32>, i32 -> vector<8x32xf32>
    %198 = vector.extract_strided_slice %172 {offsets = [0, 7], sizes = [8, 1], strides = [1, 1]} : vector<8x9xf32> to vector<8x1xf32>
    %199 = vector.broadcast %198 : vector<8x1xf32> to vector<8x32xf32>
    %200 = arith.mulf %197, %199 : vector<8x32xf32>
    %c5_i32_66 = arith.constant 5 : i32
    %201 = tpu.dynamic_rotate %171 by %c5_i32_66 dim 0 : vector<8x32xf32>, i32 -> vector<8x32xf32>
    %202 = vector.extract_strided_slice %172 {offsets = [0, 8], sizes = [8, 1], strides = [1, 1]} : vector<8x9xf32> to vector<8x1xf32>
    %203 = vector.broadcast %202 : vector<8x1xf32> to vector<8x32xf32>
    %204 = arith.mulf %201, %203 : vector<8x32xf32>
    %205 = tpu.concatenate %176, %180, %184, %188, %171, %192, %196, %200, %204 in 1 : vector<8x32xf32>, vector<8x32xf32>, vector<8x32xf32>, vector<8x32xf32>, vector<8x32xf32>, vector<8x32xf32>, vector<8x32xf32>, vector<8x32xf32>, vector<8x32xf32> -> vector<8x288xf32>
    %206 = arith.truncf %205 : vector<8x288xf32> to vector<8x288xbf16>
    %c2_67 = arith.constant 2 : index
    %c0_68 = arith.constant 0 : index
    %c0_69 = arith.constant 0 : index
    %207 = vector.load %arg3[%c2_67, %c0_68, %c0_69] : memref<3x288x32xbf16, #tpu.memory_space<vmem>>, vector<1x288x32xbf16>
    %208 = vector.shape_cast %207 : vector<1x288x32xbf16> to vector<288x32xbf16>
    %cst_70 = arith.constant dense<0.000000e+00> : vector<8x32xf32>
    %209 = tpu.matmul %206, %208, %cst_70 {dimension_numbers = #tpu.dot_dimension_numbers<[1], [0], [0], [1], [0, 0, 1, 1], [], []>} : vector<8x288xbf16>, vector<288x32xbf16>, vector<8x32xf32> -> vector<8x32xf32>
    %cst_71 = arith.constant dense<0.000000e+00> : vector<32xf32>
    %210 = vector.multi_reduction <add>, %209, %cst_71 [0] : vector<8x32xf32> to vector<32xf32>
    %211 = vector.shape_cast %210 : vector<32xf32> to vector<1x32xf32>
    %cst_72 = arith.constant 1.250000e-01 : f32
    %212 = vector.broadcast %cst_72 : f32 to vector<1x32xf32>
    %213 = arith.mulf %211, %212 : vector<1x32xf32>
    %214 = vector.broadcast %213 : vector<1x32xf32> to vector<8x32xf32>
    %215 = arith.subf %209, %214 : vector<8x32xf32>
    %216 = arith.mulf %215, %215 : vector<8x32xf32>
    %cst_73 = arith.constant dense<0.000000e+00> : vector<32xf32>
    %217 = vector.multi_reduction <add>, %216, %cst_73 [0] : vector<8x32xf32> to vector<32xf32>
    %218 = vector.shape_cast %217 : vector<32xf32> to vector<1x32xf32>
    %cst_74 = arith.constant 1.250000e-01 : f32
    %219 = vector.broadcast %cst_74 : f32 to vector<1x32xf32>
    %220 = arith.mulf %218, %219 : vector<1x32xf32>
    %c3 = arith.constant 3 : index
    %c0_75 = arith.constant 0 : index
    %221 = vector.load %arg4[%c3, %c0_75] : memref<4x32xf32, #tpu.memory_space<vmem>>, vector<1x32xf32>
    %cst_76 = arith.constant 9.99999974E-6 : f32
    %222 = vector.broadcast %cst_76 : f32 to vector<1x32xf32>
    %223 = arith.addf %220, %222 : vector<1x32xf32>
    %224 = math.rsqrt %223 : vector<1x32xf32>
    %225 = arith.mulf %221, %224 : vector<1x32xf32>
    %226 = vector.broadcast %225 : vector<1x32xf32> to vector<8x32xf32>
    %227 = arith.mulf %215, %226 : vector<8x32xf32>
    %c3_77 = arith.constant 3 : index
    %c0_78 = arith.constant 0 : index
    %228 = vector.load %arg5[%c3_77, %c0_78] : memref<4x32xf32, #tpu.memory_space<vmem>>, vector<1x32xf32>
    %229 = vector.broadcast %228 : vector<1x32xf32> to vector<8x32xf32>
    %230 = arith.addf %227, %229 : vector<8x32xf32>
    %cst_79 = arith.constant 0.000000e+00 : f32
    %231 = vector.broadcast %cst_79 : f32 to vector<8x32xf32>
    %232 = arith.maximumf %230, %231 : vector<8x32xf32>
    %c7_i32_80 = arith.constant 7 : i32
    %233 = tpu.dynamic_rotate %232 by %c7_i32_80 dim 0 : vector<8x32xf32>, i32 -> vector<8x32xf32>
    %234 = arith.maximumf %232, %233 : vector<8x32xf32>
    %c6_i32_81 = arith.constant 6 : i32
    %235 = tpu.dynamic_rotate %232 by %c6_i32_81 dim 0 : vector<8x32xf32>, i32 -> vector<8x32xf32>
    %236 = arith.maximumf %234, %235 : vector<8x32xf32>
    %c5_i32_82 = arith.constant 5 : i32
    %237 = tpu.dynamic_rotate %232 by %c5_i32_82 dim 0 : vector<8x32xf32>, i32 -> vector<8x32xf32>
    %238 = arith.maximumf %236, %237 : vector<8x32xf32>
    %c0_83 = arith.constant 0 : index
    %c0_84 = arith.constant 0 : index
    %239 = vector.load %arg12[%c0_83, %c0_84] : memref<2x8xf32, #tpu.memory_space<vmem>>, vector<2x8xf32>
    %cst_85 = arith.constant dense<0.000000e+00> : vector<2x32xf32>
    %240 = tpu.matmul %239, %238, %cst_85 {dimension_numbers = #tpu.dot_dimension_numbers<[1], [0], [0], [1], [0, 0, 1, 1], [], []>} : vector<2x8xf32>, vector<8x32xf32>, vector<2x32xf32> -> vector<2x32xf32>
    %c0_86 = arith.constant 0 : index
    %c0_87 = arith.constant 0 : index
    %241 = vector.load %arg13[%c0_86, %c0_87] : memref<32x5xf32, #tpu.memory_space<vmem>>, vector<32x5xf32>
    %cst_88 = arith.constant dense<0.000000e+00> : vector<2x5xf32>
    %242 = tpu.matmul %240, %241, %cst_88 {dimension_numbers = #tpu.dot_dimension_numbers<[1], [0], [0], [1], [0, 0, 1, 1], [], []>} : vector<2x32xf32>, vector<32x5xf32>, vector<2x5xf32> -> vector<2x5xf32>
    %c0_89 = arith.constant 0 : index
    %c0_90 = arith.constant 0 : index
    %243 = vector.load %arg14[%c0_89, %c0_90] : memref<1x5xf32, #tpu.memory_space<vmem>>, vector<1x5xf32>
    %244 = vector.broadcast %243 : vector<1x5xf32> to vector<2x5xf32>
    %245 = arith.addf %242, %244 : vector<2x5xf32>
    %c0_91 = arith.constant 0 : index
    %c0_92 = arith.constant 0 : index
    %246 = vector.load %arg15[%c0_91, %c0_92] : memref<2x5xf32, #tpu.memory_space<vmem>>, vector<2x5xf32>
    tpu.vector_store %arg15[%c0_91, %c0_92], %245 {strides = array<i32>} : memref<2x5xf32, #tpu.memory_space<vmem>>, vector<2x5xf32>,
    return
  }
  func.func @transform_0(%arg0: i32) -> (i32, i32) {
    %c0_i32 = arith.constant 0 : i32
    %c0_i32_0 = arith.constant 0 : i32
    %c0_i32_1 = arith.constant 0 : i32
    return %c0_i32, %c0_i32_0 : i32, i32
  }
  func.func @transform_1(%arg0: i32) -> (i32, i32) {
    %c0_i32 = arith.constant 0 : i32
    %c0_i32_0 = arith.constant 0 : i32
    %c0_i32_1 = arith.constant 0 : i32
    return %c0_i32, %c0_i32_0 : i32, i32
  }
  func.func @transform_2(%arg0: i32) -> (i32, i32, i32) {
    %c0_i32 = arith.constant 0 : i32
    %c0_i32_0 = arith.constant 0 : i32
    %c0_i32_1 = arith.constant 0 : i32
    %c0_i32_2 = arith.constant 0 : i32
    return %c0_i32, %c0_i32_0, %c0_i32_1 : i32, i32, i32
  }
  func.func @transform_3(%arg0: i32) -> (i32, i32) {
    %c0_i32 = arith.constant 0 : i32
    %c0_i32_0 = arith.constant 0 : i32
    %c0_i32_1 = arith.constant 0 : i32
    return %c0_i32, %c0_i32_0 : i32, i32
  }
  func.func @transform_4(%arg0: i32) -> (i32, i32) {
    %c0_i32 = arith.constant 0 : i32
    %c0_i32_0 = arith.constant 0 : i32
    %c0_i32_1 = arith.constant 0 : i32
    return %c0_i32, %c0_i32_0 : i32, i32
  }
  func.func @transform_5(%arg0: i32) -> (i32, i32) {
    %c0_i32 = arith.constant 0 : i32
    %c0_i32_0 = arith.constant 0 : i32
    %c0_i32_1 = arith.constant 0 : i32
    return %c0_i32, %c0_i32_0 : i32, i32
  }
  func.func @transform_6(%arg0: i32) -> (i32, i32) {
    %c0_i32 = arith.constant 0 : i32
    %c0_i32_0 = arith.constant 0 : i32
    %c0_i32_1 = arith.constant 0 : i32
    return %c0_i32, %c0_i32_0 : i32, i32
  }
  func.func @transform_7(%arg0: i32) -> (i32, i32) {
    %c0_i32 = arith.constant 0 : i32
    %c0_i32_0 = arith.constant 0 : i32
    %c0_i32_1 = arith.constant 0 : i32
    return %c0_i32, %c0_i32_0 : i32, i32
  }
  func.func @transform_8(%arg0: i32) -> (i32, i32) {
    %c0_i32 = arith.constant 0 : i32
    %c0_i32_0 = arith.constant 0 : i32
    %c0_i32_1 = arith.constant 0 : i32
    return %c0_i32, %c0_i32_0 : i32, i32
  }
  func.func @transform_9(%arg0: i32) -> (i32, i32) {
    %c0_i32 = arith.constant 0 : i32
    %c0_i32_0 = arith.constant 0 : i32
    %c0_i32_1 = arith.constant 0 : i32
    return %c0_i32, %c0_i32_0 : i32, i32
  }
  func.func @transform_10(%arg0: i32) -> (i32, i32) {
    %c0_i32 = arith.constant 0 : i32
    %c0_i32_0 = arith.constant 0 : i32
    %c0_i32_1 = arith.constant 0 : i32
    return %c0_i32, %c0_i32_0 : i32, i32
  }
  func.func @transform_11(%arg0: i32) -> (i32, i32) {
    %c0_i32 = arith.constant 0 : i32
    %c0_i32_0 = arith.constant 0 : i32
    %c0_i32_1 = arith.constant 0 : i32
    return %c0_i32, %c0_i32_0 : i32, i32
  }
  func.func @transform_12(%arg0: i32) -> (i32, i32) {
    %c0_i32 = arith.constant 0 : i32
    %c0_i32_0 = arith.constant 0 : i32
    %c0_i32_1 = arith.constant 0 : i32
    return %c0_i32, %c0_i32_0 : i32, i32
  }
  func.func @transform_13(%arg0: i32) -> (i32, i32) {
    %c0_i32 = arith.constant 0 : i32
    %c0_i32_0 = arith.constant 0 : i32
    %c0_i32_1 = arith.constant 0 : i32
    return %c0_i32, %c0_i32_0 : i32, i32
  }
  func.func @transform_14(%arg0: i32) -> (i32, i32) {
    %c0_i32 = arith.constant 0 : i32
    %c0_i32_0 = arith.constant 0 : i32
    %c0_i32_1 = arith.constant 0 : i32
    return %c0_i32, %c0_i32_0 : i32, i32
  }
}

</mosaic_0001>

<llo_original>
// kernel: forward.1
$region0: #{forward.1}
  #allocation0 [shape = 'u32[]', space=smem, size = 0x4, offset = 0x4, fixed_abs, tag = 'smem constant byte address 0x4 - core index']
  #allocation1 [shape = 'u32[144,128]{1,0:T(1,128)}', space=vmem, size = 0x12000, scoped, tag = 'internal scratch']
  %s0 = inlined_call_operand.vmem [shape: bf16[512,27], index: 0, kind: input, shape index: {}]
  %s1 = inlined_call_operand.vmem [shape: bf16[27,32], index: 1, kind: input, shape index: {}]
  %s2 = inlined_call_operand.vmem [shape: bf16[3,288,32], index: 2, kind: input, shape index: {}]
  %s3 = inlined_call_operand.vmem [shape: f32[4,32], index: 3, kind: input, shape index: {}]
  %s4 = inlined_call_operand.vmem [shape: f32[4,32], index: 4, kind: input, shape index: {}]
  %s5 = inlined_call_operand.vmem [shape: f32[128,9], index: 5, kind: input, shape index: {}]
  %s6 = inlined_call_operand.vmem [shape: f32[32,9], index: 6, kind: input, shape index: {}]
  %s7 = inlined_call_operand.vmem [shape: f32[8,9], index: 7, kind: input, shape index: {}]
  %s8 = inlined_call_operand.vmem [shape: f32[128,512], index: 8, kind: input, shape index: {}]
  %s9 = inlined_call_operand.vmem [shape: f32[32,128], index: 9, kind: input, shape index: {}]
  %s10 = inlined_call_operand.vmem [shape: f32[8,32], index: 10, kind: input, shape index: {}]
  %s11 = inlined_call_operand.vmem [shape: f32[2,8], index: 11, kind: input, shape index: {}]
  %s12 = inlined_call_operand.vmem [shape: f32[32,5], index: 12, kind: input, shape index: {}]
  %s13 = inlined_call_operand.vmem [shape: f32[1,5], index: 13, kind: input, shape index: {}]
  %s14 = inlined_call_operand.hbm [shape: f32[2,5], index: 14, kind: output, shape index: {}]
  %s15 = sld [smem:[#allocation0]]
  $region66: #{forward.1} parent=0
    _
  %s17 = ssub.s32 1, %s15
  %s18 = scalar_select 0, %s17, %s15
  $region1: #{forward.1} parent=0
    #allocation2 [shape = 'u8[1024]{0}', space=vmem, size = 0x400, scoped, tag = 'output window, operand 0, single buffered']
    #allocation3 [shape = 's32[1]{0}', space=sflag, size = 0x4, scoped, tag = 'scoped memory for forward.1']
    %19 = vsyncpa [#allocation3], 0
    // Predicated region
    $region2: #{forward.1} parent=1 // pred_check
      _
    $region3: #{forward.1} parent=1 // pred_check_branch
      %21 = sbr.rel (0) target = $region5
    $region4: #{forward.1} parent=1 // pred_region
      _
    $region5: #{forward.1} parent=1 // pred_fallthru
      _
    // Predicated region
    $region6: #{forward.1} parent=1 // pred_check
      _
    $region7: #{forward.1} parent=1 // pred_check_branch
      %23 = sbr.rel (0) target = $region9
    $region8: #{forward.1} parent=1 // pred_region
      _
    $region9: #{forward.1} parent=1 // pred_fallthru
      _
    // Predicated region
    $region10: #{forward.1} parent=1 // pred_check
      _
    $region11: #{forward.1} parent=1 // pred_check_branch
      %25 = sbr.rel (0) target = $region13
    $region12: #{forward.1} parent=1 // pred_region
      _
    $region13: #{forward.1} parent=1 // pred_fallthru
      _
    // Predicated region
    $region14: #{forward.1} parent=1 // pred_check
      _
    $region15: #{forward.1} parent=1 // pred_check_branch
      %27 = sbr.rel (0) target = $region17
    $region16: #{forward.1} parent=1 // pred_region
      _
    $region17: #{forward.1} parent=1 // pred_fallthru
      _
    // Predicated region
    $region18: #{forward.1} parent=1 // pred_check
      _
    $region19: #{forward.1} parent=1 // pred_check_branch
      %29 = sbr.rel (0) target = $region21
    $region20: #{forward.1} parent=1 // pred_region
      _
    $region21: #{forward.1} parent=1 // pred_fallthru
      _
    // Predicated region
    $region22: #{forward.1} parent=1 // pred_check
      _
    $region23: #{forward.1} parent=1 // pred_check_branch
      %31 = sbr.rel (0) target = $region25
    $region24: #{forward.1} parent=1 // pred_region
      _
    $region25: #{forward.1} parent=1 // pred_fallthru
      _
    // Predicated region
    $region26: #{forward.1} parent=1 // pred_check
      _
    $region27: #{forward.1} parent=1 // pred_check_branch
      %33 = sbr.rel (0) target = $region29
    $region28: #{forward.1} parent=1 // pred_region
      _
    $region29: #{forward.1} parent=1 // pred_fallthru
      _
    // Predicated region
    $region30: #{forward.1} parent=1 // pred_check
      _
    $region31: #{forward.1} parent=1 // pred_check_branch
      %35 = sbr.rel (0) target = $region33
    $region32: #{forward.1} parent=1 // pred_region
      _
    $region33: #{forward.1} parent=1 // pred_fallthru
      _
    // Predicated region
    $region34: #{forward.1} parent=1 // pred_check
      _
    $region35: #{forward.1} parent=1 // pred_check_branch
      %37 = sbr.rel (0) target = $region37
    $region36: #{forward.1} parent=1 // pred_region
      _
    $region37: #{forward.1} parent=1 // pred_fallthru
      _
    // Predicated region
    $region38: #{forward.1} parent=1 // pred_check
      _
    $region39: #{forward.1} parent=1 // pred_check_branch
      %39 = sbr.rel (0) target = $region41
    $region40: #{forward.1} parent=1 // pred_region
      _
    $region41: #{forward.1} parent=1 // pred_fallthru
      _
    // Predicated region
    $region42: #{forward.1} parent=1 // pred_check
      _
    $region43: #{forward.1} parent=1 // pred_check_branch
      %41 = sbr.rel (0) target = $region45
    $region44: #{forward.1} parent=1 // pred_region
      _
    $region45: #{forward.1} parent=1 // pred_fallthru
      _
    // Predicated region
    $region46: #{forward.1} parent=1 // pred_check
      _
    $region47: #{forward.1} parent=1 // pred_check_branch
      %43 = sbr.rel (0) target = $region49
    $region48: #{forward.1} parent=1 // pred_region
      _
    $region49: #{forward.1} parent=1 // pred_fallthru
      _
    // Predicated region
    $region50: #{forward.1} parent=1 // pred_check
      _
    $region51: #{forward.1} parent=1 // pred_check_branch
      %45 = sbr.rel (0) target = $region53
    $region52: #{forward.1} parent=1 // pred_region
      _
    $region53: #{forward.1} parent=1 // pred_fallthru
      _
    // Predicated region
    $region54: #{forward.1} parent=1 // pred_check
      _
    $region55: #{forward.1} parent=1 // pred_check_branch
      %47 = sbr.rel (0) target = $region57
    $region56: #{forward.1} parent=1 // pred_region
      _
    $region57: #{forward.1} parent=1 // pred_fallthru
      _
    %v49 = vld [vmem:[%s0] sm:$0xf]
    %v50 = vld [vmem:[%s0 + $0x4] sm:$0xf]
    %v51 = vld [vmem:[%s0 + $0x8] sm:$0xf]
    %v52 = vld [vmem:[%s0 + $0xc] sm:$0xf]
    %v53 = vld [vmem:[%s0 + $0x10] sm:$0xf]
    %v54 = vld [vmem:[%s0 + $0x14] sm:$0xf]
    %v55 = vld [vmem:[%s0 + $0x18] sm:$0xf]
    %v56 = vld [vmem:[%s0 + $0x1c] sm:$0xf]
    %v57 = vld [vmem:[%s0 + $0x20] sm:$0xf]
    %v58 = vld [vmem:[%s0 + $0x24] sm:$0xf]
    %v59 = vld [vmem:[%s0 + $0x28] sm:$0xf]
    %v60 = vld [vmem:[%s0 + $0x2c] sm:$0xf]
    %v61 = vld [vmem:[%s0 + $0x30] sm:$0xf]
    %v62 = vld [vmem:[%s0 + $0x34] sm:$0xf]
    %v63 = vld [vmem:[%s0 + $0x38] sm:$0xf]
    %v64 = vld [vmem:[%s0 + $0x3c] sm:$0xf]
    %v65 = vld [vmem:[%s0 + $0x40] sm:$0xf]
    %v66 = vld [vmem:[%s0 + $0x44] sm:$0xf]
    %v67 = vld [vmem:[%s0 + $0x48] sm:$0xf]
    %v68 = vld [vmem:[%s0 + $0x4c] sm:$0xf]
    %v69 = vld [vmem:[%s0 + $0x50] sm:$0xf]
    %v70 = vld [vmem:[%s0 + $0x54] sm:$0xf]
    %v71 = vld [vmem:[%s0 + $0x58] sm:$0xf]
    %v72 = vld [vmem:[%s0 + $0x5c] sm:$0xf]
    %v73 = vld [vmem:[%s0 + $0x60] sm:$0xf]
    %v74 = vld [vmem:[%s0 + $0x64] sm:$0xf]
    %v75 = vld [vmem:[%s0 + $0x68] sm:$0xf]
    %v76 = vld [vmem:[%s0 + $0x6c] sm:$0xf]
    %v77 = vld [vmem:[%s0 + $0x70] sm:$0xf]
    %v78 = vld [vmem:[%s0 + $0x74] sm:$0xf]
    %v79 = vld [vmem:[%s0 + $0x78] sm:$0xf]
    %v80 = vld [vmem:[%s0 + $0x7c] sm:$0xf]
    %v81 = vld [vmem:[%s0 + $0x80] sm:$0xf]
    %v82 = vld [vmem:[%s0 + $0x84] sm:$0xf]
    %v83 = vld [vmem:[%s0 + $0x88] sm:$0xf]
    %v84 = vld [vmem:[%s0 + $0x8c] sm:$0xf]
    %v85 = vld [vmem:[%s0 + $0x90] sm:$0xf]
    %v86 = vld [vmem:[%s0 + $0x94] sm:$0xf]
    %v87 = vld [vmem:[%s0 + $0x98] sm:$0xf]
    %v88 = vld [vmem:[%s0 + $0x9c] sm:$0xf]
    %v89 = vld [vmem:[%s0 + $0xa0] sm:$0xf]
    %v90 = vld [vmem:[%s0 + $0xa4] sm:$0xf]
    %v91 = vld [vmem:[%s0 + $0xa8] sm:$0xf]
    %v92 = vld [vmem:[%s0 + $0xac] sm:$0xf]
    %v93 = vld [vmem:[%s0 + $0xb0] sm:$0xf]
    %v94 = vld [vmem:[%s0 + $0xb4] sm:$0xf]
    %v95 = vld [vmem:[%s0 + $0xb8] sm:$0xf]
    %v96 = vld [vmem:[%s0 + $0xbc] sm:$0xf]
    %v97 = vld [vmem:[%s0 + $0xc0] sm:$0xf]
    %v98 = vld [vmem:[%s0 + $0xc4] sm:$0xf]
    %v99 = vld [vmem:[%s0 + $0xc8] sm:$0xf]
    %v100 = vld [vmem:[%s0 + $0xcc] sm:$0xf]
    %v101 = vld [vmem:[%s0 + $0xd0] sm:$0xf]
    %v102 = vld [vmem:[%s0 + $0xd4] sm:$0xf]
    %v103 = vld [vmem:[%s0 + $0xd8] sm:$0xf]
    %v104 = vld [vmem:[%s0 + $0xdc] sm:$0xf]
    %v105 = vld [vmem:[%s0 + $0xe0] sm:$0xf]
    %v106 = vld [vmem:[%s0 + $0xe4] sm:$0xf]
    %v107 = vld [vmem:[%s0 + $0xe8] sm:$0xf]
    %v108 = vld [vmem:[%s0 + $0xec] sm:$0xf]
    %v109 = vld [vmem:[%s0 + $0xf0] sm:$0xf]
    %v110 = vld [vmem:[%s0 + $0xf4] sm:$0xf]
    %v111 = vld [vmem:[%s0 + $0xf8] sm:$0xf]
    %v112 = vld [vmem:[%s0 + $0xfc] sm:$0xf]
    %v113 = vld [vmem:[%s1] sm:$0xf]
    %v114 = vld [vmem:[%s1 + $0x4] sm:$0xf]
    %v115 = vld [vmem:[%s1 + $0x8] sm:$0xf]
    %v116 = vld [vmem:[%s1 + $0xc] sm:$0x3]
    %v181 = vunpack.c.l.b16 %v49
    %v182 = vunpack.c.l.b16 %v50
    %v183 = vunpack.c.l.b16 %v51
    %v184 = vunpack.c.l.b16 %v52
    %v185 = vunpack.c.l.b16 %v53
    %v186 = vunpack.c.l.b16 %v54
    %v187 = vunpack.c.l.b16 %v55
    %v188 = vunpack.c.l.b16 %v56
    %v189 = vunpack.c.l.b16 %v57
    %v190 = vunpack.c.l.b16 %v58
    %v191 = vunpack.c.l.b16 %v59
    %v192 = vunpack.c.l.b16 %v60
    %v193 = vunpack.c.l.b16 %v61
    %v194 = vunpack.c.l.b16 %v62
    %v195 = vunpack.c.l.b16 %v63
    %v196 = vunpack.c.l.b16 %v64
    %v197 = vunpack.c.l.b16 %v65
    %v198 = vunpack.c.l.b16 %v66
    %v199 = vunpack.c.l.b16 %v67
    %v200 = vunpack.c.l.b16 %v68
    %v201 = vunpack.c.l.b16 %v69
    %v202 = vunpack.c.l.b16 %v70
    %v203 = vunpack.c.l.b16 %v71
    %v204 = vunpack.c.l.b16 %v72
    %v205 = vunpack.c.l.b16 %v73
    %v206 = vunpack.c.l.b16 %v74
    %v207 = vunpack.c.l.b16 %v75
    %v208 = vunpack.c.l.b16 %v76
    %v209 = vunpack.c.l.b16 %v77
    %v210 = vunpack.c.l.b16 %v78
    %v211 = vunpack.c.l.b16 %v79
    %v212 = vunpack.c.l.b16 %v80
    %v213 = vunpack.c.l.b16 %v81
    %v214 = vunpack.c.l.b16 %v82
    %v215 = vunpack.c.l.b16 %v83
    %v216 = vunpack.c.l.b16 %v84
    %v217 = vunpack.c.l.b16 %v85
    %v218 = vunpack.c.l.b16 %v86
    %v219 = vunpack.c.l.b16 %v87
    %v220 = vunpack.c.l.b16 %v88
    %v221 = vunpack.c.l.b16 %v89
    %v222 = vunpack.c.l.b16 %v90
    %v223 = vunpack.c.l.b16 %v91
    %v224 = vunpack.c.l.b16 %v92
    %v225 = vunpack.c.l.b16 %v93
    %v226 = vunpack.c.l.b16 %v94
    %v227 = vunpack.c.l.b16 %v95
    %v228 = vunpack.c.l.b16 %v96
    %v229 = vunpack.c.l.b16 %v97
    %v230 = vunpack.c.l.b16 %v98
    %v231 = vunpack.c.l.b16 %v99
    %v232 = vunpack.c.l.b16 %v100
    %v233 = vunpack.c.l.b16 %v101
    %v234 = vunpack.c.l.b16 %v102
    %v235 = vunpack.c.l.b16 %v103
    %v236 = vunpack.c.l.b16 %v104
    %v237 = vunpack.c.l.b16 %v105
    %v238 = vunpack.c.l.b16 %v106
    %v239 = vunpack.c.l.b16 %v107
    %v240 = vunpack.c.l.b16 %v108
    %v241 = vunpack.c.l.b16 %v109
    %v242 = vunpack.c.l.b16 %v110
    %v243 = vunpack.c.l.b16 %v111
    %v244 = vunpack.c.l.b16 %v112
    %v245 = vpack.c.b16 %v182, %v181
    %v246 = vpack.c.b16 %v184, %v183
    %v247 = vpack.c.b16 %v186, %v185
    %v248 = vpack.c.b16 %v188, %v187
    %v249 = vpack.c.b16 %v190, %v189
    %v250 = vpack.c.b16 %v192, %v191
    %v251 = vpack.c.b16 %v194, %v193
    %v252 = vpack.c.b16 %v196, %v195
    %v253 = vpack.c.b16 %v198, %v197
    %v254 = vpack.c.b16 %v200, %v199
    %v255 = vpack.c.b16 %v202, %v201
    %v256 = vpack.c.b16 %v204, %v203
    %v257 = vpack.c.b16 %v206, %v205
    %v258 = vpack.c.b16 %v208, %v207
    %v259 = vpack.c.b16 %v210, %v209
    %v260 = vpack.c.b16 %v212, %v211
    %v261 = vpack.c.b16 %v214, %v213
    %v262 = vpack.c.b16 %v216, %v215
    %v263 = vpack.c.b16 %v218, %v217
    %v264 = vpack.c.b16 %v220, %v219
    %v265 = vpack.c.b16 %v222, %v221
    %v266 = vpack.c.b16 %v224, %v223
    %v267 = vpack.c.b16 %v226, %v225
    %v268 = vpack.c.b16 %v228, %v227
    %v269 = vpack.c.b16 %v230, %v229
    %v270 = vpack.c.b16 %v232, %v231
    %v271 = vpack.c.b16 %v234, %v233
    %v272 = vpack.c.b16 %v236, %v235
    %v273 = vpack.c.b16 %v238, %v237
    %v274 = vpack.c.b16 %v240, %v239
    %v275 = vpack.c.b16 %v242, %v241
    %v276 = vpack.c.b16 %v244, %v243
    %v281 = vunpack.c.l.b16 %v113
    %v282 = vunpack.c.l.b16 %v114
    %v283 = vunpack.c.l.b16 %v115
    %v284 = vunpack.c.l.b16 %v116
    %v285 = vpack.c.b16 %v282, %v281
    %v286 = vpack.c.b16 %v284, %v283
    %vm288 = vcmask 220160
    %v290 = vsel %vm288, %v245, 0
    %v293 = vsel %vm288, %v246, 0
    %v296 = vsel %vm288, %v247, 0
    %v299 = vsel %vm288, %v248, 0
    %v302 = vsel %vm288, %v249, 0
    %v305 = vsel %vm288, %v250, 0
    %v308 = vsel %vm288, %v251, 0
    %v311 = vsel %vm288, %v252, 0
    %v314 = vsel %vm288, %v253, 0
    %v317 = vsel %vm288, %v254, 0
    %v320 = vsel %vm288, %v255, 0
    %v323 = vsel %vm288, %v256, 0
    %v326 = vsel %vm288, %v257, 0
    %v329 = vsel %vm288, %v258, 0
    %v332 = vsel %vm288, %v259, 0
    %v335 = vsel %vm288, %v260, 0
    %v338 = vsel %vm288, %v261, 0
    %v341 = vsel %vm288, %v262, 0
    %v344 = vsel %vm288, %v263, 0
    %v347 = vsel %vm288, %v264, 0
    %v350 = vsel %vm288, %v265, 0
    %v353 = vsel %vm288, %v266, 0
    %v356 = vsel %vm288, %v267, 0
    %v359 = vsel %vm288, %v268, 0
    %v362 = vsel %vm288, %v269, 0
    %v365 = vsel %vm288, %v270, 0
    %v368 = vsel %vm288, %v271, 0
    %v371 = vsel %vm288, %v272, 0
    %v374 = vsel %vm288, %v273, 0
    %v377 = vsel %vm288, %v274, 0
    %v380 = vsel %vm288, %v275, 0
    %v383 = vsel %vm288, %v276, 0
    %vm385 = vcmask 1044480
    %vm386 = vcmask 1045504
    %v387 = vsel %vm385, 4294967295, 65535
    %v388 = vsel %vm386, %v387, 0
    %v390 = vand.u32 %v286, %v388
    %392 = vmatprep.subr.bf16.mxu0 0
    %393 = vmatpush1.bf16.msra.mxu0 0
    %394 = vmatprep.subr.bf16.mxu0 0
    %395 = vmatpush1.bf16.msra.mxu0 0
    %396 = vmatprep.subr.bf16.mxu0 0
    %397 = vmatpush1.bf16.msra.mxu0 0
    %398 = vmatprep.subr.bf16.mxu0 0
    %399 = vmatpush1.bf16.msra.mxu0 0
    %400 = vmatprep.subr.bf16.mxu0 0
    %401 = vmatpush1.bf16.msra.mxu0 0
    %402 = vmatprep.subr.bf16.mxu0 0
    %403 = vmatpush1.bf16.msra.mxu0 0
    %404 = vmatprep.subr.bf16.mxu0 0
    %405 = vmatpush1.bf16.msra.mxu0 %v390
    %406 = vmatprep.subr.bf16.mxu0 0
    %407 = vmatpush1.bf16.msra.mxu0 %v285
    %408 = vmatprep.subr.bf16.mxu0 0
    %409 = vmatpush2.bf16.msra.mxu0 0
    %410 = vmatprep.subr.bf16.mxu0 0
    %411 = vmatpush2.bf16.msra.mxu0 0
    %412 = vmatprep.subr.bf16.mxu0 0
    %413 = vmatpush2.bf16.msra.mxu0 0
    %414 = vmatprep.subr.bf16.mxu0 0
    %415 = vmatpush2.bf16.msra.mxu0 0
    %416 = vmatprep.subr.bf16.mxu0 0
    %417 = vmatpush2.bf16.msra.mxu0 0
    %418 = vmatprep.subr.bf16.mxu0 0
    %419 = vmatpush2.bf16.msra.mxu0 0
    %420 = vmatprep.subr.bf16.mxu0 0
    %421 = vmatpush2.bf16.msra.mxu0 0
    %422 = vmatprep.subr.bf16.mxu0 0
    %423 = vmatpush2.bf16.msra.mxu0 0
    %424 = vmatprep.mubr.bf16.mxu0 0
    %425 = vmatmul.mubr.bf16.gmra.mxu0 %v290
    %v426 = vpop.f32.mrf.mxu0
    %v427 = vadd.f32 0.0, %v426
    %v428 = vpop.f32.mrf.mxu0
    %v429 = vpop.f32.mrf.mxu0
    %v430 = vadd.f32 0.0, %v429
    %v431 = vpop.f32.mrf.mxu0
    %432 = vmatprep.mubr.bf16.mxu0 0
    %433 = vmatmul.mubr.bf16.gmra.mxu0 %v293
    %v434 = vpop.f32.mrf.mxu0
    %v435 = vadd.f32 0.0, %v434
    %v436 = vpop.f32.mrf.mxu0
    %v437 = vpop.f32.mrf.mxu0
    %v438 = vadd.f32 0.0, %v437
    %v439 = vpop.f32.mrf.mxu0
    %440 = vmatprep.mubr.bf16.mxu0 0
    %441 = vmatmul.mubr.bf16.gmra.mxu0 %v296
    %v442 = vpop.f32.mrf.mxu0
    %v443 = vadd.f32 0.0, %v442
    %v444 = vpop.f32.mrf.mxu0
    %v445 = vpop.f32.mrf.mxu0
    %v446 = vadd.f32 0.0, %v445
    %v447 = vpop.f32.mrf.mxu0
    %448 = vmatprep.mubr.bf16.mxu0 0
    %449 = vmatmul.mubr.bf16.gmra.mxu0 %v299
    %v450 = vpop.f32.mrf.mxu0
    %v451 = vadd.f32 0.0, %v450
    %v452 = vpop.f32.mrf.mxu0
    %v453 = vpop.f32.mrf.mxu0
    %v454 = vadd.f32 0.0, %v453
    %v455 = vpop.f32.mrf.mxu0
    %456 = vmatprep.mubr.bf16.mxu0 0
    %457 = vmatmul.mubr.bf16.gmra.mxu0 %v302
    %v458 = vpop.f32.mrf.mxu0
    %v459 = vadd.f32 0.0, %v458
    %v460 = vpop.f32.mrf.mxu0
    %v461 = vpop.f32.mrf.mxu0
    %v462 = vadd.f32 0.0, %v461
    %v463 = vpop.f32.mrf.mxu0
    %464 = vmatprep.mubr.bf16.mxu0 0
    %465 = vmatmul.mubr.bf16.gmra.mxu0 %v305
    %v466 = vpop.f32.mrf.mxu0
    %v467 = vadd.f32 0.0, %v466
    %v468 = vpop.f32.mrf.mxu0
    %v469 = vpop.f32.mrf.mxu0
    %v470 = vadd.f32 0.0, %v469
    %v471 = vpop.f32.mrf.mxu0
    %472 = vmatprep.mubr.bf16.mxu0 0
    %473 = vmatmul.mubr.bf16.gmra.mxu0 %v308
    %v474 = vpop.f32.mrf.mxu0
    %v475 = vadd.f32 0.0, %v474
    %v476 = vpop.f32.mrf.mxu0
    %v477 = vpop.f32.mrf.mxu0
    %v478 = vadd.f32 0.0, %v477
    %v479 = vpop.f32.mrf.mxu0
    %480 = vmatprep.mubr.bf16.mxu0 0
    %481 = vmatmul.mubr.bf16.gmra.mxu0 %v311
    %v482 = vpop.f32.mrf.mxu0
    %v483 = vadd.f32 0.0, %v482
    %v484 = vpop.f32.mrf.mxu0
    %v485 = vpop.f32.mrf.mxu0
    %v486 = vadd.f32 0.0, %v485
    %v487 = vpop.f32.mrf.mxu0
    %488 = vmatprep.mubr.bf16.mxu0 0
    %489 = vmatmul.mubr.bf16.gmra.mxu0 %v314
    %v490 = vpop.f32.mrf.mxu0
    %v491 = vadd.f32 0.0, %v490
    %v492 = vpop.f32.mrf.mxu0
    %v493 = vpop.f32.mrf.mxu0
    %v494 = vadd.f32 0.0, %v493
    %v495 = vpop.f32.mrf.mxu0
    %496 = vmatprep.mubr.bf16.mxu0 0
    %497 = vmatmul.mubr.bf16.gmra.mxu0 %v317
    %v498 = vpop.f32.mrf.mxu0
    %v499 = vadd.f32 0.0, %v498
    %v500 = vpop.f32.mrf.mxu0
    %v501 = vpop.f32.mrf.mxu0
    %v502 = vadd.f32 0.0, %v501
    %v503 = vpop.f32.mrf.mxu0
    %504 = vmatprep.mubr.bf16.mxu0 0
    %505 = vmatmul.mubr.bf16.gmra.mxu0 %v320
    %v506 = vpop.f32.mrf.mxu0
    %v507 = vadd.f32 0.0, %v506
    %v508 = vpop.f32.mrf.mxu0
    %v509 = vpop.f32.mrf.mxu0
    %v510 = vadd.f32 0.0, %v509
    %v511 = vpop.f32.mrf.mxu0
    %512 = vmatprep.mubr.bf16.mxu0 0
    %513 = vmatmul.mubr.bf16.gmra.mxu0 %v323
    %v514 = vpop.f32.mrf.mxu0
    %v515 = vadd.f32 0.0, %v514
    %v516 = vpop.f32.mrf.mxu0
    %v517 = vpop.f32.mrf.mxu0
    %v518 = vadd.f32 0.0, %v517
    %v519 = vpop.f32.mrf.mxu0
    %520 = vmatprep.mubr.bf16.mxu0 0
    %521 = vmatmul.mubr.bf16.gmra.mxu0 %v326
    %v522 = vpop.f32.mrf.mxu0
    %v523 = vadd.f32 0.0, %v522
    %v524 = vpop.f32.mrf.mxu0
    %v525 = vpop.f32.mrf.mxu0
    %v526 = vadd.f32 0.0, %v525
    %v527 = vpop.f32.mrf.mxu0
    %528 = vmatprep.mubr.bf16.mxu0 0
    %529 = vmatmul.mubr.bf16.gmra.mxu0 %v329
    %v530 = vpop.f32.mrf.mxu0
    %v531 = vadd.f32 0.0, %v530
    %v532 = vpop.f32.mrf.mxu0
    %v533 = vpop.f32.mrf.mxu0
    %v534 = vadd.f32 0.0, %v533
    %v535 = vpop.f32.mrf.mxu0
    %536 = vmatprep.mubr.bf16.mxu0 0
    %537 = vmatmul.mubr.bf16.gmra.mxu0 %v332
    %v538 = vpop.f32.mrf.mxu0
    %v539 = vadd.f32 0.0, %v538
    %v540 = vpop.f32.mrf.mxu0
    %v541 = vpop.f32.mrf.mxu0
    %v542 = vadd.f32 0.0, %v541
    %v543 = vpop.f32.mrf.mxu0
    %544 = vmatprep.mubr.bf16.mxu0 0
    %545 = vmatmul.mubr.bf16.gmra.mxu0 %v335
    %v546 = vpop.f32.mrf.mxu0
    %v547 = vadd.f32 0.0, %v546
    %v548 = vpop.f32.mrf.mxu0
    %v549 = vpop.f32.mrf.mxu0
    %v550 = vadd.f32 0.0, %v549
    %v551 = vpop.f32.mrf.mxu0
    %552 = vmatprep.mubr.bf16.mxu0 0
    %553 = vmatmul.mubr.bf16.gmra.mxu0 %v338
    %v554 = vpop.f32.mrf.mxu0
    %v555 = vadd.f32 0.0, %v554
    %v556 = vpop.f32.mrf.mxu0
    %v557 = vpop.f32.mrf.mxu0
    %v558 = vadd.f32 0.0, %v557
    %v559 = vpop.f32.mrf.mxu0
    %560 = vmatprep.mubr.bf16.mxu0 0
    %561 = vmatmul.mubr.bf16.gmra.mxu0 %v341
    %v562 = vpop.f32.mrf.mxu0
    %v563 = vadd.f32 0.0, %v562
    %v564 = vpop.f32.mrf.mxu0
    %v565 = vpop.f32.mrf.mxu0
    %v566 = vadd.f32 0.0, %v565
    %v567 = vpop.f32.mrf.mxu0
    %568 = vmatprep.mubr.bf16.mxu0 0
    %569 = vmatmul.mubr.bf16.gmra.mxu0 %v344
    %v570 = vpop.f32.mrf.mxu0
    %v571 = vadd.f32 0.0, %v570
    %v572 = vpop.f32.mrf.mxu0
    %v573 = vpop.f32.mrf.mxu0
    %v574 = vadd.f32 0.0, %v573
    %v575 = vpop.f32.mrf.mxu0
    %576 = vmatprep.mubr.bf16.mxu0 0
    %577 = vmatmul.mubr.bf16.gmra.mxu0 %v347
    %v578 = vpop.f32.mrf.mxu0
    %v579 = vadd.f32 0.0, %v578
    %v580 = vpop.f32.mrf.mxu0
    %v581 = vpop.f32.mrf.mxu0
    %v582 = vadd.f32 0.0, %v581
    %v583 = vpop.f32.mrf.mxu0
    %584 = vmatprep.mubr.bf16.mxu0 0
    %585 = vmatmul.mubr.bf16.gmra.mxu0 %v350
    %v586 = vpop.f32.mrf.mxu0
    %v587 = vadd.f32 0.0, %v586
    %v588 = vpop.f32.mrf.mxu0
    %v589 = vpop.f32.mrf.mxu0
    %v590 = vadd.f32 0.0, %v589
    %v591 = vpop.f32.mrf.mxu0
    %592 = vmatprep.mubr.bf16.mxu0 0
    %593 = vmatmul.mubr.bf16.gmra.mxu0 %v353
    %v594 = vpop.f32.mrf.mxu0
    %v595 = vadd.f32 0.0, %v594
    %v596 = vpop.f32.mrf.mxu0
    %v597 = vpop.f32.mrf.mxu0
    %v598 = vadd.f32 0.0, %v597
    %v599 = vpop.f32.mrf.mxu0
    %600 = vmatprep.mubr.bf16.mxu0 0
    %601 = vmatmul.mubr.bf16.gmra.mxu0 %v356
    %v602 = vpop.f32.mrf.mxu0
    %v603 = vadd.f32 0.0, %v602
    %v604 = vpop.f32.mrf.mxu0
    %v605 = vpop.f32.mrf.mxu0
    %v606 = vadd.f32 0.0, %v605
    %v607 = vpop.f32.mrf.mxu0
    %608 = vmatprep.mubr.bf16.mxu0 0
    %609 = vmatmul.mubr.bf16.gmra.mxu0 %v359
    %v610 = vpop.f32.mrf.mxu0
    %v611 = vadd.f32 0.0, %v610
    %v612 = vpop.f32.mrf.mxu0
    %v613 = vpop.f32.mrf.mxu0
    %v614 = vadd.f32 0.0, %v613
    %v615 = vpop.f32.mrf.mxu0
    %616 = vmatprep.mubr.bf16.mxu0 0
    %617 = vmatmul.mubr.bf16.gmra.mxu0 %v362
    %v618 = vpop.f32.mrf.mxu0
    %v619 = vadd.f32 0.0, %v618
    %v620 = vpop.f32.mrf.mxu0
    %v621 = vpop.f32.mrf.mxu0
    %v622 = vadd.f32 0.0, %v621
    %v623 = vpop.f32.mrf.mxu0
    %624 = vmatprep.mubr.bf16.mxu0 0
    %625 = vmatmul.mubr.bf16.gmra.mxu0 %v365
    %v626 = vpop.f32.mrf.mxu0
    %v627 = vadd.f32 0.0, %v626
    %v628 = vpop.f32.mrf.mxu0
    %v629 = vpop.f32.mrf.mxu0
    %v630 = vadd.f32 0.0, %v629
    %v631 = vpop.f32.mrf.mxu0
    %632 = vmatprep.mubr.bf16.mxu0 0
    %633 = vmatmul.mubr.bf16.gmra.mxu0 %v368
    %v634 = vpop.f32.mrf.mxu0
    %v635 = vadd.f32 0.0, %v634
    %v636 = vpop.f32.mrf.mxu0
    %v637 = vpop.f32.mrf.mxu0
    %v638 = vadd.f32 0.0, %v637
    %v639 = vpop.f32.mrf.mxu0
    %640 = vmatprep.mubr.bf16.mxu0 0
    %641 = vmatmul.mubr.bf16.gmra.mxu0 %v371
    %v642 = vpop.f32.mrf.mxu0
    %v643 = vadd.f32 0.0, %v642
    %v644 = vpop.f32.mrf.mxu0
    %v645 = vpop.f32.mrf.mxu0
    %v646 = vadd.f32 0.0, %v645
    %v647 = vpop.f32.mrf.mxu0
    %648 = vmatprep.mubr.bf16.mxu0 0
    %649 = vmatmul.mubr.bf16.gmra.mxu0 %v374
    %v650 = vpop.f32.mrf.mxu0
    %v651 = vadd.f32 0.0, %v650
    %v652 = vpop.f32.mrf.mxu0
    %v653 = vpop.f32.mrf.mxu0
    %v654 = vadd.f32 0.0, %v653
    %v655 = vpop.f32.mrf.mxu0
    %656 = vmatprep.mubr.bf16.mxu0 0
    %657 = vmatmul.mubr.bf16.gmra.mxu0 %v377
    %v658 = vpop.f32.mrf.mxu0
    %v659 = vadd.f32 0.0, %v658
    %v660 = vpop.f32.mrf.mxu0
    %v661 = vpop.f32.mrf.mxu0
    %v662 = vadd.f32 0.0, %v661
    %v663 = vpop.f32.mrf.mxu0
    %664 = vmatprep.mubr.bf16.mxu0 0
    %665 = vmatmul.mubr.bf16.gmra.mxu0 %v380
    %v666 = vpop.f32.mrf.mxu0
    %v667 = vadd.f32 0.0, %v666
    %v668 = vpop.f32.mrf.mxu0
    %v669 = vpop.f32.mrf.mxu0
    %v670 = vadd.f32 0.0, %v669
    %v671 = vpop.f32.mrf.mxu0
    %672 = vmatprep.mubr.bf16.mxu0 0
    %673 = vmatmul.mubr.bf16.gmra.mxu0 %v383
    %v674 = vpop.f32.mrf.mxu0
    %v675 = vadd.f32 0.0, %v674
    %v676 = vpop.f32.mrf.mxu0
    %v677 = vpop.f32.mrf.mxu0
    %v678 = vadd.f32 0.0, %v677
    %v679 = vpop.f32.mrf.mxu0
    %680 = vdwg.mxu0
    %vm681 = vcmask 261120
    %v682 = vsel %vm681, %v427, 0.0
    %v683 = vsel %vm681, %v430, 0.0
    %v684 = vadd.f32 %v682, %v683
    %v685 = vsel %vm681, %v435, 0.0
    %v686 = vadd.f32 %v684, %v685
    %v687 = vsel %vm681, %v438, 0.0
    %v688 = vadd.f32 %v686, %v687
    %v689 = vsel %vm681, %v443, 0.0
    %v690 = vadd.f32 %v688, %v689
    %v691 = vsel %vm681, %v446, 0.0
    %v692 = vadd.f32 %v690, %v691
    %v693 = vsel %vm681, %v451, 0.0
    %v694 = vadd.f32 %v692, %v693
    %v695 = vsel %vm681, %v454, 0.0
    %v696 = vadd.f32 %v694, %v695
    %v697 = vsel %vm681, %v459, 0.0
    %v698 = vadd.f32 %v696, %v697
    %v699 = vsel %vm681, %v462, 0.0
    %v700 = vadd.f32 %v698, %v699
    %v701 = vsel %vm681, %v467, 0.0
    %v702 = vadd.f32 %v700, %v701
    %v703 = vsel %vm681, %v470, 0.0
    %v704 = vadd.f32 %v702, %v703
    %v705 = vsel %vm681, %v475, 0.0
    %v706 = vadd.f32 %v704, %v705
    %v707 = vsel %vm681, %v478, 0.0
    %v708 = vadd.f32 %v706, %v707
    %v709 = vsel %vm681, %v483, 0.0
    %v710 = vadd.f32 %v708, %v709
    %v711 = vsel %vm681, %v486, 0.0
    %v712 = vadd.f32 %v710, %v711
    %v713 = vsel %vm681, %v491, 0.0
    %v714 = vadd.f32 %v712, %v713
    %v715 = vsel %vm681, %v494, 0.0
    %v716 = vadd.f32 %v714, %v715
    %v717 = vsel %vm681, %v499, 0.0
    %v718 = vadd.f32 %v716, %v717
    %v719 = vsel %vm681, %v502, 0.0
    %v720 = vadd.f32 %v718, %v719
    %v721 = vsel %vm681, %v507, 0.0
    %v722 = vadd.f32 %v720, %v721
    %v723 = vsel %vm681, %v510, 0.0
    %v724 = vadd.f32 %v722, %v723
    %v725 = vsel %vm681, %v515, 0.0
    %v726 = vadd.f32 %v724, %v725
    %v727 = vsel %vm681, %v518, 0.0
    %v728 = vadd.f32 %v726, %v727
    %v729 = vsel %vm681, %v523, 0.0
    %v730 = vadd.f32 %v728, %v729
    %v731 = vsel %vm681, %v526, 0.0
    %v732 = vadd.f32 %v730, %v731
    %v733 = vsel %vm681, %v531, 0.0
    %v734 = vadd.f32 %v732, %v733
    %v735 = vsel %vm681, %v534, 0.0
    %v736 = vadd.f32 %v734, %v735
    %v737 = vsel %vm681, %v539, 0.0
    %v738 = vadd.f32 %v736, %v737
    %v739 = vsel %vm681, %v542, 0.0
    %v740 = vadd.f32 %v738, %v739
    %v741 = vsel %vm681, %v547, 0.0
    %v742 = vadd.f32 %v740, %v741
    %v743 = vsel %vm681, %v550, 0.0
    %v744 = vadd.f32 %v742, %v743
    %v745 = vsel %vm681, %v555, 0.0
    %v746 = vadd.f32 %v744, %v745
    %v747 = vsel %vm681, %v558, 0.0
    %v748 = vadd.f32 %v746, %v747
    %v749 = vsel %vm681, %v563, 0.0
    %v750 = vadd.f32 %v748, %v749
    %v751 = vsel %vm681, %v566, 0.0
    %v752 = vadd.f32 %v750, %v751
    %v753 = vsel %vm681, %v571, 0.0
    %v754 = vadd.f32 %v752, %v753
    %v755 = vsel %vm681, %v574, 0.0
    %v756 = vadd.f32 %v754, %v755
    %v757 = vsel %vm681, %v579, 0.0
    %v758 = vadd.f32 %v756, %v757
    %v759 = vsel %vm681, %v582, 0.0
    %v760 = vadd.f32 %v758, %v759
    %v761 = vsel %vm681, %v587, 0.0
    %v762 = vadd.f32 %v760, %v761
    %v763 = vsel %vm681, %v590, 0.0
    %v764 = vadd.f32 %v762, %v763
    %v765 = vsel %vm681, %v595, 0.0
    %v766 = vadd.f32 %v764, %v765
    %v767 = vsel %vm681, %v598, 0.0
    %v768 = vadd.f32 %v766, %v767
    %v769 = vsel %vm681, %v603, 0.0
    %v770 = vadd.f32 %v768, %v769
    %v771 = vsel %vm681, %v606, 0.0
    %v772 = vadd.f32 %v770, %v771
    %v773 = vsel %vm681, %v611, 0.0
    %v774 = vadd.f32 %v772, %v773
    %v775 = vsel %vm681, %v614, 0.0
    %v776 = vadd.f32 %v774, %v775
    %v777 = vsel %vm681, %v619, 0.0
    %v778 = vadd.f32 %v776, %v777
    %v779 = vsel %vm681, %v622, 0.0
    %v780 = vadd.f32 %v778, %v779
    %v781 = vsel %vm681, %v627, 0.0
    %v782 = vadd.f32 %v780, %v781
    %v783 = vsel %vm681, %v630, 0.0
    %v784 = vadd.f32 %v782, %v783
    %v785 = vsel %vm681, %v635, 0.0
    %v786 = vadd.f32 %v784, %v785
    %v787 = vsel %vm681, %v638, 0.0
    %v788 = vadd.f32 %v786, %v787
    %v789 = vsel %vm681, %v643, 0.0
    %v790 = vadd.f32 %v788, %v789
    %v791 = vsel %vm681, %v646, 0.0
    %v792 = vadd.f32 %v790, %v791
    %v793 = vsel %vm681, %v651, 0.0
    %v794 = vadd.f32 %v792, %v793
    %v795 = vsel %vm681, %v654, 0.0
    %v796 = vadd.f32 %v794, %v795
    %v797 = vsel %vm681, %v659, 0.0
    %v798 = vadd.f32 %v796, %v797
    %v799 = vsel %vm681, %v662, 0.0
    %v800 = vadd.f32 %v798, %v799
    %v801 = vsel %vm681, %v667, 0.0
    %v802 = vadd.f32 %v800, %v801
    %v803 = vsel %vm681, %v670, 0.0
    %v804 = vadd.f32 %v802, %v803
    %v805 = vsel %vm681, %v675, 0.0
    %v806 = vadd.f32 %v804, %v805
    %v807 = vsel %vm681, %v678, 0.0
    %v808 = vadd.f32 %v806, %v807
    %v809 = vrot.slane %v808, 4
    %v810 = vadd.f32 %v808, %v809
    %v811 = vrot.slane %v810, 2
    %v812 = vadd.f32 %v810, %v811
    %v813 = vrot.slane %v812, 1
    %v814 = vadd.f32 %v812, %v813
    %v815 = vmul.f32 %v814, 0.001953125
    %v816 = vsub.f32 %v427, %v815
    %v817 = vsub.f32 %v430, %v815
    %v818 = vsub.f32 %v435, %v815
    %v819 = vsub.f32 %v438, %v815
    %v820 = vsub.f32 %v443, %v815
    %v821 = vsub.f32 %v446, %v815
    %v822 = vsub.f32 %v451, %v815
    %v823 = vsub.f32 %v454, %v815
    %v824 = vsub.f32 %v459, %v815
    %v825 = vsub.f32 %v462, %v815
    %v826 = vsub.f32 %v467, %v815
    %v827 = vsub.f32 %v470, %v815
    %v828 = vsub.f32 %v475, %v815
    %v829 = vsub.f32 %v478, %v815
    %v830 = vsub.f32 %v483, %v815
    %v831 = vsub.f32 %v486, %v815
    %v832 = vsub.f32 %v491, %v815
    %v833 = vsub.f32 %v494, %v815
    %v834 = vsub.f32 %v499, %v815
    %v835 = vsub.f32 %v502, %v815
    %v836 = vsub.f32 %v507, %v815
    %v837 = vsub.f32 %v510, %v815
    %v838 = vsub.f32 %v515, %v815
    %v839 = vsub.f32 %v518, %v815
    %v840 = vsub.f32 %v523, %v815
    %v841 = vsub.f32 %v526, %v815
    %v842 = vsub.f32 %v531, %v815
    %v843 = vsub.f32 %v534, %v815
    %v844 = vsub.f32 %v539, %v815
    %v845 = vsub.f32 %v542, %v815
    %v846 = vsub.f32 %v547, %v815
    %v847 = vsub.f32 %v550, %v815
    %v848 = vsub.f32 %v555, %v815
    %v849 = vsub.f32 %v558, %v815
    %v850 = vsub.f32 %v563, %v815
    %v851 = vsub.f32 %v566, %v815
    %v852 = vsub.f32 %v571, %v815
    %v853 = vsub.f32 %v574, %v815
    %v854 = vsub.f32 %v579, %v815
    %v855 = vsub.f32 %v582, %v815
    %v856 = vsub.f32 %v587, %v815
    %v857 = vsub.f32 %v590, %v815
    %v858 = vsub.f32 %v595, %v815
    %v859 = vsub.f32 %v598, %v815
    %v860 = vsub.f32 %v603, %v815
    %v861 = vsub.f32 %v606, %v815
    %v862 = vsub.f32 %v611, %v815
    %v863 = vsub.f32 %v614, %v815
    %v864 = vsub.f32 %v619, %v815
    %v865 = vsub.f32 %v622, %v815
    %v866 = vsub.f32 %v627, %v815
    %v867 = vsub.f32 %v630, %v815
    %v868 = vsub.f32 %v635, %v815
    %v869 = vsub.f32 %v638, %v815
    %v870 = vsub.f32 %v643, %v815
    %v871 = vsub.f32 %v646, %v815
    %v872 = vsub.f32 %v651, %v815
    %v873 = vsub.f32 %v654, %v815
    %v874 = vsub.f32 %v659, %v815
    %v875 = vsub.f32 %v662, %v815
    %v876 = vsub.f32 %v667, %v815
    %v877 = vsub.f32 %v670, %v815
    %v878 = vsub.f32 %v675, %v815
    %v879 = vsub.f32 %v678, %v815
    %v880 = vmul.f32 %v816, %v816
    %v881 = vmul.f32 %v817, %v817
    %v882 = vmul.f32 %v818, %v818
    %v883 = vmul.f32 %v819, %v819
    %v884 = vmul.f32 %v820, %v820
    %v885 = vmul.f32 %v821, %v821
    %v886 = vmul.f32 %v822, %v822
    %v887 = vmul.f32 %v823, %v823
    %v888 = vmul.f32 %v824, %v824
    %v889 = vmul.f32 %v825, %v825
    %v890 = vmul.f32 %v826, %v826
    %v891 = vmul.f32 %v827, %v827
    %v892 = vmul.f32 %v828, %v828
    %v893 = vmul.f32 %v829, %v829
    %v894 = vmul.f32 %v830, %v830
    %v895 = vmul.f32 %v831, %v831
    %v896 = vmul.f32 %v832, %v832
    %v897 = vmul.f32 %v833, %v833
    %v898 = vmul.f32 %v834, %v834
    %v899 = vmul.f32 %v835, %v835
    %v900 = vmul.f32 %v836, %v836
    %v901 = vmul.f32 %v837, %v837
    %v902 = vmul.f32 %v838, %v838
    %v903 = vmul.f32 %v839, %v839
    %v904 = vmul.f32 %v840, %v840
    %v905 = vmul.f32 %v841, %v841
    %v906 = vmul.f32 %v842, %v842
    %v907 = vmul.f32 %v843, %v843
    %v908 = vmul.f32 %v844, %v844
    %v909 = vmul.f32 %v845, %v845
    %v910 = vmul.f32 %v846, %v846
    %v911 = vmul.f32 %v847, %v847
    %v912 = vmul.f32 %v848, %v848
    %v913 = vmul.f32 %v849, %v849
    %v914 = vmul.f32 %v850, %v850
    %v915 = vmul.f32 %v851, %v851
    %v916 = vmul.f32 %v852, %v852
    %v917 = vmul.f32 %v853, %v853
    %v918 = vmul.f32 %v854, %v854
    %v919 = vmul.f32 %v855, %v855
    %v920 = vmul.f32 %v856, %v856
    %v921 = vmul.f32 %v857, %v857
    %v922 = vmul.f32 %v858, %v858
    %v923 = vmul.f32 %v859, %v859
    %v924 = vmul.f32 %v860, %v860
    %v925 = vmul.f32 %v861, %v861
    %v926 = vmul.f32 %v862, %v862
    %v927 = vmul.f32 %v863, %v863
    %v928 = vmul.f32 %v864, %v864
    %v929 = vmul.f32 %v865, %v865
    %v930 = vmul.f32 %v866, %v866
    %v931 = vmul.f32 %v867, %v867
    %v932 = vmul.f32 %v868, %v868
    %v933 = vmul.f32 %v869, %v869
    %v934 = vmul.f32 %v870, %v870
    %v935 = vmul.f32 %v871, %v871
    %v936 = vmul.f32 %v872, %v872
    %v937 = vmul.f32 %v873, %v873
    %v938 = vmul.f32 %v874, %v874
    %v939 = vmul.f32 %v875, %v875
    %v940 = vmul.f32 %v876, %v876
    %v941 = vmul.f32 %v877, %v877
    %v942 = vmul.f32 %v878, %v878
    %v943 = vmul.f32 %v879, %v879
    %v944 = vsel %vm681, %v880, 0.0
    %v945 = vsel %vm681, %v881, 0.0
    %v946 = vadd.f32 %v944, %v945
    %v947 = vsel %vm681, %v882, 0.0
    %v948 = vadd.f32 %v946, %v947
    %v949 = vsel %vm681, %v883, 0.0
    %v950 = vadd.f32 %v948, %v949
    %v951 = vsel %vm681, %v884, 0.0
    %v952 = vadd.f32 %v950, %v951
    %v953 = vsel %vm681, %v885, 0.0
    %v954 = vadd.f32 %v952, %v953
    %v955 = vsel %vm681, %v886, 0.0
    %v956 = vadd.f32 %v954, %v955
    %v957 = vsel %vm681, %v887, 0.0
    %v958 = vadd.f32 %v956, %v957
    %v959 = vsel %vm681, %v888, 0.0
    %v960 = vadd.f32 %v958, %v959
    %v961 = vsel %vm681, %v889, 0.0
    %v962 = vadd.f32 %v960, %v961
    %v963 = vsel %vm681, %v890, 0.0
    %v964 = vadd.f32 %v962, %v963
    %v965 = vsel %vm681, %v891, 0.0
    %v966 = vadd.f32 %v964, %v965
    %v967 = vsel %vm681, %v892, 0.0
    %v968 = vadd.f32 %v966, %v967
    %v969 = vsel %vm681, %v893, 0.0
    %v970 = vadd.f32 %v968, %v969
    %v971 = vsel %vm681, %v894, 0.0
    %v972 = vadd.f32 %v970, %v971
    %v973 = vsel %vm681, %v895, 0.0
    %v974 = vadd.f32 %v972, %v973
    %v975 = vsel %vm681, %v896, 0.0
    %v976 = vadd.f32 %v974, %v975
    %v977 = vsel %vm681, %v897, 0.0
    %v978 = vadd.f32 %v976, %v977
    %v979 = vsel %vm681, %v898, 0.0
    %v980 = vadd.f32 %v978, %v979
    %v981 = vsel %vm681, %v899, 0.0
    %v982 = vadd.f32 %v980, %v981
    %v983 = vsel %vm681, %v900, 0.0
    %v984 = vadd.f32 %v982, %v983
    %v985 = vsel %vm681, %v901, 0.0
    %v986 = vadd.f32 %v984, %v985
    %v987 = vsel %vm681, %v902, 0.0
    %v988 = vadd.f32 %v986, %v987
    %v989 = vsel %vm681, %v903, 0.0
    %v990 = vadd.f32 %v988, %v989
    %v991 = vsel %vm681, %v904, 0.0
    %v992 = vadd.f32 %v990, %v991
    %v993 = vsel %vm681, %v905, 0.0
    %v994 = vadd.f32 %v992, %v993
    %v995 = vsel %vm681, %v906, 0.0
    %v996 = vadd.f32 %v994, %v995
    %v997 = vsel %vm681, %v907, 0.0
    %v998 = vadd.f32 %v996, %v997
    %v999 = vsel %vm681, %v908, 0.0
    %v1000 = vadd.f32 %v998, %v999
    %v1001 = vsel %vm681, %v909, 0.0
    %v1002 = vadd.f32 %v1000, %v1001
    %v1003 = vsel %vm681, %v910, 0.0
    %v1004 = vadd.f32 %v1002, %v1003
    %v1005 = vsel %vm681, %v911, 0.0
    %v1006 = vadd.f32 %v1004, %v1005
    %v1007 = vsel %vm681, %v912, 0.0
    %v1008 = vadd.f32 %v1006, %v1007
    %v1009 = vsel %vm681, %v913, 0.0
    %v1010 = vadd.f32 %v1008, %v1009
    %v1011 = vsel %vm681, %v914, 0.0
    %v1012 = vadd.f32 %v1010, %v1011
    %v1013 = vsel %vm681, %v915, 0.0
    %v1014 = vadd.f32 %v1012, %v1013
    %v1015 = vsel %vm681, %v916, 0.0
    %v1016 = vadd.f32 %v1014, %v1015
    %v1017 = vsel %vm681, %v917, 0.0
    %v1018 = vadd.f32 %v1016, %v1017
    %v1019 = vsel %vm681, %v918, 0.0
    %v1020 = vadd.f32 %v1018, %v1019
    %v1021 = vsel %vm681, %v919, 0.0
    %v1022 = vadd.f32 %v1020, %v1021
    %v1023 = vsel %vm681, %v920, 0.0
    %v1024 = vadd.f32 %v1022, %v1023
    %v1025 = vsel %vm681, %v921, 0.0
    %v1026 = vadd.f32 %v1024, %v1025
    %v1027 = vsel %vm681, %v922, 0.0
    %v1028 = vadd.f32 %v1026, %v1027
    %v1029 = vsel %vm681, %v923, 0.0
    %v1030 = vadd.f32 %v1028, %v1029
    %v1031 = vsel %vm681, %v924, 0.0
    %v1032 = vadd.f32 %v1030, %v1031
    %v1033 = vsel %vm681, %v925, 0.0
    %v1034 = vadd.f32 %v1032, %v1033
    %v1035 = vsel %vm681, %v926, 0.0
    %v1036 = vadd.f32 %v1034, %v1035
    %v1037 = vsel %vm681, %v927, 0.0
    %v1038 = vadd.f32 %v1036, %v1037
    %v1039 = vsel %vm681, %v928, 0.0
    %v1040 = vadd.f32 %v1038, %v1039
    %v1041 = vsel %vm681, %v929, 0.0
    %v1042 = vadd.f32 %v1040, %v1041
    %v1043 = vsel %vm681, %v930, 0.0
    %v1044 = vadd.f32 %v1042, %v1043
    %v1045 = vsel %vm681, %v931, 0.0
    %v1046 = vadd.f32 %v1044, %v1045
    %v1047 = vsel %vm681, %v932, 0.0
    %v1048 = vadd.f32 %v1046, %v1047
    %v1049 = vsel %vm681, %v933, 0.0
    %v1050 = vadd.f32 %v1048, %v1049
    %v1051 = vsel %vm681, %v934, 0.0
    %v1052 = vadd.f32 %v1050, %v1051
    %v1053 = vsel %vm681, %v935, 0.0
    %v1054 = vadd.f32 %v1052, %v1053
    %v1055 = vsel %vm681, %v936, 0.0
    %v1056 = vadd.f32 %v1054, %v1055
    %v1057 = vsel %vm681, %v937, 0.0
    %v1058 = vadd.f32 %v1056, %v1057
    %v1059 = vsel %vm681, %v938, 0.0
    %v1060 = vadd.f32 %v1058, %v1059
    %v1061 = vsel %vm681, %v939, 0.0
    %v1062 = vadd.f32 %v1060, %v1061
    %v1063 = vsel %vm681, %v940, 0.0
    %v1064 = vadd.f32 %v1062, %v1063
    %v1065 = vsel %vm681, %v941, 0.0
    %v1066 = vadd.f32 %v1064, %v1065
    %v1067 = vsel %vm681, %v942, 0.0
    %v1068 = vadd.f32 %v1066, %v1067
    %v1069 = vsel %vm681, %v943, 0.0
    %v1070 = vadd.f32 %v1068, %v1069
    %v1071 = vrot.slane %v1070, 4
    %v1072 = vadd.f32 %v1070, %v1071
    %v1073 = vrot.slane %v1072, 2
    %v1074 = vadd.f32 %v1072, %v1073
    %v1075 = vrot.slane %v1074, 1
    %v1076 = vadd.f32 %v1074, %v1075
    %v1077 = vmul.f32 %v1076, 0.001953125
    %v1078 = vld [vmem:[%s3] sm:$0x1]
    %v1079 = vadd.f32 %v1077, 1e-05
    %v1080 = vrsqrt.pop %v1079
    %v1081 = vmul.f32 %v1078, %v1080
    %v1082 = vlaneseq
    %v1083 = vshrl.u32 %v1082, 7
    %v1084 = vsub.s32 0, %v1083
    %v1085 = vrot.slane %v1081, %v1084
    %v1086 = vmul.f32 %v816, %v1085
    %v1087 = vmul.f32 %v817, %v1085
    %v1088 = vmul.f32 %v818, %v1085
    %v1089 = vmul.f32 %v819, %v1085
    %v1090 = vmul.f32 %v820, %v1085
    %v1091 = vmul.f32 %v821, %v1085
    %v1092 = vmul.f32 %v822, %v1085
    %v1093 = vmul.f32 %v823, %v1085
    %v1094 = vmul.f32 %v824, %v1085
    %v1095 = vmul.f32 %v825, %v1085
    %v1096 = vmul.f32 %v826, %v1085
    %v1097 = vmul.f32 %v827, %v1085
    %v1098 = vmul.f32 %v828, %v1085
    %v1099 = vmul.f32 %v829, %v1085
    %v1100 = vmul.f32 %v830, %v1085
    %v1101 = vmul.f32 %v831, %v1085
    %v1102 = vmul.f32 %v832, %v1085
    %v1103 = vmul.f32 %v833, %v1085
    %v1104 = vmul.f32 %v834, %v1085
    %v1105 = vmul.f32 %v835, %v1085
    %v1106 = vmul.f32 %v836, %v1085
    %v1107 = vmul.f32 %v837, %v1085
    %v1108 = vmul.f32 %v838, %v1085
    %v1109 = vmul.f32 %v839, %v1085
    %v1110 = vmul.f32 %v840, %v1085
    %v1111 = vmul.f32 %v841, %v1085
    %v1112 = vmul.f32 %v842, %v1085
    %v1113 = vmul.f32 %v843, %v1085
    %v1114 = vmul.f32 %v844, %v1085
    %v1115 = vmul.f32 %v845, %v1085
    %v1116 = vmul.f32 %v846, %v1085
    %v1117 = vmul.f32 %v847, %v1085
    %v1118 = vmul.f32 %v848, %v1085
    %v1119 = vmul.f32 %v849, %v1085
    %v1120 = vmul.f32 %v850, %v1085
    %v1121 = vmul.f32 %v851, %v1085
    %v1122 = vmul.f32 %v852, %v1085
    %v1123 = vmul.f32 %v853, %v1085
    %v1124 = vmul.f32 %v854, %v1085
    %v1125 = vmul.f32 %v855, %v1085
    %v1126 = vmul.f32 %v856, %v1085
    %v1127 = vmul.f32 %v857, %v1085
    %v1128 = vmul.f32 %v858, %v1085
    %v1129 = vmul.f32 %v859, %v1085
    %v1130 = vmul.f32 %v860, %v1085
    %v1131 = vmul.f32 %v861, %v1085
    %v1132 = vmul.f32 %v862, %v1085
    %v1133 = vmul.f32 %v863, %v1085
    %v1134 = vmul.f32 %v864, %v1085
    %v1135 = vmul.f32 %v865, %v1085
    %v1136 = vmul.f32 %v866, %v1085
    %v1137 = vmul.f32 %v867, %v1085
    %v1138 = vmul.f32 %v868, %v1085
    %v1139 = vmul.f32 %v869, %v1085
    %v1140 = vmul.f32 %v870, %v1085
    %v1141 = vmul.f32 %v871, %v1085
    %v1142 = vmul.f32 %v872, %v1085
    %v1143 = vmul.f32 %v873, %v1085
    %v1144 = vmul.f32 %v874, %v1085
    %v1145 = vmul.f32 %v875, %v1085
    %v1146 = vmul.f32 %v876, %v1085
    %v1147 = vmul.f32 %v877, %v1085
    %v1148 = vmul.f32 %v878, %v1085
    %v1149 = vmul.f32 %v879, %v1085
    %v1150 = vld [vmem:[%s4] sm:$0x1]
    %v1151 = vlaneseq
    %v1152 = vshrl.u32 %v1151, 7
    %v1153 = vsub.s32 0, %v1152
    %v1154 = vrot.slane %v1150, %v1153
    %v1155 = vadd.f32 %v1086, %v1154
    %v1156 = vadd.f32 %v1087, %v1154
    %v1157 = vadd.f32 %v1088, %v1154
    %v1158 = vadd.f32 %v1089, %v1154
    %v1159 = vadd.f32 %v1090, %v1154
    %v1160 = vadd.f32 %v1091, %v1154
    %v1161 = vadd.f32 %v1092, %v1154
    %v1162 = vadd.f32 %v1093, %v1154
    %v1163 = vadd.f32 %v1094, %v1154
    %v1164 = vadd.f32 %v1095, %v1154
    %v1165 = vadd.f32 %v1096, %v1154
    %v1166 = vadd.f32 %v1097, %v1154
    %v1167 = vadd.f32 %v1098, %v1154
    %v1168 = vadd.f32 %v1099, %v1154
    %v1169 = vadd.f32 %v1100, %v1154
    %v1170 = vadd.f32 %v1101, %v1154
    %v1171 = vadd.f32 %v1102, %v1154
    %v1172 = vadd.f32 %v1103, %v1154
    %v1173 = vadd.f32 %v1104, %v1154
    %v1174 = vadd.f32 %v1105, %v1154
    %v1175 = vadd.f32 %v1106, %v1154
    %v1176 = vadd.f32 %v1107, %v1154
    %v1177 = vadd.f32 %v1108, %v1154
    %v1178 = vadd.f32 %v1109, %v1154
    %v1179 = vadd.f32 %v1110, %v1154
    %v1180 = vadd.f32 %v1111, %v1154
    %v1181 = vadd.f32 %v1112, %v1154
    %v1182 = vadd.f32 %v1113, %v1154
    %v1183 = vadd.f32 %v1114, %v1154
    %v1184 = vadd.f32 %v1115, %v1154
    %v1185 = vadd.f32 %v1116, %v1154
    %v1186 = vadd.f32 %v1117, %v1154
    %v1187 = vadd.f32 %v1118, %v1154
    %v1188 = vadd.f32 %v1119, %v1154
    %v1189 = vadd.f32 %v1120, %v1154
    %v1190 = vadd.f32 %v1121, %v1154
    %v1191 = vadd.f32 %v1122, %v1154
    %v1192 = vadd.f32 %v1123, %v1154
    %v1193 = vadd.f32 %v1124, %v1154
    %v1194 = vadd.f32 %v1125, %v1154
    %v1195 = vadd.f32 %v1126, %v1154
    %v1196 = vadd.f32 %v1127, %v1154
    %v1197 = vadd.f32 %v1128, %v1154
    %v1198 = vadd.f32 %v1129, %v1154
    %v1199 = vadd.f32 %v1130, %v1154
    %v1200 = vadd.f32 %v1131, %v1154
    %v1201 = vadd.f32 %v1132, %v1154
    %v1202 = vadd.f32 %v1133, %v1154
    %v1203 = vadd.f32 %v1134, %v1154
    %v1204 = vadd.f32 %v1135, %v1154
    %v1205 = vadd.f32 %v1136, %v1154
    %v1206 = vadd.f32 %v1137, %v1154
    %v1207 = vadd.f32 %v1138, %v1154
    %v1208 = vadd.f32 %v1139, %v1154
    %v1209 = vadd.f32 %v1140, %v1154
    %v1210 = vadd.f32 %v1141, %v1154
    %v1211 = vadd.f32 %v1142, %v1154
    %v1212 = vadd.f32 %v1143, %v1154
    %v1213 = vadd.f32 %v1144, %v1154
    %v1214 = vadd.f32 %v1145, %v1154
    %v1215 = vadd.f32 %v1146, %v1154
    %v1216 = vadd.f32 %v1147, %v1154
    %v1217 = vadd.f32 %v1148, %v1154
    %v1218 = vadd.f32 %v1149, %v1154
    %v1219 = vmax.f32 %v1155, 0.0
    %v1220 = vmax.f32 %v1156, 0.0
    %v1221 = vmax.f32 %v1157, 0.0
    %v1222 = vmax.f32 %v1158, 0.0
    %v1223 = vmax.f32 %v1159, 0.0
    %v1224 = vmax.f32 %v1160, 0.0
    %v1225 = vmax.f32 %v1161, 0.0
    %v1226 = vmax.f32 %v1162, 0.0
    %v1227 = vmax.f32 %v1163, 0.0
    %v1228 = vmax.f32 %v1164, 0.0
    %v1229 = vmax.f32 %v1165, 0.0
    %v1230 = vmax.f32 %v1166, 0.0
    %v1231 = vmax.f32 %v1167, 0.0
    %v1232 = vmax.f32 %v1168, 0.0
    %v1233 = vmax.f32 %v1169, 0.0
    %v1234 = vmax.f32 %v1170, 0.0
    %v1235 = vmax.f32 %v1171, 0.0
    %v1236 = vmax.f32 %v1172, 0.0
    %v1237 = vmax.f32 %v1173, 0.0
    %v1238 = vmax.f32 %v1174, 0.0
    %v1239 = vmax.f32 %v1175, 0.0
    %v1240 = vmax.f32 %v1176, 0.0
    %v1241 = vmax.f32 %v1177, 0.0
    %v1242 = vmax.f32 %v1178, 0.0
    %v1243 = vmax.f32 %v1179, 0.0
    %v1244 = vmax.f32 %v1180, 0.0
    %v1245 = vmax.f32 %v1181, 0.0
    %v1246 = vmax.f32 %v1182, 0.0
    %v1247 = vmax.f32 %v1183, 0.0
    %v1248 = vmax.f32 %v1184, 0.0
    %v1249 = vmax.f32 %v1185, 0.0
    %v1250 = vmax.f32 %v1186, 0.0
    %v1251 = vmax.f32 %v1187, 0.0
    %v1252 = vmax.f32 %v1188, 0.0
    %v1253 = vmax.f32 %v1189, 0.0
    %v1254 = vmax.f32 %v1190, 0.0
    %v1255 = vmax.f32 %v1191, 0.0
    %v1256 = vmax.f32 %v1192, 0.0
    %v1257 = vmax.f32 %v1193, 0.0
    %v1258 = vmax.f32 %v1194, 0.0
    %v1259 = vmax.f32 %v1195, 0.0
    %v1260 = vmax.f32 %v1196, 0.0
    %v1261 = vmax.f32 %v1197, 0.0
    %v1262 = vmax.f32 %v1198, 0.0
    %v1263 = vmax.f32 %v1199, 0.0
    %v1264 = vmax.f32 %v1200, 0.0
    %v1265 = vmax.f32 %v1201, 0.0
    %v1266 = vmax.f32 %v1202, 0.0
    %v1267 = vmax.f32 %v1203, 0.0
    %v1268 = vmax.f32 %v1204, 0.0
    %v1269 = vmax.f32 %v1205, 0.0
    %v1270 = vmax.f32 %v1206, 0.0
    %v1271 = vmax.f32 %v1207, 0.0
    %v1272 = vmax.f32 %v1208, 0.0
    %v1273 = vmax.f32 %v1209, 0.0
    %v1274 = vmax.f32 %v1210, 0.0
    %v1275 = vmax.f32 %v1211, 0.0
    %v1276 = vmax.f32 %v1212, 0.0
    %v1277 = vmax.f32 %v1213, 0.0
    %v1278 = vmax.f32 %v1214, 0.0
    %v1279 = vmax.f32 %v1215, 0.0
    %v1280 = vmax.f32 %v1216, 0.0
    %v1281 = vmax.f32 %v1217, 0.0
    %v1282 = vmax.f32 %v1218, 0.0
    %v1283 = vrot.slane %v1219, 1
    %v1284 = vrot.slane %v1220, 1
    %v1285 = vrot.slane %v1221, 1
    %v1286 = vrot.slane %v1222, 1
    %v1287 = vrot.slane %v1223, 1
    %v1288 = vrot.slane %v1224, 1
    %v1289 = vrot.slane %v1225, 1
    %v1290 = vrot.slane %v1226, 1
    %v1291 = vrot.slane %v1227, 1
    %v1292 = vrot.slane %v1228, 1
    %v1293 = vrot.slane %v1229, 1
    %v1294 = vrot.slane %v1230, 1
    %v1295 = vrot.slane %v1231, 1
    %v1296 = vrot.slane %v1232, 1
    %v1297 = vrot.slane %v1233, 1
    %v1298 = vrot.slane %v1234, 1
    %v1299 = vrot.slane %v1235, 1
    %v1300 = vrot.slane %v1236, 1
    %v1301 = vrot.slane %v1237, 1
    %v1302 = vrot.slane %v1238, 1
    %v1303 = vrot.slane %v1239, 1
    %v1304 = vrot.slane %v1240, 1
    %v1305 = vrot.slane %v1241, 1
    %v1306 = vrot.slane %v1242, 1
    %v1307 = vrot.slane %v1243, 1
    %v1308 = vrot.slane %v1244, 1
    %v1309 = vrot.slane %v1245, 1
    %v1310 = vrot.slane %v1246, 1
    %v1311 = vrot.slane %v1247, 1
    %v1312 = vrot.slane %v1248, 1
    %v1313 = vrot.slane %v1249, 1
    %v1314 = vrot.slane %v1250, 1
    %v1315 = vrot.slane %v1251, 1
    %v1316 = vrot.slane %v1252, 1
    %v1317 = vrot.slane %v1253, 1
    %v1318 = vrot.slane %v1254, 1
    %v1319 = vrot.slane %v1255, 1
    %v1320 = vrot.slane %v1256, 1
    %v1321 = vrot.slane %v1257, 1
    %v1322 = vrot.slane %v1258, 1
    %v1323 = vrot.slane %v1259, 1
    %v1324 = vrot.slane %v1260, 1
    %v1325 = vrot.slane %v1261, 1
    %v1326 = vrot.slane %v1262, 1
    %v1327 = vrot.slane %v1263, 1
    %v1328 = vrot.slane %v1264, 1
    %v1329 = vrot.slane %v1265, 1
    %v1330 = vrot.slane %v1266, 1
    %v1331 = vrot.slane %v1267, 1
    %v1332 = vrot.slane %v1268, 1
    %v1333 = vrot.slane %v1269, 1
    %v1334 = vrot.slane %v1270, 1
    %v1335 = vrot.slane %v1271, 1
    %v1336 = vrot.slane %v1272, 1
    %v1337 = vrot.slane %v1273, 1
    %v1338 = vrot.slane %v1274, 1
    %v1339 = vrot.slane %v1275, 1
    %v1340 = vrot.slane %v1276, 1
    %v1341 = vrot.slane %v1277, 1
    %v1342 = vrot.slane %v1278, 1
    %v1343 = vrot.slane %v1279, 1
    %v1344 = vrot.slane %v1280, 1
    %v1345 = vrot.slane %v1281, 1
    %v1346 = vrot.slane %v1282, 1
    %v1347 = vlaneseq
    %v1348 = vshrl.u32 %v1347, 7
    %vm1349 = vcmp.lt.s32.totalorder %v1348, 7
    %v1350 = vsel %vm1349, %v1345, %v1346
    %v1351 = vsel %vm1349, %v1344, %v1345
    %v1352 = vsel %vm1349, %v1343, %v1344
    %v1353 = vsel %vm1349, %v1342, %v1343
    %v1354 = vsel %vm1349, %v1341, %v1342
    %v1355 = vsel %vm1349, %v1340, %v1341
    %v1356 = vsel %vm1349, %v1339, %v1340
    %v1357 = vsel %vm1349, %v1338, %v1339
    %v1358 = vsel %vm1349, %v1337, %v1338
    %v1359 = vsel %vm1349, %v1336, %v1337
    %v1360 = vsel %vm1349, %v1335, %v1336
    %v1361 = vsel %vm1349, %v1334, %v1335
    %v1362 = vsel %vm1349, %v1333, %v1334
    %v1363 = vsel %vm1349, %v1332, %v1333
    %v1364 = vsel %vm1349, %v1331, %v1332
    %v1365 = vsel %vm1349, %v1330, %v1331
    %v1366 = vsel %vm1349, %v1329, %v1330
    %v1367 = vsel %vm1349, %v1328, %v1329
    %v1368 = vsel %vm1349, %v1327, %v1328
    %v1369 = vsel %vm1349, %v1326, %v1327
    %v1370 = vsel %vm1349, %v1325, %v1326
    %v1371 = vsel %vm1349, %v1324, %v1325
    %v1372 = vsel %vm1349, %v1323, %v1324
    %v1373 = vsel %vm1349, %v1322, %v1323
    %v1374 = vsel %vm1349, %v1321, %v1322
    %v1375 = vsel %vm1349, %v1320, %v1321
    %v1376 = vsel %vm1349, %v1319, %v1320
    %v1377 = vsel %vm1349, %v1318, %v1319
    %v1378 = vsel %vm1349, %v1317, %v1318
    %v1379 = vsel %vm1349, %v1316, %v1317
    %v1380 = vsel %vm1349, %v1315, %v1316
    %v1381 = vsel %vm1349, %v1314, %v1315
    %v1382 = vsel %vm1349, %v1313, %v1314
    %v1383 = vsel %vm1349, %v1312, %v1313
    %v1384 = vsel %vm1349, %v1311, %v1312
    %v1385 = vsel %vm1349, %v1310, %v1311
    %v1386 = vsel %vm1349, %v1309, %v1310
    %v1387 = vsel %vm1349, %v1308, %v1309
    %v1388 = vsel %vm1349, %v1307, %v1308
    %v1389 = vsel %vm1349, %v1306, %v1307
    %v1390 = vsel %vm1349, %v1305, %v1306
    %v1391 = vsel %vm1349, %v1304, %v1305
    %v1392 = vsel %vm1349, %v1303, %v1304
    %v1393 = vsel %vm1349, %v1302, %v1303
    %v1394 = vsel %vm1349, %v1301, %v1302
    %v1395 = vsel %vm1349, %v1300, %v1301
    %v1396 = vsel %vm1349, %v1299, %v1300
    %v1397 = vsel %vm1349, %v1298, %v1299
    %v1398 = vsel %vm1349, %v1297, %v1298
    %v1399 = vsel %vm1349, %v1296, %v1297
    %v1400 = vsel %vm1349, %v1295, %v1296
    %v1401 = vsel %vm1349, %v1294, %v1295
    %v1402 = vsel %vm1349, %v1293, %v1294
    %v1403 = vsel %vm1349, %v1292, %v1293
    %v1404 = vsel %vm1349, %v1291, %v1292
    %v1405 = vsel %vm1349, %v1290, %v1291
    %v1406 = vsel %vm1349, %v1289, %v1290
    %v1407 = vsel %vm1349, %v1288, %v1289
    %v1408 = vsel %vm1349, %v1287, %v1288
    %v1409 = vsel %vm1349, %v1286, %v1287
    %v1410 = vsel %vm1349, %v1285, %v1286
    %v1411 = vsel %vm1349, %v1284, %v1285
    %v1412 = vsel %vm1349, %v1283, %v1284
    %v1413 = vsel %vm1349, %v1346, %v1283
    %v1414 = vmax.f32 %v1219, %v1412
    %v1415 = vmax.f32 %v1220, %v1411
    %v1416 = vmax.f32 %v1221, %v1410
    %v1417 = vmax.f32 %v1222, %v1409
    %v1418 = vmax.f32 %v1223, %v1408
    %v1419 = vmax.f32 %v1224, %v1407
    %v1420 = vmax.f32 %v1225, %v1406
    %v1421 = vmax.f32 %v1226, %v1405
    %v1422 = vmax.f32 %v1227, %v1404
    %v1423 = vmax.f32 %v1228, %v1403
    %v1424 = vmax.f32 %v1229, %v1402
    %v1425 = vmax.f32 %v1230, %v1401
    %v1426 = vmax.f32 %v1231, %v1400
    %v1427 = vmax.f32 %v1232, %v1399
    %v1428 = vmax.f32 %v1233, %v1398
    %v1429 = vmax.f32 %v1234, %v1397
    %v1430 = vmax.f32 %v1235, %v1396
    %v1431 = vmax.f32 %v1236, %v1395
    %v1432 = vmax.f32 %v1237, %v1394
    %v1433 = vmax.f32 %v1238, %v1393
    %v1434 = vmax.f32 %v1239, %v1392
    %v1435 = vmax.f32 %v1240, %v1391
    %v1436 = vmax.f32 %v1241, %v1390
    %v1437 = vmax.f32 %v1242, %v1389
    %v1438 = vmax.f32 %v1243, %v1388
    %v1439 = vmax.f32 %v1244, %v1387
    %v1440 = vmax.f32 %v1245, %v1386
    %v1441 = vmax.f32 %v1246, %v1385
    %v1442 = vmax.f32 %v1247, %v1384
    %v1443 = vmax.f32 %v1248, %v1383
    %v1444 = vmax.f32 %v1249, %v1382
    %v1445 = vmax.f32 %v1250, %v1381
    %v1446 = vmax.f32 %v1251, %v1380
    %v1447 = vmax.f32 %v1252, %v1379
    %v1448 = vmax.f32 %v1253, %v1378
    %v1449 = vmax.f32 %v1254, %v1377
    %v1450 = vmax.f32 %v1255, %v1376
    %v1451 = vmax.f32 %v1256, %v1375
    %v1452 = vmax.f32 %v1257, %v1374
    %v1453 = vmax.f32 %v1258, %v1373
    %v1454 = vmax.f32 %v1259, %v1372
    %v1455 = vmax.f32 %v1260, %v1371
    %v1456 = vmax.f32 %v1261, %v1370
    %v1457 = vmax.f32 %v1262, %v1369
    %v1458 = vmax.f32 %v1263, %v1368
    %v1459 = vmax.f32 %v1264, %v1367
    %v1460 = vmax.f32 %v1265, %v1366
    %v1461 = vmax.f32 %v1266, %v1365
    %v1462 = vmax.f32 %v1267, %v1364
    %v1463 = vmax.f32 %v1268, %v1363
    %v1464 = vmax.f32 %v1269, %v1362
    %v1465 = vmax.f32 %v1270, %v1361
    %v1466 = vmax.f32 %v1271, %v1360
    %v1467 = vmax.f32 %v1272, %v1359
    %v1468 = vmax.f32 %v1273, %v1358
    %v1469 = vmax.f32 %v1274, %v1357
    %v1470 = vmax.f32 %v1275, %v1356
    %v1471 = vmax.f32 %v1276, %v1355
    %v1472 = vmax.f32 %v1277, %v1354
    %v1473 = vmax.f32 %v1278, %v1353
    %v1474 = vmax.f32 %v1279, %v1352
    %v1475 = vmax.f32 %v1280, %v1351
    %v1476 = vmax.f32 %v1281, %v1350
    %v1477 = vmax.f32 %v1282, %v1413
    %v1478 = vmax.f32 %v1414, %v1221
    %v1479 = vmax.f32 %v1415, %v1222
    %v1480 = vmax.f32 %v1416, %v1223
    %v1481 = vmax.f32 %v1417, %v1224
    %v1482 = vmax.f32 %v1418, %v1225
    %v1483 = vmax.f32 %v1419, %v1226
    %v1484 = vmax.f32 %v1420, %v1227
    %v1485 = vmax.f32 %v1421, %v1228
    %v1486 = vmax.f32 %v1422, %v1229
    %v1487 = vmax.f32 %v1423, %v1230
    %v1488 = vmax.f32 %v1424, %v1231
    %v1489 = vmax.f32 %v1425, %v1232
    %v1490 = vmax.f32 %v1426, %v1233
    %v1491 = vmax.f32 %v1427, %v1234
    %v1492 = vmax.f32 %v1428, %v1235
    %v1493 = vmax.f32 %v1429, %v1236
    %v1494 = vmax.f32 %v1430, %v1237
    %v1495 = vmax.f32 %v1431, %v1238
    %v1496 = vmax.f32 %v1432, %v1239
    %v1497 = vmax.f32 %v1433, %v1240
    %v1498 = vmax.f32 %v1434, %v1241
    %v1499 = vmax.f32 %v1435, %v1242
    %v1500 = vmax.f32 %v1436, %v1243
    %v1501 = vmax.f32 %v1437, %v1244
    %v1502 = vmax.f32 %v1438, %v1245
    %v1503 = vmax.f32 %v1439, %v1246
    %v1504 = vmax.f32 %v1440, %v1247
    %v1505 = vmax.f32 %v1441, %v1248
    %v1506 = vmax.f32 %v1442, %v1249
    %v1507 = vmax.f32 %v1443, %v1250
    %v1508 = vmax.f32 %v1444, %v1251
    %v1509 = vmax.f32 %v1445, %v1252
    %v1510 = vmax.f32 %v1446, %v1253
    %v1511 = vmax.f32 %v1447, %v1254
    %v1512 = vmax.f32 %v1448, %v1255
    %v1513 = vmax.f32 %v1449, %v1256
    %v1514 = vmax.f32 %v1450, %v1257
    %v1515 = vmax.f32 %v1451, %v1258
    %v1516 = vmax.f32 %v1452, %v1259
    %v1517 = vmax.f32 %v1453, %v1260
    %v1518 = vmax.f32 %v1454, %v1261
    %v1519 = vmax.f32 %v1455, %v1262
    %v1520 = vmax.f32 %v1456, %v1263
    %v1521 = vmax.f32 %v1457, %v1264
    %v1522 = vmax.f32 %v1458, %v1265
    %v1523 = vmax.f32 %v1459, %v1266
    %v1524 = vmax.f32 %v1460, %v1267
    %v1525 = vmax.f32 %v1461, %v1268
    %v1526 = vmax.f32 %v1462, %v1269
    %v1527 = vmax.f32 %v1463, %v1270
    %v1528 = vmax.f32 %v1464, %v1271
    %v1529 = vmax.f32 %v1465, %v1272
    %v1530 = vmax.f32 %v1466, %v1273
    %v1531 = vmax.f32 %v1467, %v1274
    %v1532 = vmax.f32 %v1468, %v1275
    %v1533 = vmax.f32 %v1469, %v1276
    %v1534 = vmax.f32 %v1470, %v1277
    %v1535 = vmax.f32 %v1471, %v1278
    %v1536 = vmax.f32 %v1472, %v1279
    %v1537 = vmax.f32 %v1473, %v1280
    %v1538 = vmax.f32 %v1474, %v1281
    %v1539 = vmax.f32 %v1475, %v1282
    %v1540 = vmax.f32 %v1476, %v1219
    %v1541 = vmax.f32 %v1477, %v1220
    %v1542 = vmax.f32 %v1478, %v1410
    %v1543 = vmax.f32 %v1479, %v1409
    %v1544 = vmax.f32 %v1480, %v1408
    %v1545 = vmax.f32 %v1481, %v1407
    %v1546 = vmax.f32 %v1482, %v1406
    %v1547 = vmax.f32 %v1483, %v1405
    %v1548 = vmax.f32 %v1484, %v1404
    %v1549 = vmax.f32 %v1485, %v1403
    %v1550 = vmax.f32 %v1486, %v1402
    %v1551 = vmax.f32 %v1487, %v1401
    %v1552 = vmax.f32 %v1488, %v1400
    %v1553 = vmax.f32 %v1489, %v1399
    %v1554 = vmax.f32 %v1490, %v1398
    %v1555 = vmax.f32 %v1491, %v1397
    %v1556 = vmax.f32 %v1492, %v1396
    %v1557 = vmax.f32 %v1493, %v1395
    %v1558 = vmax.f32 %v1494, %v1394
    %v1559 = vmax.f32 %v1495, %v1393
    %v1560 = vmax.f32 %v1496, %v1392
    %v1561 = vmax.f32 %v1497, %v1391
    %v1562 = vmax.f32 %v1498, %v1390
    %v1563 = vmax.f32 %v1499, %v1389
    %v1564 = vmax.f32 %v1500, %v1388
    %v1565 = vmax.f32 %v1501, %v1387
    %v1566 = vmax.f32 %v1502, %v1386
    %v1567 = vmax.f32 %v1503, %v1385
    %v1568 = vmax.f32 %v1504, %v1384
    %v1569 = vmax.f32 %v1505, %v1383
    %v1570 = vmax.f32 %v1506, %v1382
    %v1571 = vmax.f32 %v1507, %v1381
    %v1572 = vmax.f32 %v1508, %v1380
    %v1573 = vmax.f32 %v1509, %v1379
    %v1574 = vmax.f32 %v1510, %v1378
    %v1575 = vmax.f32 %v1511, %v1377
    %v1576 = vmax.f32 %v1512, %v1376
    %v1577 = vmax.f32 %v1513, %v1375
    %v1578 = vmax.f32 %v1514, %v1374
    %v1579 = vmax.f32 %v1515, %v1373
    %v1580 = vmax.f32 %v1516, %v1372
    %v1581 = vmax.f32 %v1517, %v1371
    %v1582 = vmax.f32 %v1518, %v1370
    %v1583 = vmax.f32 %v1519, %v1369
    %v1584 = vmax.f32 %v1520, %v1368
    %v1585 = vmax.f32 %v1521, %v1367
    %v1586 = vmax.f32 %v1522, %v1366
    %v1587 = vmax.f32 %v1523, %v1365
    %v1588 = vmax.f32 %v1524, %v1364
    %v1589 = vmax.f32 %v1525, %v1363
    %v1590 = vmax.f32 %v1526, %v1362
    %v1591 = vmax.f32 %v1527, %v1361
    %v1592 = vmax.f32 %v1528, %v1360
    %v1593 = vmax.f32 %v1529, %v1359
    %v1594 = vmax.f32 %v1530, %v1358
    %v1595 = vmax.f32 %v1531, %v1357
    %v1596 = vmax.f32 %v1532, %v1356
    %v1597 = vmax.f32 %v1533, %v1355
    %v1598 = vmax.f32 %v1534, %v1354
    %v1599 = vmax.f32 %v1535, %v1353
    %v1600 = vmax.f32 %v1536, %v1352
    %v1601 = vmax.f32 %v1537, %v1351
    %v1602 = vmax.f32 %v1538, %v1350
    %v1603 = vmax.f32 %v1539, %v1413
    %v1604 = vmax.f32 %v1540, %v1412
    %v1605 = vmax.f32 %v1541, %v1411
    %v1606 = vld [vmem:[%s8] sm:$0xff]
    %v1607 = vld [vmem:[%s8 + $0x8] sm:$0xff]
    %v1608 = vld [vmem:[%s8 + $0x10] sm:$0xff]
    %v1609 = vld [vmem:[%s8 + $0x18] sm:$0xff]
    %v1610 = vld [vmem:[%s8 + $0x20] sm:$0xff]
    %v1611 = vld [vmem:[%s8 + $0x28] sm:$0xff]
    %v1612 = vld [vmem:[%s8 + $0x30] sm:$0xff]
    %v1613 = vld [vmem:[%s8 + $0x38] sm:$0xff]
    %v1614 = vld [vmem:[%s8 + $0x40] sm:$0xff]
    %v1615 = vld [vmem:[%s8 + $0x48] sm:$0xff]
    %v1616 = vld [vmem:[%s8 + $0x50] sm:$0xff]
    %v1617 = vld [vmem:[%s8 + $0x58] sm:$0xff]
    %v1618 = vld [vmem:[%s8 + $0x60] sm:$0xff]
    %v1619 = vld [vmem:[%s8 + $0x68] sm:$0xff]
    %v1620 = vld [vmem:[%s8 + $0x70] sm:$0xff]
    %v1621 = vld [vmem:[%s8 + $0x78] sm:$0xff]
    %v1622 = vld [vmem:[%s8 + $0x80] sm:$0xff]
    %v1623 = vld [vmem:[%s8 + $0x88] sm:$0xff]
    %v1624 = vld [vmem:[%s8 + $0x90] sm:$0xff]
    %v1625 = vld [vmem:[%s8 + $0x98] sm:$0xff]
    %v1626 = vld [vmem:[%s8 + $0xa0] sm:$0xff]
    %v1627 = vld [vmem:[%s8 + $0xa8] sm:$0xff]
    %v1628 = vld [vmem:[%s8 + $0xb0] sm:$0xff]
    %v1629 = vld [vmem:[%s8 + $0xb8] sm:$0xff]
    %v1630 = vld [vmem:[%s8 + $0xc0] sm:$0xff]
    %v1631 = vld [vmem:[%s8 + $0xc8] sm:$0xff]
    %v1632 = vld [vmem:[%s8 + $0xd0] sm:$0xff]
    %v1633 = vld [vmem:[%s8 + $0xd8] sm:$0xff]
    %v1634 = vld [vmem:[%s8 + $0xe0] sm:$0xff]
    %v1635 = vld [vmem:[%s8 + $0xe8] sm:$0xff]
    %v1636 = vld [vmem:[%s8 + $0xf0] sm:$0xff]
    %v1637 = vld [vmem:[%s8 + $0xf8] sm:$0xff]
    %v1638 = vld [vmem:[%s8 + $0x100] sm:$0xff]
    %v1639 = vld [vmem:[%s8 + $0x108] sm:$0xff]
    %v1640 = vld [vmem:[%s8 + $0x110] sm:$0xff]
    %v1641 = vld [vmem:[%s8 + $0x118] sm:$0xff]
    %v1642 = vld [vmem:[%s8 + $0x120] sm:$0xff]
    %v1643 = vld [vmem:[%s8 + $0x128] sm:$0xff]
    %v1644 = vld [vmem:[%s8 + $0x130] sm:$0xff]
    %v1645 = vld [vmem:[%s8 + $0x138] sm:$0xff]
    %v1646 = vld [vmem:[%s8 + $0x140] sm:$0xff]
    %v1647 = vld [vmem:[%s8 + $0x148] sm:$0xff]
    %v1648 = vld [vmem:[%s8 + $0x150] sm:$0xff]
    %v1649 = vld [vmem:[%s8 + $0x158] sm:$0xff]
    %v1650 = vld [vmem:[%s8 + $0x160] sm:$0xff]
    %v1651 = vld [vmem:[%s8 + $0x168] sm:$0xff]
    %v1652 = vld [vmem:[%s8 + $0x170] sm:$0xff]
    %v1653 = vld [vmem:[%s8 + $0x178] sm:$0xff]
    %v1654 = vld [vmem:[%s8 + $0x180] sm:$0xff]
    %v1655 = vld [vmem:[%s8 + $0x188] sm:$0xff]
    %v1656 = vld [vmem:[%s8 + $0x190] sm:$0xff]
    %v1657 = vld [vmem:[%s8 + $0x198] sm:$0xff]
    %v1658 = vld [vmem:[%s8 + $0x1a0] sm:$0xff]
    %v1659 = vld [vmem:[%s8 + $0x1a8] sm:$0xff]
    %v1660 = vld [vmem:[%s8 + $0x1b0] sm:$0xff]
    %v1661 = vld [vmem:[%s8 + $0x1b8] sm:$0xff]
    %v1662 = vld [vmem:[%s8 + $0x1c0] sm:$0xff]
    %v1663 = vld [vmem:[%s8 + $0x1c8] sm:$0xff]
    %v1664 = vld [vmem:[%s8 + $0x1d0] sm:$0xff]
    %v1665 = vld [vmem:[%s8 + $0x1d8] sm:$0xff]
    %v1666 = vld [vmem:[%s8 + $0x1e0] sm:$0xff]
    %v1667 = vld [vmem:[%s8 + $0x1e8] sm:$0xff]
    %v1668 = vld [vmem:[%s8 + $0x1f0] sm:$0xff]
    %v1669 = vld [vmem:[%s8 + $0x1f8] sm:$0xff]
    %1670 = vmatprep.subr.mxu0 0.0
    %1671 = vmatpush1.msra.mxu0 %v1557
    %1672 = vmatprep.subr.mxu0 0.0
    %1673 = vmatpush1.msra.mxu0 %v1556
    %1674 = vmatprep.subr.mxu0 0.0
    %1675 = vmatpush1.msra.mxu0 %v1555
    %1676 = vmatprep.subr.mxu0 0.0
    %1677 = vmatpush1.msra.mxu0 %v1554
    %1678 = vmatprep.subr.mxu0 0.0
    %1679 = vmatpush1.msra.mxu0 %v1553
    %1680 = vmatprep.subr.mxu0 0.0
    %1681 = vmatpush1.msra.mxu0 %v1552
    %1682 = vmatprep.subr.mxu0 0.0
    %1683 = vmatpush1.msra.mxu0 %v1551
    %1684 = vmatprep.subr.mxu0 0.0
    %1685 = vmatpush1.msra.mxu0 %v1550
    %1686 = vmatprep.subr.mxu0 0.0
    %1687 = vmatpush1.msra.mxu0 %v1549
    %1688 = vmatprep.subr.mxu0 0.0
    %1689 = vmatpush1.msra.mxu0 %v1548
    %1690 = vmatprep.subr.mxu0 0.0
    %1691 = vmatpush1.msra.mxu0 %v1547
    %1692 = vmatprep.subr.mxu0 0.0
    %1693 = vmatpush1.msra.mxu0 %v1546
    %1694 = vmatprep.subr.mxu0 0.0
    %1695 = vmatpush1.msra.mxu0 %v1545
    %1696 = vmatprep.subr.mxu0 0.0
    %1697 = vmatpush1.msra.mxu0 %v1544
    %1698 = vmatprep.subr.mxu0 0.0
    %1699 = vmatpush1.msra.mxu0 %v1543
    %1700 = vmatprep.subr.mxu0 0.0
    %1701 = vmatpush1.msra.mxu0 %v1542
    %1702 = vmatprep.subr.mxu0 0.0
    %1703 = vmatpush2.msra.mxu0 %v1573
    %1704 = vmatprep.subr.mxu0 0.0
    %1705 = vmatpush2.msra.mxu0 %v1572
    %1706 = vmatprep.subr.mxu0 0.0
    %1707 = vmatpush2.msra.mxu0 %v1571
    %1708 = vmatprep.subr.mxu0 0.0
    %1709 = vmatpush2.msra.mxu0 %v1570
    %1710 = vmatprep.subr.mxu0 0.0
    %1711 = vmatpush2.msra.mxu0 %v1569
    %1712 = vmatprep.subr.mxu0 0.0
    %1713 = vmatpush2.msra.mxu0 %v1568
    %1714 = vmatprep.subr.mxu0 0.0
    %1715 = vmatpush2.msra.mxu0 %v1567
    %1716 = vmatprep.subr.mxu0 0.0
    %1717 = vmatpush2.msra.mxu0 %v1566
    %1718 = vmatprep.subr.mxu0 0.0
    %1719 = vmatpush2.msra.mxu0 %v1565
    %1720 = vmatprep.subr.mxu0 0.0
    %1721 = vmatpush2.msra.mxu0 %v1564
    %1722 = vmatprep.subr.mxu0 0.0
    %1723 = vmatpush2.msra.mxu0 %v1563
    %1724 = vmatprep.subr.mxu0 0.0
    %1725 = vmatpush2.msra.mxu0 %v1562
    %1726 = vmatprep.subr.mxu0 0.0
    %1727 = vmatpush2.msra.mxu0 %v1561
    %1728 = vmatprep.subr.mxu0 0.0
    %1729 = vmatpush2.msra.mxu0 %v1560
    %1730 = vmatprep.subr.mxu0 0.0
    %1731 = vmatpush2.msra.mxu0 %v1559
    %1732 = vmatprep.subr.mxu0 0.0
    %1733 = vmatpush2.msra.mxu0 %v1558
    %1734 = vmatprep.mubr.f32.mxu0 %v1607
    %1735 = vmatmul.mubr.f32.gmra.mxu0 %v1606
    %v1736 = vpop.f32.mrf.mxu0
    %v1737 = vadd.f32 0.0, %v1736
    %v1738 = vpop.f32.mrf.mxu0
    %1739 = vmatprep.mubr.f32.mxu0 %v1611
    %1740 = vmatmul.mubr.f32.gmra.mxu0 %v1610
    %v1741 = vpop.f32.mrf.mxu0
    %v1742 = vadd.f32 0.0, %v1741
    %v1743 = vpop.f32.mrf.mxu0
    %1744 = vmatprep.mubr.f32.mxu0 %v1615
    %1745 = vmatmul.mubr.f32.gmra.mxu0 %v1614
    %v1746 = vpop.f32.mrf.mxu0
    %v1747 = vadd.f32 0.0, %v1746
    %v1748 = vpop.f32.mrf.mxu0
    %1749 = vmatprep.mubr.f32.mxu0 %v1619
    %1750 = vmatmul.mubr.f32.gmra.mxu0 %v1618
    %v1751 = vpop.f32.mrf.mxu0
    %v1752 = vadd.f32 0.0, %v1751
    %v1753 = vpop.f32.mrf.mxu0
    %1754 = vmatprep.mubr.f32.mxu0 %v1623
    %1755 = vmatmul.mubr.f32.gmra.mxu0 %v1622
    %v1756 = vpop.f32.mrf.mxu0
    %v1757 = vadd.f32 0.0, %v1756
    %v1758 = vpop.f32.mrf.mxu0
    %1759 = vmatprep.mubr.f32.mxu0 %v1627
    %1760 = vmatmul.mubr.f32.gmra.mxu0 %v1626
    %v1761 = vpop.f32.mrf.mxu0
    %v1762 = vadd.f32 0.0, %v1761
    %v1763 = vpop.f32.mrf.mxu0
    %1764 = vmatprep.mubr.f32.mxu0 %v1631
    %1765 = vmatmul.mubr.f32.gmra.mxu0 %v1630
    %v1766 = vpop.f32.mrf.mxu0
    %v1767 = vadd.f32 0.0, %v1766
    %v1768 = vpop.f32.mrf.mxu0
    %1769 = vmatprep.mubr.f32.mxu0 %v1635
    %1770 = vmatmul.mubr.f32.gmra.mxu0 %v1634
    %v1771 = vpop.f32.mrf.mxu0
    %v1772 = vadd.f32 0.0, %v1771
    %v1773 = vpop.f32.mrf.mxu0
    %1774 = vmatprep.mubr.f32.mxu0 %v1639
    %1775 = vmatmul.mubr.f32.gmra.mxu0 %v1638
    %v1776 = vpop.f32.mrf.mxu0
    %v1777 = vadd.f32 0.0, %v1776
    %v1778 = vpop.f32.mrf.mxu0
    %1779 = vmatprep.mubr.f32.mxu0 %v1643
    %1780 = vmatmul.mubr.f32.gmra.mxu0 %v1642
    %v1781 = vpop.f32.mrf.mxu0
    %v1782 = vadd.f32 0.0, %v1781
    %v1783 = vpop.f32.mrf.mxu0
    %1784 = vmatprep.mubr.f32.mxu0 %v1647
    %1785 = vmatmul.mubr.f32.gmra.mxu0 %v1646
    %v1786 = vpop.f32.mrf.mxu0
    %v1787 = vadd.f32 0.0, %v1786
    %v1788 = vpop.f32.mrf.mxu0
    %1789 = vmatprep.mubr.f32.mxu0 %v1651
    %1790 = vmatmul.mubr.f32.gmra.mxu0 %v1650
    %v1791 = vpop.f32.mrf.mxu0
    %v1792 = vadd.f32 0.0, %v1791
    %v1793 = vpop.f32.mrf.mxu0
    %1794 = vmatprep.mubr.f32.mxu0 %v1655
    %1795 = vmatmul.mubr.f32.gmra.mxu0 %v1654
    %v1796 = vpop.f32.mrf.mxu0
    %v1797 = vadd.f32 0.0, %v1796
    %v1798 = vpop.f32.mrf.mxu0
    %1799 = vmatprep.mubr.f32.mxu0 %v1659
    %1800 = vmatmul.mubr.f32.gmra.mxu0 %v1658
    %v1801 = vpop.f32.mrf.mxu0
    %v1802 = vadd.f32 0.0, %v1801
    %v1803 = vpop.f32.mrf.mxu0
    %1804 = vmatprep.mubr.f32.mxu0 %v1663
    %1805 = vmatmul.mubr.f32.gmra.mxu0 %v1662
    %v1806 = vpop.f32.mrf.mxu0
    %v1807 = vadd.f32 0.0, %v1806
    %v1808 = vpop.f32.mrf.mxu0
    %1809 = vmatprep.mubr.f32.mxu0 %v1667
    %1810 = vmatmul.mubr.f32.gmra.mxu0 %v1666
    %v1811 = vpop.f32.mrf.mxu0
    %v1812 = vadd.f32 0.0, %v1811
    %v1813 = vpop.f32.mrf.mxu0
    %1814 = vdwg.mxu0
    %1815 = vmatprep.subr.mxu0 0.0
    %1816 = vmatpush1.msra.mxu0 %v1589
    %1817 = vmatprep.subr.mxu0 0.0
    %1818 = vmatpush1.msra.mxu0 %v1588
    %1819 = vmatprep.subr.mxu0 0.0
    %1820 = vmatpush1.msra.mxu0 %v1587
    %1821 = vmatprep.subr.mxu0 0.0
    %1822 = vmatpush1.msra.mxu0 %v1586
    %1823 = vmatprep.subr.mxu0 0.0
    %1824 = vmatpush1.msra.mxu0 %v1585
    %1825 = vmatprep.subr.mxu0 0.0
    %1826 = vmatpush1.msra.mxu0 %v1584
    %1827 = vmatprep.subr.mxu0 0.0
    %1828 = vmatpush1.msra.mxu0 %v1583
    %1829 = vmatprep.subr.mxu0 0.0
    %1830 = vmatpush1.msra.mxu0 %v1582
    %1831 = vmatprep.subr.mxu0 0.0
    %1832 = vmatpush1.msra.mxu0 %v1581
    %1833 = vmatprep.subr.mxu0 0.0
    %1834 = vmatpush1.msra.mxu0 %v1580
    %1835 = vmatprep.subr.mxu0 0.0
    %1836 = vmatpush1.msra.mxu0 %v1579
    %1837 = vmatprep.subr.mxu0 0.0
    %1838 = vmatpush1.msra.mxu0 %v1578
    %1839 = vmatprep.subr.mxu0 0.0
    %1840 = vmatpush1.msra.mxu0 %v1577
    %1841 = vmatprep.subr.mxu0 0.0
    %1842 = vmatpush1.msra.mxu0 %v1576
    %1843 = vmatprep.subr.mxu0 0.0
    %1844 = vmatpush1.msra.mxu0 %v1575
    %1845 = vmatprep.subr.mxu0 0.0
    %1846 = vmatpush1.msra.mxu0 %v1574
    %1847 = vmatprep.subr.mxu0 0.0
    %1848 = vmatpush2.msra.mxu0 %v1605
    %1849 = vmatprep.subr.mxu0 0.0
    %1850 = vmatpush2.msra.mxu0 %v1604
    %1851 = vmatprep.subr.mxu0 0.0
    %1852 = vmatpush2.msra.mxu0 %v1603
    %1853 = vmatprep.subr.mxu0 0.0
    %1854 = vmatpush2.msra.mxu0 %v1602
    %1855 = vmatprep.subr.mxu0 0.0
    %1856 = vmatpush2.msra.mxu0 %v1601
    %1857 = vmatprep.subr.mxu0 0.0
    %1858 = vmatpush2.msra.mxu0 %v1600
    %1859 = vmatprep.subr.mxu0 0.0
    %1860 = vmatpush2.msra.mxu0 %v1599
    %1861 = vmatprep.subr.mxu0 0.0
    %1862 = vmatpush2.msra.mxu0 %v1598
    %1863 = vmatprep.subr.mxu0 0.0
    %1864 = vmatpush2.msra.mxu0 %v1597
    %1865 = vmatprep.subr.mxu0 0.0
    %1866 = vmatpush2.msra.mxu0 %v1596
    %1867 = vmatprep.subr.mxu0 0.0
    %1868 = vmatpush2.msra.mxu0 %v1595
    %1869 = vmatprep.subr.mxu0 0.0
    %1870 = vmatpush2.msra.mxu0 %v1594
    %1871 = vmatprep.subr.mxu0 0.0
    %1872 = vmatpush2.msra.mxu0 %v1593
    %1873 = vmatprep.subr.mxu0 0.0
    %1874 = vmatpush2.msra.mxu0 %v1592
    %1875 = vmatprep.subr.mxu0 0.0
    %1876 = vmatpush2.msra.mxu0 %v1591
    %1877 = vmatprep.subr.mxu0 0.0
    %1878 = vmatpush2.msra.mxu0 %v1590
    %1879 = vmatprep.mubr.f32.mxu0 %v1609
    %1880 = vmatmul.mubr.f32.gmra.mxu0 %v1608
    %v1881 = vpop.f32.mrf.mxu0
    %v1882 = vadd.f32 %v1737, %v1881
    %v1883 = vpop.f32.mrf.mxu0
    %1884 = vmatprep.mubr.f32.mxu0 %v1613
    %1885 = vmatmul.mubr.f32.gmra.mxu0 %v1612
    %v1886 = vpop.f32.mrf.mxu0
    %v1887 = vadd.f32 %v1742, %v1886
    %v1888 = vpop.f32.mrf.mxu0
    %1889 = vmatprep.mubr.f32.mxu0 %v1617
    %1890 = vmatmul.mubr.f32.gmra.mxu0 %v1616
    %v1891 = vpop.f32.mrf.mxu0
    %v1892 = vadd.f32 %v1747, %v1891
    %v1893 = vpop.f32.mrf.mxu0
    %1894 = vmatprep.mubr.f32.mxu0 %v1621
    %1895 = vmatmul.mubr.f32.gmra.mxu0 %v1620
    %v1896 = vpop.f32.mrf.mxu0
    %v1897 = vadd.f32 %v1752, %v1896
    %v1898 = vpop.f32.mrf.mxu0
    %1899 = vmatprep.mubr.f32.mxu0 %v1625
    %1900 = vmatmul.mubr.f32.gmra.mxu0 %v1624
    %v1901 = vpop.f32.mrf.mxu0
    %v1902 = vadd.f32 %v1757, %v1901
    %v1903 = vpop.f32.mrf.mxu0
    %1904 = vmatprep.mubr.f32.mxu0 %v1629
    %1905 = vmatmul.mubr.f32.gmra.mxu0 %v1628
    %v1906 = vpop.f32.mrf.mxu0
    %v1907 = vadd.f32 %v1762, %v1906
    %v1908 = vpop.f32.mrf.mxu0
    %1909 = vmatprep.mubr.f32.mxu0 %v1633
    %1910 = vmatmul.mubr.f32.gmra.mxu0 %v1632
    %v1911 = vpop.f32.mrf.mxu0
    %v1912 = vadd.f32 %v1767, %v1911
    %v1913 = vpop.f32.mrf.mxu0
    %1914 = vmatprep.mubr.f32.mxu0 %v1637
    %1915 = vmatmul.mubr.f32.gmra.mxu0 %v1636
    %v1916 = vpop.f32.mrf.mxu0
    %v1917 = vadd.f32 %v1772, %v1916
    %v1918 = vpop.f32.mrf.mxu0
    %1919 = vmatprep.mubr.f32.mxu0 %v1641
    %1920 = vmatmul.mubr.f32.gmra.mxu0 %v1640
    %v1921 = vpop.f32.mrf.mxu0
    %v1922 = vadd.f32 %v1777, %v1921
    %v1923 = vpop.f32.mrf.mxu0
    %1924 = vmatprep.mubr.f32.mxu0 %v1645
    %1925 = vmatmul.mubr.f32.gmra.mxu0 %v1644
    %v1926 = vpop.f32.mrf.mxu0
    %v1927 = vadd.f32 %v1782, %v1926
    %v1928 = vpop.f32.mrf.mxu0
    %1929 = vmatprep.mubr.f32.mxu0 %v1649
    %1930 = vmatmul.mubr.f32.gmra.mxu0 %v1648
    %v1931 = vpop.f32.mrf.mxu0
    %v1932 = vadd.f32 %v1787, %v1931
    %v1933 = vpop.f32.mrf.mxu0
    %1934 = vmatprep.mubr.f32.mxu0 %v1653
    %1935 = vmatmul.mubr.f32.gmra.mxu0 %v1652
    %v1936 = vpop.f32.mrf.mxu0
    %v1937 = vadd.f32 %v1792, %v1936
    %v1938 = vpop.f32.mrf.mxu0
    %1939 = vmatprep.mubr.f32.mxu0 %v1657
    %1940 = vmatmul.mubr.f32.gmra.mxu0 %v1656
    %v1941 = vpop.f32.mrf.mxu0
    %v1942 = vadd.f32 %v1797, %v1941
    %v1943 = vpop.f32.mrf.mxu0
    %1944 = vmatprep.mubr.f32.mxu0 %v1661
    %1945 = vmatmul.mubr.f32.gmra.mxu0 %v1660
    %v1946 = vpop.f32.mrf.mxu0
    %v1947 = vadd.f32 %v1802, %v1946
    %v1948 = vpop.f32.mrf.mxu0
    %1949 = vmatprep.mubr.f32.mxu0 %v1665
    %1950 = vmatmul.mubr.f32.gmra.mxu0 %v1664
    %v1951 = vpop.f32.mrf.mxu0
    %v1952 = vadd.f32 %v1807, %v1951
    %v1953 = vpop.f32.mrf.mxu0
    %1954 = vmatprep.mubr.f32.mxu0 %v1669
    %1955 = vmatmul.mubr.f32.gmra.mxu0 %v1668
    %v1956 = vpop.f32.mrf.mxu0
    %v1957 = vadd.f32 %v1812, %v1956
    %v1958 = vpop.f32.mrf.mxu0
    %1959 = vdwg.mxu0
    %v1960 = vld [vmem:[%s5] sm:$0xff]
    %v1961 = vld [vmem:[%s5 + $0x8] sm:$0xff]
    %v1962 = vld [vmem:[%s5 + $0x10] sm:$0xff]
    %v1963 = vld [vmem:[%s5 + $0x18] sm:$0xff]
    %v1964 = vld [vmem:[%s5 + $0x20] sm:$0xff]
    %v1965 = vld [vmem:[%s5 + $0x28] sm:$0xff]
    %v1966 = vld [vmem:[%s5 + $0x30] sm:$0xff]
    %v1967 = vld [vmem:[%s5 + $0x38] sm:$0xff]
    %v1968 = vld [vmem:[%s5 + $0x40] sm:$0xff]
    %v1969 = vld [vmem:[%s5 + $0x48] sm:$0xff]
    %v1970 = vld [vmem:[%s5 + $0x50] sm:$0xff]
    %v1971 = vld [vmem:[%s5 + $0x58] sm:$0xff]
    %v1972 = vld [vmem:[%s5 + $0x60] sm:$0xff]
    %v1973 = vld [vmem:[%s5 + $0x68] sm:$0xff]
    %v1974 = vld [vmem:[%s5 + $0x70] sm:$0xff]
    %v1975 = vld [vmem:[%s5 + $0x78] sm:$0xff]
    %v1976 = vrot.slane %v1882, 7
    %v1977 = vrot.slane %v1887, 7
    %v1978 = vrot.slane %v1892, 7
    %v1979 = vrot.slane %v1897, 7
    %v1980 = vrot.slane %v1902, 7
    %v1981 = vrot.slane %v1907, 7
    %v1982 = vrot.slane %v1912, 7
    %v1983 = vrot.slane %v1917, 7
    %v1984 = vrot.slane %v1922, 7
    %v1985 = vrot.slane %v1927, 7
    %v1986 = vrot.slane %v1932, 7
    %v1987 = vrot.slane %v1937, 7
    %v1988 = vrot.slane %v1942, 7
    %v1989 = vrot.slane %v1947, 7
    %v1990 = vrot.slane %v1952, 7
    %v1991 = vrot.slane %v1957, 7
    %vm1992 = vcmp.lt.s32.totalorder %v1348, 1
    %v1993 = vsel %vm1992, %v1990, %v1991
    %v1994 = vsel %vm1992, %v1989, %v1990
    %v1995 = vsel %vm1992, %v1988, %v1989
    %v1996 = vsel %vm1992, %v1987, %v1988
    %v1997 = vsel %vm1992, %v1986, %v1987
    %v1998 = vsel %vm1992, %v1985, %v1986
    %v1999 = vsel %vm1992, %v1984, %v1985
    %v2000 = vsel %vm1992, %v1983, %v1984
    %v2001 = vsel %vm1992, %v1982, %v1983
    %v2002 = vsel %vm1992, %v1981, %v1982
    %v2003 = vsel %vm1992, %v1980, %v1981
    %v2004 = vsel %vm1992, %v1979, %v1980
    %v2005 = vsel %vm1992, %v1978, %v1979
    %v2006 = vsel %vm1992, %v1977, %v1978
    %v2007 = vsel %vm1992, %v1976, %v1977
    %v2008 = vsel %vm1992, %v1991, %v1976
    %2010 = vset.pattern.permute.xlu0 0
    %2011 = vperm.xlu0 %2010, %v1960
    %v2012 = vpop.permute.xlu0 %2011
    %2015 = vset.pattern.permute.xlu0 0
    %2016 = vperm.xlu0 %2015, %v1961
    %v2017 = vpop.permute.xlu0 %2016
    %2020 = vset.pattern.permute.xlu0 0
    %2021 = vperm.xlu0 %2020, %v1962
    %v2022 = vpop.permute.xlu0 %2021
    %2025 = vset.pattern.permute.xlu0 0
    %2026 = vperm.xlu0 %2025, %v1963
    %v2027 = vpop.permute.xlu0 %2026
    %2030 = vset.pattern.permute.xlu0 0
    %2031 = vperm.xlu0 %2030, %v1964
    %v2032 = vpop.permute.xlu0 %2031
    %2035 = vset.pattern.permute.xlu0 0
    %2036 = vperm.xlu0 %2035, %v1965
    %v2037 = vpop.permute.xlu0 %2036
    %2040 = vset.pattern.permute.xlu0 0
    %2041 = vperm.xlu0 %2040, %v1966
    %v2042 = vpop.permute.xlu0 %2041
    %2045 = vset.pattern.permute.xlu0 0
    %2046 = vperm.xlu0 %2045, %v1967
    %v2047 = vpop.permute.xlu0 %2046
    %2050 = vset.pattern.permute.xlu0 0
    %2051 = vperm.xlu0 %2050, %v1968
    %v2052 = vpop.permute.xlu0 %2051
    %2055 = vset.pattern.permute.xlu0 0
    %2056 = vperm.xlu0 %2055, %v1969
    %v2057 = vpop.permute.xlu0 %2056
    %2060 = vset.pattern.permute.xlu0 0
    %2061 = vperm.xlu0 %2060, %v1970
    %v2062 = vpop.permute.xlu0 %2061
    %2065 = vset.pattern.permute.xlu0 0
    %2066 = vperm.xlu0 %2065, %v1971
    %v2067 = vpop.permute.xlu0 %2066
    %2070 = vset.pattern.permute.xlu0 0
    %2071 = vperm.xlu0 %2070, %v1972
    %v2072 = vpop.permute.xlu0 %2071
    %2075 = vset.pattern.permute.xlu0 0
    %2076 = vperm.xlu0 %2075, %v1973
    %v2077 = vpop.permute.xlu0 %2076
    %2080 = vset.pattern.permute.xlu0 0
    %2081 = vperm.xlu0 %2080, %v1974
    %v2082 = vpop.permute.xlu0 %2081
    %2085 = vset.pattern.permute.xlu0 0
    %2086 = vperm.xlu0 %2085, %v1975
    %v2087 = vpop.permute.xlu0 %2086
    %v2089 = vmul.f32 %v1993, %v2012
    %v2090 = vmul.f32 %v2008, %v2017
    %v2091 = vmul.f32 %v2007, %v2022
    %v2092 = vmul.f32 %v2006, %v2027
    %v2093 = vmul.f32 %v2005, %v2032
    %v2094 = vmul.f32 %v2004, %v2037
    %v2095 = vmul.f32 %v2003, %v2042
    %v2096 = vmul.f32 %v2002, %v2047
    %v2097 = vmul.f32 %v2001, %v2052
    %v2098 = vmul.f32 %v2000, %v2057
    %v2099 = vmul.f32 %v1999, %v2062
    %v2100 = vmul.f32 %v1998, %v2067
    %v2101 = vmul.f32 %v1997, %v2072
    %v2102 = vmul.f32 %v1996, %v2077
    %v2103 = vmul.f32 %v1995, %v2082
    %v2104 = vmul.f32 %v1994, %v2087
    %2105 = vset.pattern.permute.xlu0 1
    %2106 = vperm.xlu0 %2105, %v1960
    %v2107 = vpop.permute.xlu0 %2106
    %2109 = vset.pattern.permute.xlu0 1
    %2110 = vperm.xlu0 %2109, %v1961
    %v2111 = vpop.permute.xlu0 %2110
    %2113 = vset.pattern.permute.xlu0 1
    %2114 = vperm.xlu0 %2113, %v1962
    %v2115 = vpop.permute.xlu0 %2114
    %2117 = vset.pattern.permute.xlu0 1
    %2118 = vperm.xlu0 %2117, %v1963
    %v2119 = vpop.permute.xlu0 %2118
    %2121 = vset.pattern.permute.xlu0 1
    %2122 = vperm.xlu0 %2121, %v1964
    %v2123 = vpop.permute.xlu0 %2122
    %2125 = vset.pattern.permute.xlu0 1
    %2126 = vperm.xlu0 %2125, %v1965
    %v2127 = vpop.permute.xlu0 %2126
    %2129 = vset.pattern.permute.xlu0 1
    %2130 = vperm.xlu0 %2129, %v1966
    %v2131 = vpop.permute.xlu0 %2130
    %2133 = vset.pattern.permute.xlu0 1
    %2134 = vperm.xlu0 %2133, %v1967
    %v2135 = vpop.permute.xlu0 %2134
    %2137 = vset.pattern.permute.xlu0 1
    %2138 = vperm.xlu0 %2137, %v1968
    %v2139 = vpop.permute.xlu0 %2138
    %2141 = vset.pattern.permute.xlu0 1
    %2142 = vperm.xlu0 %2141, %v1969
    %v2143 = vpop.permute.xlu0 %2142
    %2145 = vset.pattern.permute.xlu0 1
    %2146 = vperm.xlu0 %2145, %v1970
    %v2147 = vpop.permute.xlu0 %2146
    %2149 = vset.pattern.permute.xlu0 1
    %2150 = vperm.xlu0 %2149, %v1971
    %v2151 = vpop.permute.xlu0 %2150
    %2153 = vset.pattern.permute.xlu0 1
    %2154 = vperm.xlu0 %2153, %v1972
    %v2155 = vpop.permute.xlu0 %2154
    %2157 = vset.pattern.permute.xlu0 1
    %2158 = vperm.xlu0 %2157, %v1973
    %v2159 = vpop.permute.xlu0 %2158
    %2161 = vset.pattern.permute.xlu0 1
    %2162 = vperm.xlu0 %2161, %v1974
    %v2163 = vpop.permute.xlu0 %2162
    %2165 = vset.pattern.permute.xlu0 1
    %2166 = vperm.xlu0 %2165, %v1975
    %v2167 = vpop.permute.xlu0 %2166
    %v2169 = vmul.f32 %v1957, %v2107
    %v2170 = vmul.f32 %v1882, %v2111
    %v2171 = vmul.f32 %v1887, %v2115
    %v2172 = vmul.f32 %v1892, %v2119
    %v2173 = vmul.f32 %v1897, %v2123
    %v2174 = vmul.f32 %v1902, %v2127
    %v2175 = vmul.f32 %v1907, %v2131
    %v2176 = vmul.f32 %v1912, %v2135
    %v2177 = vmul.f32 %v1917, %v2139
    %v2178 = vmul.f32 %v1922, %v2143
    %v2179 = vmul.f32 %v1927, %v2147
    %v2180 = vmul.f32 %v1932, %v2151
    %v2181 = vmul.f32 %v1937, %v2155
    %v2182 = vmul.f32 %v1942, %v2159
    %v2183 = vmul.f32 %v1947, %v2163
    %v2184 = vmul.f32 %v1952, %v2167
    %v2185 = vrot.slane %v1882, 1
    %v2186 = vrot.slane %v1887, 1
    %v2187 = vrot.slane %v1892, 1
    %v2188 = vrot.slane %v1897, 1
    %v2189 = vrot.slane %v1902, 1
    %v2190 = vrot.slane %v1907, 1
    %v2191 = vrot.slane %v1912, 1
    %v2192 = vrot.slane %v1917, 1
    %v2193 = vrot.slane %v1922, 1
    %v2194 = vrot.slane %v1927, 1
    %v2195 = vrot.slane %v1932, 1
    %v2196 = vrot.slane %v1937, 1
    %v2197 = vrot.slane %v1942, 1
    %v2198 = vrot.slane %v1947, 1
    %v2199 = vrot.slane %v1952, 1
    %v2200 = vrot.slane %v1957, 1
    %v2201 = vsel %vm1349, %v2199, %v2200
    %v2202 = vsel %vm1349, %v2198, %v2199
    %v2203 = vsel %vm1349, %v2197, %v2198
    %v2204 = vsel %vm1349, %v2196, %v2197
    %v2205 = vsel %vm1349, %v2195, %v2196
    %v2206 = vsel %vm1349, %v2194, %v2195
    %v2207 = vsel %vm1349, %v2193, %v2194
    %v2208 = vsel %vm1349, %v2192, %v2193
    %v2209 = vsel %vm1349, %v2191, %v2192
    %v2210 = vsel %vm1349, %v2190, %v2191
    %v2211 = vsel %vm1349, %v2189, %v2190
    %v2212 = vsel %vm1349, %v2188, %v2189
    %v2213 = vsel %vm1349, %v2187, %v2188
    %v2214 = vsel %vm1349, %v2186, %v2187
    %v2215 = vsel %vm1349, %v2185, %v2186
    %v2216 = vsel %vm1349, %v2200, %v2185
    %2217 = vset.pattern.permute.xlu0 2
    %2218 = vperm.xlu0 %2217, %v1960
    %v2219 = vpop.permute.xlu0 %2218
    %2221 = vset.pattern.permute.xlu0 2
    %2222 = vperm.xlu0 %2221, %v1961
    %v2223 = vpop.permute.xlu0 %2222
    %2225 = vset.pattern.permute.xlu0 2
    %2226 = vperm.xlu0 %2225, %v1962
    %v2227 = vpop.permute.xlu0 %2226
    %2229 = vset.pattern.permute.xlu0 2
    %2230 = vperm.xlu0 %2229, %v1963
    %v2231 = vpop.permute.xlu0 %2230
    %2233 = vset.pattern.permute.xlu0 2
    %2234 = vperm.xlu0 %2233, %v1964
    %v2235 = vpop.permute.xlu0 %2234
    %2237 = vset.pattern.permute.xlu0 2
    %2238 = vperm.xlu0 %2237, %v1965
    %v2239 = vpop.permute.xlu0 %2238
    %2241 = vset.pattern.permute.xlu0 2
    %2242 = vperm.xlu0 %2241, %v1966
    %v2243 = vpop.permute.xlu0 %2242
    %2245 = vset.pattern.permute.xlu0 2
    %2246 = vperm.xlu0 %2245, %v1967
    %v2247 = vpop.permute.xlu0 %2246
    %2249 = vset.pattern.permute.xlu0 2
    %2250 = vperm.xlu0 %2249, %v1968
    %v2251 = vpop.permute.xlu0 %2250
    %2253 = vset.pattern.permute.xlu0 2
    %2254 = vperm.xlu0 %2253, %v1969
    %v2255 = vpop.permute.xlu0 %2254
    %2257 = vset.pattern.permute.xlu0 2
    %2258 = vperm.xlu0 %2257, %v1970
    %v2259 = vpop.permute.xlu0 %2258
    %2261 = vset.pattern.permute.xlu0 2
    %2262 = vperm.xlu0 %2261, %v1971
    %v2263 = vpop.permute.xlu0 %2262
    %2265 = vset.pattern.permute.xlu0 2
    %2266 = vperm.xlu0 %2265, %v1972
    %v2267 = vpop.permute.xlu0 %2266
    %2269 = vset.pattern.permute.xlu0 2
    %2270 = vperm.xlu0 %2269, %v1973
    %v2271 = vpop.permute.xlu0 %2270
    %2273 = vset.pattern.permute.xlu0 2
    %2274 = vperm.xlu0 %2273, %v1974
    %v2275 = vpop.permute.xlu0 %2274
    %2277 = vset.pattern.permute.xlu0 2
    %2278 = vperm.xlu0 %2277, %v1975
    %v2279 = vpop.permute.xlu0 %2278
    %v2281 = vmul.f32 %v2216, %v2219
    %v2282 = vmul.f32 %v2215, %v2223
    %v2283 = vmul.f32 %v2214, %v2227
    %v2284 = vmul.f32 %v2213, %v2231
    %v2285 = vmul.f32 %v2212, %v2235
    %v2286 = vmul.f32 %v2211, %v2239
    %v2287 = vmul.f32 %v2210, %v2243
    %v2288 = vmul.f32 %v2209, %v2247
    %v2289 = vmul.f32 %v2208, %v2251
    %v2290 = vmul.f32 %v2207, %v2255
    %v2291 = vmul.f32 %v2206, %v2259
    %v2292 = vmul.f32 %v2205, %v2263
    %v2293 = vmul.f32 %v2204, %v2267
    %v2294 = vmul.f32 %v2203, %v2271
    %v2295 = vmul.f32 %v2202, %v2275
    %v2296 = vmul.f32 %v2201, %v2279
    %2297 = vset.pattern.permute.xlu0 3
    %2298 = vperm.xlu0 %2297, %v1960
    %v2299 = vpop.permute.xlu0 %2298
    %2301 = vset.pattern.permute.xlu0 3
    %2302 = vperm.xlu0 %2301, %v1961
    %v2303 = vpop.permute.xlu0 %2302
    %2305 = vset.pattern.permute.xlu0 3
    %2306 = vperm.xlu0 %2305, %v1962
    %v2307 = vpop.permute.xlu0 %2306
    %2309 = vset.pattern.permute.xlu0 3
    %2310 = vperm.xlu0 %2309, %v1963
    %v2311 = vpop.permute.xlu0 %2310
    %2313 = vset.pattern.permute.xlu0 3
    %2314 = vperm.xlu0 %2313, %v1964
    %v2315 = vpop.permute.xlu0 %2314
    %2317 = vset.pattern.permute.xlu0 3
    %2318 = vperm.xlu0 %2317, %v1965
    %v2319 = vpop.permute.xlu0 %2318
    %2321 = vset.pattern.permute.xlu0 3
    %2322 = vperm.xlu0 %2321, %v1966
    %v2323 = vpop.permute.xlu0 %2322
    %2325 = vset.pattern.permute.xlu0 3
    %2326 = vperm.xlu0 %2325, %v1967
    %v2327 = vpop.permute.xlu0 %2326
    %2329 = vset.pattern.permute.xlu0 3
    %2330 = vperm.xlu0 %2329, %v1968
    %v2331 = vpop.permute.xlu0 %2330
    %2333 = vset.pattern.permute.xlu0 3
    %2334 = vperm.xlu0 %2333, %v1969
    %v2335 = vpop.permute.xlu0 %2334
    %2337 = vset.pattern.permute.xlu0 3
    %2338 = vperm.xlu0 %2337, %v1970
    %v2339 = vpop.permute.xlu0 %2338
    %2341 = vset.pattern.permute.xlu0 3
    %2342 = vperm.xlu0 %2341, %v1971
    %v2343 = vpop.permute.xlu0 %2342
    %2345 = vset.pattern.permute.xlu0 3
    %2346 = vperm.xlu0 %2345, %v1972
    %v2347 = vpop.permute.xlu0 %2346
    %2349 = vset.pattern.permute.xlu0 3
    %2350 = vperm.xlu0 %2349, %v1973
    %v2351 = vpop.permute.xlu0 %2350
    %2353 = vset.pattern.permute.xlu0 3
    %2354 = vperm.xlu0 %2353, %v1974
    %v2355 = vpop.permute.xlu0 %2354
    %2357 = vset.pattern.permute.xlu0 3
    %2358 = vperm.xlu0 %2357, %v1975
    %v2359 = vpop.permute.xlu0 %2358
    %v2361 = vmul.f32 %v2008, %v2299
    %v2362 = vmul.f32 %v2007, %v2303
    %v2363 = vmul.f32 %v2006, %v2307
    %v2364 = vmul.f32 %v2005, %v2311
    %v2365 = vmul.f32 %v2004, %v2315
    %v2366 = vmul.f32 %v2003, %v2319
    %v2367 = vmul.f32 %v2002, %v2323
    %v2368 = vmul.f32 %v2001, %v2327
    %v2369 = vmul.f32 %v2000, %v2331
    %v2370 = vmul.f32 %v1999, %v2335
    %v2371 = vmul.f32 %v1998, %v2339
    %v2372 = vmul.f32 %v1997, %v2343
    %v2373 = vmul.f32 %v1996, %v2347
    %v2374 = vmul.f32 %v1995, %v2351
    %v2375 = vmul.f32 %v1994, %v2355
    %v2376 = vmul.f32 %v1993, %v2359
    %2377 = vset.pattern.permute.xlu0 5
    %2378 = vperm.xlu0 %2377, %v1960
    %v2379 = vpop.permute.xlu0 %2378
    %2381 = vset.pattern.permute.xlu0 5
    %2382 = vperm.xlu0 %2381, %v1961
    %v2383 = vpop.permute.xlu0 %2382
    %2385 = vset.pattern.permute.xlu0 5
    %2386 = vperm.xlu0 %2385, %v1962
    %v2387 = vpop.permute.xlu0 %2386
    %2389 = vset.pattern.permute.xlu0 5
    %2390 = vperm.xlu0 %2389, %v1963
    %v2391 = vpop.permute.xlu0 %2390
    %2393 = vset.pattern.permute.xlu0 5
    %2394 = vperm.xlu0 %2393, %v1964
    %v2395 = vpop.permute.xlu0 %2394
    %2397 = vset.pattern.permute.xlu0 5
    %2398 = vperm.xlu0 %2397, %v1965
    %v2399 = vpop.permute.xlu0 %2398
    %2401 = vset.pattern.permute.xlu0 5
    %2402 = vperm.xlu0 %2401, %v1966
    %v2403 = vpop.permute.xlu0 %2402
    %2405 = vset.pattern.permute.xlu0 5
    %2406 = vperm.xlu0 %2405, %v1967
    %v2407 = vpop.permute.xlu0 %2406
    %2409 = vset.pattern.permute.xlu0 5
    %2410 = vperm.xlu0 %2409, %v1968
    %v2411 = vpop.permute.xlu0 %2410
    %2413 = vset.pattern.permute.xlu0 5
    %2414 = vperm.xlu0 %2413, %v1969
    %v2415 = vpop.permute.xlu0 %2414
    %2417 = vset.pattern.permute.xlu0 5
    %2418 = vperm.xlu0 %2417, %v1970
    %v2419 = vpop.permute.xlu0 %2418
    %2421 = vset.pattern.permute.xlu0 5
    %2422 = vperm.xlu0 %2421, %v1971
    %v2423 = vpop.permute.xlu0 %2422
    %2425 = vset.pattern.permute.xlu0 5
    %2426 = vperm.xlu0 %2425, %v1972
    %v2427 = vpop.permute.xlu0 %2426
    %2429 = vset.pattern.permute.xlu0 5
    %2430 = vperm.xlu0 %2429, %v1973
    %v2431 = vpop.permute.xlu0 %2430
    %2433 = vset.pattern.permute.xlu0 5
    %2434 = vperm.xlu0 %2433, %v1974
    %v2435 = vpop.permute.xlu0 %2434
    %2437 = vset.pattern.permute.xlu0 5
    %2438 = vperm.xlu0 %2437, %v1975
    %v2439 = vpop.permute.xlu0 %2438
    %v2441 = vmul.f32 %v2215, %v2379
    %v2442 = vmul.f32 %v2214, %v2383
    %v2443 = vmul.f32 %v2213, %v2387
    %v2444 = vmul.f32 %v2212, %v2391
    %v2445 = vmul.f32 %v2211, %v2395
    %v2446 = vmul.f32 %v2210, %v2399
    %v2447 = vmul.f32 %v2209, %v2403
    %v2448 = vmul.f32 %v2208, %v2407
    %v2449 = vmul.f32 %v2207, %v2411
    %v2450 = vmul.f32 %v2206, %v2415
    %v2451 = vmul.f32 %v2205, %v2419
    %v2452 = vmul.f32 %v2204, %v2423
    %v2453 = vmul.f32 %v2203, %v2427
    %v2454 = vmul.f32 %v2202, %v2431
    %v2455 = vmul.f32 %v2201, %v2435
    %v2456 = vmul.f32 %v2216, %v2439
    %2457 = vset.pattern.permute.xlu0 6
    %2458 = vperm.xlu0 %2457, %v1960
    %v2459 = vpop.permute.xlu0 %2458
    %2461 = vset.pattern.permute.xlu0 6
    %2462 = vperm.xlu0 %2461, %v1961
    %v2463 = vpop.permute.xlu0 %2462
    %2465 = vset.pattern.permute.xlu0 6
    %2466 = vperm.xlu0 %2465, %v1962
    %v2467 = vpop.permute.xlu0 %2466
    %2469 = vset.pattern.permute.xlu0 6
    %2470 = vperm.xlu0 %2469, %v1963
    %v2471 = vpop.permute.xlu0 %2470
    %2473 = vset.pattern.permute.xlu0 6
    %2474 = vperm.xlu0 %2473, %v1964
    %v2475 = vpop.permute.xlu0 %2474
    %2477 = vset.pattern.permute.xlu0 6
    %2478 = vperm.xlu0 %2477, %v1965
    %v2479 = vpop.permute.xlu0 %2478
    %2481 = vset.pattern.permute.xlu0 6
    %2482 = vperm.xlu0 %2481, %v1966
    %v2483 = vpop.permute.xlu0 %2482
    %2485 = vset.pattern.permute.xlu0 6
    %2486 = vperm.xlu0 %2485, %v1967
    %v2487 = vpop.permute.xlu0 %2486
    %2489 = vset.pattern.permute.xlu0 6
    %2490 = vperm.xlu0 %2489, %v1968
    %v2491 = vpop.permute.xlu0 %2490
    %2493 = vset.pattern.permute.xlu0 6
    %2494 = vperm.xlu0 %2493, %v1969
    %v2495 = vpop.permute.xlu0 %2494
    %2497 = vset.pattern.permute.xlu0 6
    %2498 = vperm.xlu0 %2497, %v1970
    %v2499 = vpop.permute.xlu0 %2498
    %2501 = vset.pattern.permute.xlu0 6
    %2502 = vperm.xlu0 %2501, %v1971
    %v2503 = vpop.permute.xlu0 %2502
    %2505 = vset.pattern.permute.xlu0 6
    %2506 = vperm.xlu0 %2505, %v1972
    %v2507 = vpop.permute.xlu0 %2506
    %2509 = vset.pattern.permute.xlu0 6
    %2510 = vperm.xlu0 %2509, %v1973
    %v2511 = vpop.permute.xlu0 %2510
    %2513 = vset.pattern.permute.xlu0 6
    %2514 = vperm.xlu0 %2513, %v1974
    %v2515 = vpop.permute.xlu0 %2514
    %2517 = vset.pattern.permute.xlu0 6
    %2518 = vperm.xlu0 %2517, %v1975
    %v2519 = vpop.permute.xlu0 %2518
    %v2521 = vmul.f32 %v2007, %v2459
    %v2522 = vmul.f32 %v2006, %v2463
    %v2523 = vmul.f32 %v2005, %v2467
    %v2524 = vmul.f32 %v2004, %v2471
    %v2525 = vmul.f32 %v2003, %v2475
    %v2526 = vmul.f32 %v2002, %v2479
    %v2527 = vmul.f32 %v2001, %v2483
    %v2528 = vmul.f32 %v2000, %v2487
    %v2529 = vmul.f32 %v1999, %v2491
    %v2530 = vmul.f32 %v1998, %v2495
    %v2531 = vmul.f32 %v1997, %v2499
    %v2532 = vmul.f32 %v1996, %v2503
    %v2533 = vmul.f32 %v1995, %v2507
    %v2534 = vmul.f32 %v1994, %v2511
    %v2535 = vmul.f32 %v1993, %v2515
    %v2536 = vmul.f32 %v2008, %v2519
    %2537 = vset.pattern.permute.xlu0 7
    %2538 = vperm.xlu0 %2537, %v1960
    %v2539 = vpop.permute.xlu0 %2538
    %2541 = vset.pattern.permute.xlu0 7
    %2542 = vperm.xlu0 %2541, %v1961
    %v2543 = vpop.permute.xlu0 %2542
    %2545 = vset.pattern.permute.xlu0 7
    %2546 = vperm.xlu0 %2545, %v1962
    %v2547 = vpop.permute.xlu0 %2546
    %2549 = vset.pattern.permute.xlu0 7
    %2550 = vperm.xlu0 %2549, %v1963
    %v2551 = vpop.permute.xlu0 %2550
    %2553 = vset.pattern.permute.xlu0 7
    %2554 = vperm.xlu0 %2553, %v1964
    %v2555 = vpop.permute.xlu0 %2554
    %2557 = vset.pattern.permute.xlu0 7
    %2558 = vperm.xlu0 %2557, %v1965
    %v2559 = vpop.permute.xlu0 %2558
    %2561 = vset.pattern.permute.xlu0 7
    %2562 = vperm.xlu0 %2561, %v1966
    %v2563 = vpop.permute.xlu0 %2562
    %2565 = vset.pattern.permute.xlu0 7
    %2566 = vperm.xlu0 %2565, %v1967
    %v2567 = vpop.permute.xlu0 %2566
    %2569 = vset.pattern.permute.xlu0 7
    %2570 = vperm.xlu0 %2569, %v1968
    %v2571 = vpop.permute.xlu0 %2570
    %2573 = vset.pattern.permute.xlu0 7
    %2574 = vperm.xlu0 %2573, %v1969
    %v2575 = vpop.permute.xlu0 %2574
    %2577 = vset.pattern.permute.xlu0 7
    %2578 = vperm.xlu0 %2577, %v1970
    %v2579 = vpop.permute.xlu0 %2578
    %2581 = vset.pattern.permute.xlu0 7
    %2582 = vperm.xlu0 %2581, %v1971
    %v2583 = vpop.permute.xlu0 %2582
    %2585 = vset.pattern.permute.xlu0 7
    %2586 = vperm.xlu0 %2585, %v1972
    %v2587 = vpop.permute.xlu0 %2586
    %2589 = vset.pattern.permute.xlu0 7
    %2590 = vperm.xlu0 %2589, %v1973
    %v2591 = vpop.permute.xlu0 %2590
    %2593 = vset.pattern.permute.xlu0 7
    %2594 = vperm.xlu0 %2593, %v1974
    %v2595 = vpop.permute.xlu0 %2594
    %2597 = vset.pattern.permute.xlu0 7
    %2598 = vperm.xlu0 %2597, %v1975
    %v2599 = vpop.permute.xlu0 %2598
    %v2601 = vmul.f32 %v1887, %v2539
    %v2602 = vmul.f32 %v1892, %v2543
    %v2603 = vmul.f32 %v1897, %v2547
    %v2604 = vmul.f32 %v1902, %v2551
    %v2605 = vmul.f32 %v1907, %v2555
    %v2606 = vmul.f32 %v1912, %v2559
    %v2607 = vmul.f32 %v1917, %v2563
    %v2608 = vmul.f32 %v1922, %v2567
    %v2609 = vmul.f32 %v1927, %v2571
    %v2610 = vmul.f32 %v1932, %v2575
    %v2611 = vmul.f32 %v1937, %v2579
    %v2612 = vmul.f32 %v1942, %v2583
    %v2613 = vmul.f32 %v1947, %v2587
    %v2614 = vmul.f32 %v1952, %v2591
    %v2615 = vmul.f32 %v1957, %v2595
    %v2616 = vmul.f32 %v1882, %v2599
    %2617 = vset.pattern.permute.xlu0 8
    %2618 = vperm.xlu0 %2617, %v1960
    %v2619 = vpop.permute.xlu0 %2618
    %2621 = vset.pattern.permute.xlu0 8
    %2622 = vperm.xlu0 %2621, %v1961
    %v2623 = vpop.permute.xlu0 %2622
    %2625 = vset.pattern.permute.xlu0 8
    %2626 = vperm.xlu0 %2625, %v1962
    %v2627 = vpop.permute.xlu0 %2626
    %2629 = vset.pattern.permute.xlu0 8
    %2630 = vperm.xlu0 %2629, %v1963
    %v2631 = vpop.permute.xlu0 %2630
    %2633 = vset.pattern.permute.xlu0 8
    %2634 = vperm.xlu0 %2633, %v1964
    %v2635 = vpop.permute.xlu0 %2634
    %2637 = vset.pattern.permute.xlu0 8
    %2638 = vperm.xlu0 %2637, %v1965
    %v2639 = vpop.permute.xlu0 %2638
    %2641 = vset.pattern.permute.xlu0 8
    %2642 = vperm.xlu0 %2641, %v1966
    %v2643 = vpop.permute.xlu0 %2642
    %2645 = vset.pattern.permute.xlu0 8
    %2646 = vperm.xlu0 %2645, %v1967
    %v2647 = vpop.permute.xlu0 %2646
    %2649 = vset.pattern.permute.xlu0 8
    %2650 = vperm.xlu0 %2649, %v1968
    %v2651 = vpop.permute.xlu0 %2650
    %2653 = vset.pattern.permute.xlu0 8
    %2654 = vperm.xlu0 %2653, %v1969
    %v2655 = vpop.permute.xlu0 %2654
    %2657 = vset.pattern.permute.xlu0 8
    %2658 = vperm.xlu0 %2657, %v1970
    %v2659 = vpop.permute.xlu0 %2658
    %2661 = vset.pattern.permute.xlu0 8
    %2662 = vperm.xlu0 %2661, %v1971
    %v2663 = vpop.permute.xlu0 %2662
    %2665 = vset.pattern.permute.xlu0 8
    %2666 = vperm.xlu0 %2665, %v1972
    %v2667 = vpop.permute.xlu0 %2666
    %2669 = vset.pattern.permute.xlu0 8
    %2670 = vperm.xlu0 %2669, %v1973
    %v2671 = vpop.permute.xlu0 %2670
    %2673 = vset.pattern.permute.xlu0 8
    %2674 = vperm.xlu0 %2673, %v1974
    %v2675 = vpop.permute.xlu0 %2674
    %2677 = vset.pattern.permute.xlu0 8
    %2678 = vperm.xlu0 %2677, %v1975
    %v2679 = vpop.permute.xlu0 %2678
    %v2681 = vmul.f32 %v2214, %v2619
    %v2682 = vmul.f32 %v2213, %v2623
    %v2683 = vmul.f32 %v2212, %v2627
    %v2684 = vmul.f32 %v2211, %v2631
    %v2685 = vmul.f32 %v2210, %v2635
    %v2686 = vmul.f32 %v2209, %v2639
    %v2687 = vmul.f32 %v2208, %v2643
    %v2688 = vmul.f32 %v2207, %v2647
    %v2689 = vmul.f32 %v2206, %v2651
    %v2690 = vmul.f32 %v2205, %v2655
    %v2691 = vmul.f32 %v2204, %v2659
    %v2692 = vmul.f32 %v2203, %v2663
    %v2693 = vmul.f32 %v2202, %v2667
    %v2694 = vmul.f32 %v2201, %v2671
    %v2695 = vmul.f32 %v2216, %v2675
    %v2696 = vmul.f32 %v2215, %v2679
    %2713 = vrot.lane.b32.xlu0 %v2169, 32
    %v2714 = vpop.permute.xlu0 %2713
    %2715 = vrot.lane.b32.xlu0 %v2170, 32
    %v2716 = vpop.permute.xlu0 %2715
    %2717 = vrot.lane.b32.xlu0 %v2171, 32
    %v2718 = vpop.permute.xlu0 %2717
    %2719 = vrot.lane.b32.xlu0 %v2172, 32
    %v2720 = vpop.permute.xlu0 %2719
    %2721 = vrot.lane.b32.xlu0 %v2173, 32
    %v2722 = vpop.permute.xlu0 %2721
    %2723 = vrot.lane.b32.xlu0 %v2174, 32
    %v2724 = vpop.permute.xlu0 %2723
    %2725 = vrot.lane.b32.xlu0 %v2175, 32
    %v2726 = vpop.permute.xlu0 %2725
    %2727 = vrot.lane.b32.xlu0 %v2176, 32
    %v2728 = vpop.permute.xlu0 %2727
    %2729 = vrot.lane.b32.xlu0 %v2177, 32
    %v2730 = vpop.permute.xlu0 %2729
    %2731 = vrot.lane.b32.xlu0 %v2178, 32
    %v2732 = vpop.permute.xlu0 %2731
    %2733 = vrot.lane.b32.xlu0 %v2179, 32
    %v2734 = vpop.permute.xlu0 %2733
    %2735 = vrot.lane.b32.xlu0 %v2180, 32
    %v2736 = vpop.permute.xlu0 %2735
    %2737 = vrot.lane.b32.xlu0 %v2181, 32
    %v2738 = vpop.permute.xlu0 %2737
    %2739 = vrot.lane.b32.xlu0 %v2182, 32
    %v2740 = vpop.permute.xlu0 %2739
    %2741 = vrot.lane.b32.xlu0 %v2183, 32
    %v2742 = vpop.permute.xlu0 %2741
    %2743 = vrot.lane.b32.xlu0 %v2184, 32
    %v2744 = vpop.permute.xlu0 %2743
    %2777 = vrot.lane.b32.xlu0 %v2281, 64
    %v2778 = vpop.permute.xlu0 %2777
    %2779 = vrot.lane.b32.xlu0 %v2282, 64
    %v2780 = vpop.permute.xlu0 %2779
    %2781 = vrot.lane.b32.xlu0 %v2283, 64
    %v2782 = vpop.permute.xlu0 %2781
    %2783 = vrot.lane.b32.xlu0 %v2284, 64
    %v2784 = vpop.permute.xlu0 %2783
    %2785 = vrot.lane.b32.xlu0 %v2285, 64
    %v2786 = vpop.permute.xlu0 %2785
    %2787 = vrot.lane.b32.xlu0 %v2286, 64
    %v2788 = vpop.permute.xlu0 %2787
    %2789 = vrot.lane.b32.xlu0 %v2287, 64
    %v2790 = vpop.permute.xlu0 %2789
    %2791 = vrot.lane.b32.xlu0 %v2288, 64
    %v2792 = vpop.permute.xlu0 %2791
    %2793 = vrot.lane.b32.xlu0 %v2289, 64
    %v2794 = vpop.permute.xlu0 %2793
    %2795 = vrot.lane.b32.xlu0 %v2290, 64
    %v2796 = vpop.permute.xlu0 %2795
    %2797 = vrot.lane.b32.xlu0 %v2291, 64
    %v2798 = vpop.permute.xlu0 %2797
    %2799 = vrot.lane.b32.xlu0 %v2292, 64
    %v2800 = vpop.permute.xlu0 %2799
    %2801 = vrot.lane.b32.xlu0 %v2293, 64
    %v2802 = vpop.permute.xlu0 %2801
    %2803 = vrot.lane.b32.xlu0 %v2294, 64
    %v2804 = vpop.permute.xlu0 %2803
    %2805 = vrot.lane.b32.xlu0 %v2295, 64
    %v2806 = vpop.permute.xlu0 %2805
    %2807 = vrot.lane.b32.xlu0 %v2296, 64
    %v2808 = vpop.permute.xlu0 %2807
    %2841 = vrot.lane.b32.xlu0 %v2361, 96
    %v2842 = vpop.permute.xlu0 %2841
    %2843 = vrot.lane.b32.xlu0 %v2362, 96
    %v2844 = vpop.permute.xlu0 %2843
    %2845 = vrot.lane.b32.xlu0 %v2363, 96
    %v2846 = vpop.permute.xlu0 %2845
    %2847 = vrot.lane.b32.xlu0 %v2364, 96
    %v2848 = vpop.permute.xlu0 %2847
    %2849 = vrot.lane.b32.xlu0 %v2365, 96
    %v2850 = vpop.permute.xlu0 %2849
    %2851 = vrot.lane.b32.xlu0 %v2366, 96
    %v2852 = vpop.permute.xlu0 %2851
    %2853 = vrot.lane.b32.xlu0 %v2367, 96
    %v2854 = vpop.permute.xlu0 %2853
    %2855 = vrot.lane.b32.xlu0 %v2368, 96
    %v2856 = vpop.permute.xlu0 %2855
    %2857 = vrot.lane.b32.xlu0 %v2369, 96
    %v2858 = vpop.permute.xlu0 %2857
    %2859 = vrot.lane.b32.xlu0 %v2370, 96
    %v2860 = vpop.permute.xlu0 %2859
    %2861 = vrot.lane.b32.xlu0 %v2371, 96
    %v2862 = vpop.permute.xlu0 %2861
    %2863 = vrot.lane.b32.xlu0 %v2372, 96
    %v2864 = vpop.permute.xlu0 %2863
    %2865 = vrot.lane.b32.xlu0 %v2373, 96
    %v2866 = vpop.permute.xlu0 %2865
    %2867 = vrot.lane.b32.xlu0 %v2374, 96
    %v2868 = vpop.permute.xlu0 %2867
    %2869 = vrot.lane.b32.xlu0 %v2375, 96
    %v2870 = vpop.permute.xlu0 %2869
    %2871 = vrot.lane.b32.xlu0 %v2376, 96
    %v2872 = vpop.permute.xlu0 %2871
    %2905 = vrot.lane.b32.xlu0 %v2441, 32
    %v2906 = vpop.permute.xlu0 %2905
    %2907 = vrot.lane.b32.xlu0 %v2442, 32
    %v2908 = vpop.permute.xlu0 %2907
    %2909 = vrot.lane.b32.xlu0 %v2443, 32
    %v2910 = vpop.permute.xlu0 %2909
    %2911 = vrot.lane.b32.xlu0 %v2444, 32
    %v2912 = vpop.permute.xlu0 %2911
    %2913 = vrot.lane.b32.xlu0 %v2445, 32
    %v2914 = vpop.permute.xlu0 %2913
    %2915 = vrot.lane.b32.xlu0 %v2446, 32
    %v2916 = vpop.permute.xlu0 %2915
    %2917 = vrot.lane.b32.xlu0 %v2447, 32
    %v2918 = vpop.permute.xlu0 %2917
    %2919 = vrot.lane.b32.xlu0 %v2448, 32
    %v2920 = vpop.permute.xlu0 %2919
    %2921 = vrot.lane.b32.xlu0 %v2449, 32
    %v2922 = vpop.permute.xlu0 %2921
    %2923 = vrot.lane.b32.xlu0 %v2450, 32
    %v2924 = vpop.permute.xlu0 %2923
    %2925 = vrot.lane.b32.xlu0 %v2451, 32
    %v2926 = vpop.permute.xlu0 %2925
    %2927 = vrot.lane.b32.xlu0 %v2452, 32
    %v2928 = vpop.permute.xlu0 %2927
    %2929 = vrot.lane.b32.xlu0 %v2453, 32
    %v2930 = vpop.permute.xlu0 %2929
    %2931 = vrot.lane.b32.xlu0 %v2454, 32
    %v2932 = vpop.permute.xlu0 %2931
    %2933 = vrot.lane.b32.xlu0 %v2455, 32
    %v2934 = vpop.permute.xlu0 %2933
    %2935 = vrot.lane.b32.xlu0 %v2456, 32
    %v2936 = vpop.permute.xlu0 %2935
    %2969 = vrot.lane.b32.xlu0 %v2521, 64
    %v2970 = vpop.permute.xlu0 %2969
    %2971 = vrot.lane.b32.xlu0 %v2522, 64
    %v2972 = vpop.permute.xlu0 %2971
    %2973 = vrot.lane.b32.xlu0 %v2523, 64
    %v2974 = vpop.permute.xlu0 %2973
    %2975 = vrot.lane.b32.xlu0 %v2524, 64
    %v2976 = vpop.permute.xlu0 %2975
    %2977 = vrot.lane.b32.xlu0 %v2525, 64
    %v2978 = vpop.permute.xlu0 %2977
    %2979 = vrot.lane.b32.xlu0 %v2526, 64
    %v2980 = vpop.permute.xlu0 %2979
    %2981 = vrot.lane.b32.xlu0 %v2527, 64
    %v2982 = vpop.permute.xlu0 %2981
    %2983 = vrot.lane.b32.xlu0 %v2528, 64
    %v2984 = vpop.permute.xlu0 %2983
    %2985 = vrot.lane.b32.xlu0 %v2529, 64
    %v2986 = vpop.permute.xlu0 %2985
    %2987 = vrot.lane.b32.xlu0 %v2530, 64
    %v2988 = vpop.permute.xlu0 %2987
    %2989 = vrot.lane.b32.xlu0 %v2531, 64
    %v2990 = vpop.permute.xlu0 %2989
    %2991 = vrot.lane.b32.xlu0 %v2532, 64
    %v2992 = vpop.permute.xlu0 %2991
    %2993 = vrot.lane.b32.xlu0 %v2533, 64
    %v2994 = vpop.permute.xlu0 %2993
    %2995 = vrot.lane.b32.xlu0 %v2534, 64
    %v2996 = vpop.permute.xlu0 %2995
    %2997 = vrot.lane.b32.xlu0 %v2535, 64
    %v2998 = vpop.permute.xlu0 %2997
    %2999 = vrot.lane.b32.xlu0 %v2536, 64
    %v3000 = vpop.permute.xlu0 %2999
    %3033 = vrot.lane.b32.xlu0 %v2601, 96
    %v3034 = vpop.permute.xlu0 %3033
    %3035 = vrot.lane.b32.xlu0 %v2602, 96
    %v3036 = vpop.permute.xlu0 %3035
    %3037 = vrot.lane.b32.xlu0 %v2603, 96
    %v3038 = vpop.permute.xlu0 %3037
    %3039 = vrot.lane.b32.xlu0 %v2604, 96
    %v3040 = vpop.permute.xlu0 %3039
    %3041 = vrot.lane.b32.xlu0 %v2605, 96
    %v3042 = vpop.permute.xlu0 %3041
    %3043 = vrot.lane.b32.xlu0 %v2606, 96
    %v3044 = vpop.permute.xlu0 %3043
    %3045 = vrot.lane.b32.xlu0 %v2607, 96
    %v3046 = vpop.permute.xlu0 %3045
    %3047 = vrot.lane.b32.xlu0 %v2608, 96
    %v3048 = vpop.permute.xlu0 %3047
    %3049 = vrot.lane.b32.xlu0 %v2609, 96
    %v3050 = vpop.permute.xlu0 %3049
    %3051 = vrot.lane.b32.xlu0 %v2610, 96
    %v3052 = vpop.permute.xlu0 %3051
    %3053 = vrot.lane.b32.xlu0 %v2611, 96
    %v3054 = vpop.permute.xlu0 %3053
    %3055 = vrot.lane.b32.xlu0 %v2612, 96
    %v3056 = vpop.permute.xlu0 %3055
    %3057 = vrot.lane.b32.xlu0 %v2613, 96
    %v3058 = vpop.permute.xlu0 %3057
    %3059 = vrot.lane.b32.xlu0 %v2614, 96
    %v3060 = vpop.permute.xlu0 %3059
    %3061 = vrot.lane.b32.xlu0 %v2615, 96
    %v3062 = vpop.permute.xlu0 %3061
    %3063 = vrot.lane.b32.xlu0 %v2616, 96
    %v3064 = vpop.permute.xlu0 %3063
    %v3081 = vsel %vm681, %v2089, %v2714
    %v3082 = vsel %vm681, %v2090, %v2716
    %v3083 = vsel %vm681, %v2091, %v2718
    %v3084 = vsel %vm681, %v2092, %v2720
    %v3085 = vsel %vm681, %v2093, %v2722
    %v3086 = vsel %vm681, %v2094, %v2724
    %v3087 = vsel %vm681, %v2095, %v2726
    %v3088 = vsel %vm681, %v2096, %v2728
    %v3089 = vsel %vm681, %v2097, %v2730
    %v3090 = vsel %vm681, %v2098, %v2732
    %v3091 = vsel %vm681, %v2099, %v2734
    %v3092 = vsel %vm681, %v2100, %v2736
    %v3093 = vsel %vm681, %v2101, %v2738
    %v3094 = vsel %vm681, %v2102, %v2740
    %v3095 = vsel %vm681, %v2103, %v2742
    %v3096 = vsel %vm681, %v2104, %v2744
    %vm3097 = vcmask 523264
    %v3098 = vsel %vm3097, %v3081, %v2778
    %v3099 = vsel %vm3097, %v3082, %v2780
    %v3100 = vsel %vm3097, %v3083, %v2782
    %v3101 = vsel %vm3097, %v3084, %v2784
    %v3102 = vsel %vm3097, %v3085, %v2786
    %v3103 = vsel %vm3097, %v3086, %v2788
    %v3104 = vsel %vm3097, %v3087, %v2790
    %v3105 = vsel %vm3097, %v3088, %v2792
    %v3106 = vsel %vm3097, %v3089, %v2794
    %v3107 = vsel %vm3097, %v3090, %v2796
    %v3108 = vsel %vm3097, %v3091, %v2798
    %v3109 = vsel %vm3097, %v3092, %v2800
    %v3110 = vsel %vm3097, %v3093, %v2802
    %v3111 = vsel %vm3097, %v3094, %v2804
    %v3112 = vsel %vm3097, %v3095, %v2806
    %v3113 = vsel %vm3097, %v3096, %v2808
    %vm3114 = vcmask 785408
    %v3115 = vsel %vm3114, %v3098, %v2842
    %v3116 = vsel %vm3114, %v3099, %v2844
    %v3117 = vsel %vm3114, %v3100, %v2846
    %v3118 = vsel %vm3114, %v3101, %v2848
    %v3119 = vsel %vm3114, %v3102, %v2850
    %v3120 = vsel %vm3114, %v3103, %v2852
    %v3121 = vsel %vm3114, %v3104, %v2854
    %v3122 = vsel %vm3114, %v3105, %v2856
    %v3123 = vsel %vm3114, %v3106, %v2858
    %v3124 = vsel %vm3114, %v3107, %v2860
    %v3125 = vsel %vm3114, %v3108, %v2862
    %v3126 = vsel %vm3114, %v3109, %v2864
    %v3127 = vsel %vm3114, %v3110, %v2866
    %v3128 = vsel %vm3114, %v3111, %v2868
    %v3129 = vsel %vm3114, %v3112, %v2870
    %v3130 = vsel %vm3114, %v3113, %v2872
    %v3131 = vsel %vm681, %v1882, %v2906
    %v3132 = vsel %vm681, %v1887, %v2908
    %v3133 = vsel %vm681, %v1892, %v2910
    %v3134 = vsel %vm681, %v1897, %v2912
    %v3135 = vsel %vm681, %v1902, %v2914
    %v3136 = vsel %vm681, %v1907, %v2916
    %v3137 = vsel %vm681, %v1912, %v2918
    %v3138 = vsel %vm681, %v1917, %v2920
    %v3139 = vsel %vm681, %v1922, %v2922
    %v3140 = vsel %vm681, %v1927, %v2924
    %v3141 = vsel %vm681, %v1932, %v2926
    %v3142 = vsel %vm681, %v1937, %v2928
    %v3143 = vsel %vm681, %v1942, %v2930
    %v3144 = vsel %vm681, %v1947, %v2932
    %v3145 = vsel %vm681, %v1952, %v2934
    %v3146 = vsel %vm681, %v1957, %v2936
    %v3147 = vsel %vm3097, %v3131, %v2970
    %v3148 = vsel %vm3097, %v3132, %v2972
    %v3149 = vsel %vm3097, %v3133, %v2974
    %v3150 = vsel %vm3097, %v3134, %v2976
    %v3151 = vsel %vm3097, %v3135, %v2978
    %v3152 = vsel %vm3097, %v3136, %v2980
    %v3153 = vsel %vm3097, %v3137, %v2982
    %v3154 = vsel %vm3097, %v3138, %v2984
    %v3155 = vsel %vm3097, %v3139, %v2986
    %v3156 = vsel %vm3097, %v3140, %v2988
    %v3157 = vsel %vm3097, %v3141, %v2990
    %v3158 = vsel %vm3097, %v3142, %v2992
    %v3159 = vsel %vm3097, %v3143, %v2994
    %v3160 = vsel %vm3097, %v3144, %v2996
    %v3161 = vsel %vm3097, %v3145, %v2998
    %v3162 = vsel %vm3097, %v3146, %v3000
    %v3163 = vsel %vm3114, %v3147, %v3034
    %v3164 = vsel %vm3114, %v3148, %v3036
    %v3165 = vsel %vm3114, %v3149, %v3038
    %v3166 = vsel %vm3114, %v3150, %v3040
    %v3167 = vsel %vm3114, %v3151, %v3042
    %v3168 = vsel %vm3114, %v3152, %v3044
    %v3169 = vsel %vm3114, %v3153, %v3046
    %v3170 = vsel %vm3114, %v3154, %v3048
    %v3171 = vsel %vm3114, %v3155, %v3050
    %v3172 = vsel %vm3114, %v3156, %v3052
    %v3173 = vsel %vm3114, %v3157, %v3054
    %v3174 = vsel %vm3114, %v3158, %v3056
    %v3175 = vsel %vm3114, %v3159, %v3058
    %v3176 = vsel %vm3114, %v3160, %v3060
    %v3177 = vsel %vm3114, %v3161, %v3062
    %v3178 = vsel %vm3114, %v3162, %v3064
    %v3179 = vpack.c.bf16 %v3116, %v3115
    %v3180 = vpack.c.bf16 %v3164, %v3163
    %v3181 = vpack.c.bf16 %v2682, %v2681
    %v3182 = vpack.c.bf16 %v3118, %v3117
    %v3183 = vpack.c.bf16 %v3166, %v3165
    %v3184 = vpack.c.bf16 %v2684, %v2683
    %v3185 = vpack.c.bf16 %v3120, %v3119
    %v3186 = vpack.c.bf16 %v3168, %v3167
    %v3187 = vpack.c.bf16 %v2686, %v2685
    %v3188 = vpack.c.bf16 %v3122, %v3121
    %v3189 = vpack.c.bf16 %v3170, %v3169
    %v3190 = vpack.c.bf16 %v2688, %v2687
    %v3191 = vpack.c.bf16 %v3124, %v3123
    %v3192 = vpack.c.bf16 %v3172, %v3171
    %v3193 = vpack.c.bf16 %v2690, %v2689
    %v3194 = vpack.c.bf16 %v3126, %v3125
    %v3195 = vpack.c.bf16 %v3174, %v3173
    %v3196 = vpack.c.bf16 %v2692, %v2691
    %v3197 = vpack.c.bf16 %v3128, %v3127
    %v3198 = vpack.c.bf16 %v3176, %v3175
    %v3199 = vpack.c.bf16 %v2694, %v2693
    %v3200 = vpack.c.bf16 %v3130, %v3129
    %v3201 = vpack.c.bf16 %v3178, %v3177
    %v3202 = vpack.c.bf16 %v2696, %v2695
    %v3203 = vld [vmem:[%s2] sm:$0xf]
    %v3204 = vld [vmem:[%s2 + $0x4] sm:$0xf]
    %v3205 = vld [vmem:[%s2 + $0x8] sm:$0xf]
    %v3206 = vld [vmem:[%s2 + $0xc] sm:$0xf]
    %v3207 = vld [vmem:[%s2 + $0x10] sm:$0xf]
    %v3208 = vld [vmem:[%s2 + $0x14] sm:$0xf]
    %v3209 = vld [vmem:[%s2 + $0x18] sm:$0xf]
    %v3210 = vld [vmem:[%s2 + $0x1c] sm:$0xf]
    %v3211 = vld [vmem:[%s2 + $0x20] sm:$0xf]
    %v3212 = vld [vmem:[%s2 + $0x24] sm:$0xf]
    %v3213 = vld [vmem:[%s2 + $0x28] sm:$0xf]
    %v3214 = vld [vmem:[%s2 + $0x2c] sm:$0xf]
    %v3215 = vld [vmem:[%s2 + $0x30] sm:$0xf]
    %v3216 = vld [vmem:[%s2 + $0x34] sm:$0xf]
    %v3217 = vld [vmem:[%s2 + $0x38] sm:$0xf]
    %v3218 = vld [vmem:[%s2 + $0x3c] sm:$0xf]
    %v3219 = vld [vmem:[%s2 + $0x40] sm:$0xf]
    %v3220 = vld [vmem:[%s2 + $0x44] sm:$0xf]
    %v3221 = vld [vmem:[%s2 + $0x48] sm:$0xf]
    %v3222 = vld [vmem:[%s2 + $0x4c] sm:$0xf]
    %v3223 = vld [vmem:[%s2 + $0x50] sm:$0xf]
    %v3224 = vld [vmem:[%s2 + $0x54] sm:$0xf]
    %v3225 = vld [vmem:[%s2 + $0x58] sm:$0xf]
    %v3226 = vld [vmem:[%s2 + $0x5c] sm:$0xf]
    %v3227 = vld [vmem:[%s2 + $0x60] sm:$0xf]
    %v3228 = vld [vmem:[%s2 + $0x64] sm:$0xf]
    %v3229 = vld [vmem:[%s2 + $0x68] sm:$0xf]
    %v3230 = vld [vmem:[%s2 + $0x6c] sm:$0xf]
    %v3231 = vld [vmem:[%s2 + $0x70] sm:$0xf]
    %v3232 = vld [vmem:[%s2 + $0x74] sm:$0xf]
    %v3233 = vld [vmem:[%s2 + $0x78] sm:$0xf]
    %v3234 = vld [vmem:[%s2 + $0x7c] sm:$0xf]
    %v3235 = vld [vmem:[%s2 + $0x80] sm:$0xf]
    %v3236 = vld [vmem:[%s2 + $0x84] sm:$0xf]
    %v3237 = vld [vmem:[%s2 + $0x88] sm:$0xf]
    %v3238 = vld [vmem:[%s2 + $0x8c] sm:$0xf]
    %v3275 = vunpack.c.l.b16 %v3203
    %v3276 = vunpack.c.l.b16 %v3204
    %v3277 = vunpack.c.l.b16 %v3205
    %v3278 = vunpack.c.l.b16 %v3206
    %v3279 = vunpack.c.l.b16 %v3207
    %v3280 = vunpack.c.l.b16 %v3208
    %v3281 = vunpack.c.l.b16 %v3209
    %v3282 = vunpack.c.l.b16 %v3210
    %v3283 = vunpack.c.l.b16 %v3211
    %v3284 = vunpack.c.l.b16 %v3212
    %v3285 = vunpack.c.l.b16 %v3213
    %v3286 = vunpack.c.l.b16 %v3214
    %v3287 = vunpack.c.l.b16 %v3215
    %v3288 = vunpack.c.l.b16 %v3216
    %v3289 = vunpack.c.l.b16 %v3217
    %v3290 = vunpack.c.l.b16 %v3218
    %v3291 = vunpack.c.l.b16 %v3219
    %v3292 = vunpack.c.l.b16 %v3220
    %v3293 = vunpack.c.l.b16 %v3221
    %v3294 = vunpack.c.l.b16 %v3222
    %v3295 = vunpack.c.l.b16 %v3223
    %v3296 = vunpack.c.l.b16 %v3224
    %v3297 = vunpack.c.l.b16 %v3225
    %v3298 = vunpack.c.l.b16 %v3226
    %v3299 = vunpack.c.l.b16 %v3227
    %v3300 = vunpack.c.l.b16 %v3228
    %v3301 = vunpack.c.l.b16 %v3229
    %v3302 = vunpack.c.l.b16 %v3230
    %v3303 = vunpack.c.l.b16 %v3231
    %v3304 = vunpack.c.l.b16 %v3232
    %v3305 = vunpack.c.l.b16 %v3233
    %v3306 = vunpack.c.l.b16 %v3234
    %v3307 = vunpack.c.l.b16 %v3235
    %v3308 = vunpack.c.l.b16 %v3236
    %v3309 = vunpack.c.l.b16 %v3237
    %v3310 = vunpack.c.l.b16 %v3238
    %v3311 = vpack.c.b16 %v3276, %v3275
    %v3312 = vpack.c.b16 %v3278, %v3277
    %v3313 = vpack.c.b16 %v3280, %v3279
    %v3314 = vpack.c.b16 %v3282, %v3281
    %v3315 = vpack.c.b16 %v3284, %v3283
    %v3316 = vpack.c.b16 %v3286, %v3285
    %v3317 = vpack.c.b16 %v3288, %v3287
    %v3318 = vpack.c.b16 %v3290, %v3289
    %v3319 = vpack.c.b16 %v3292, %v3291
    %v3320 = vpack.c.b16 %v3294, %v3293
    %v3321 = vpack.c.b16 %v3296, %v3295
    %v3322 = vpack.c.b16 %v3298, %v3297
    %v3323 = vpack.c.b16 %v3300, %v3299
    %v3324 = vpack.c.b16 %v3302, %v3301
    %v3325 = vpack.c.b16 %v3304, %v3303
    %v3326 = vpack.c.b16 %v3306, %v3305
    %v3327 = vpack.c.b16 %v3308, %v3307
    %v3328 = vpack.c.b16 %v3310, %v3309
    %v3348 = vsel %vm681, %v3181, 0
    %v3351 = vsel %vm681, %v3184, 0
    %v3354 = vsel %vm681, %v3187, 0
    %v3357 = vsel %vm681, %v3190, 0
    %v3360 = vsel %vm681, %v3193, 0
    %v3363 = vsel %vm681, %v3196, 0
    %v3366 = vsel %vm681, %v3199, 0
    %v3369 = vsel %vm681, %v3202, 0
    %3371 = vmatprep.subr.bf16.mxu0 0
    %3372 = vmatpush1.bf16.msra.mxu0 %v3318
    %3373 = vmatprep.subr.bf16.mxu0 0
    %3374 = vmatpush1.bf16.msra.mxu0 %v3317
    %3375 = vmatprep.subr.bf16.mxu0 0
    %3376 = vmatpush1.bf16.msra.mxu0 %v3316
    %3377 = vmatprep.subr.bf16.mxu0 0
    %3378 = vmatpush1.bf16.msra.mxu0 %v3315
    %3379 = vmatprep.subr.bf16.mxu0 0
    %3380 = vmatpush1.bf16.msra.mxu0 %v3314
    %3381 = vmatprep.subr.bf16.mxu0 0
    %3382 = vmatpush1.bf16.msra.mxu0 %v3313
    %3383 = vmatprep.subr.bf16.mxu0 0
    %3384 = vmatpush1.bf16.msra.mxu0 %v3312
    %3385 = vmatprep.subr.bf16.mxu0 0
    %3386 = vmatpush1.bf16.msra.mxu0 %v3311
    %3387 = vmatprep.subr.bf16.mxu0 0
    %3388 = vmatpush2.bf16.msra.mxu0 %v3326
    %3389 = vmatprep.subr.bf16.mxu0 0
    %3390 = vmatpush2.bf16.msra.mxu0 %v3325
    %3391 = vmatprep.subr.bf16.mxu0 0
    %3392 = vmatpush2.bf16.msra.mxu0 %v3324
    %3393 = vmatprep.subr.bf16.mxu0 0
    %3394 = vmatpush2.bf16.msra.mxu0 %v3323
    %3395 = vmatprep.subr.bf16.mxu0 0
    %3396 = vmatpush2.bf16.msra.mxu0 %v3322
    %3397 = vmatprep.subr.bf16.mxu0 0
    %3398 = vmatpush2.bf16.msra.mxu0 %v3321
    %3399 = vmatprep.subr.bf16.mxu0 0
    %3400 = vmatpush2.bf16.msra.mxu0 %v3320
    %3401 = vmatprep.subr.bf16.mxu0 0
    %3402 = vmatpush2.bf16.msra.mxu0 %v3319
    %3403 = vmatprep.mubr.bf16.mxu0 %v3180
    %3404 = vmatmul.mubr.bf16.gmra.mxu0 %v3179
    %v3405 = vpop.f32.mrf.mxu0
    %v3406 = vadd.f32 0.0, %v3405
    %v3407 = vpop.f32.mrf.mxu0
    %v3408 = vpop.f32.mrf.mxu0
    %v3409 = vadd.f32 0.0, %v3408
    %v3410 = vpop.f32.mrf.mxu0
    %3411 = vmatprep.mubr.bf16.mxu0 %v3183
    %3412 = vmatmul.mubr.bf16.gmra.mxu0 %v3182
    %v3413 = vpop.f32.mrf.mxu0
    %v3414 = vadd.f32 0.0, %v3413
    %v3415 = vpop.f32.mrf.mxu0
    %v3416 = vpop.f32.mrf.mxu0
    %v3417 = vadd.f32 0.0, %v3416
    %v3418 = vpop.f32.mrf.mxu0
    %3419 = vmatprep.mubr.bf16.mxu0 %v3186
    %3420 = vmatmul.mubr.bf16.gmra.mxu0 %v3185
    %v3421 = vpop.f32.mrf.mxu0
    %v3422 = vadd.f32 0.0, %v3421
    %v3423 = vpop.f32.mrf.mxu0
    %v3424 = vpop.f32.mrf.mxu0
    %v3425 = vadd.f32 0.0, %v3424
    %v3426 = vpop.f32.mrf.mxu0
    %3427 = vmatprep.mubr.bf16.mxu0 %v3189
    %3428 = vmatmul.mubr.bf16.gmra.mxu0 %v3188
    %v3429 = vpop.f32.mrf.mxu0
    %v3430 = vadd.f32 0.0, %v3429
    %v3431 = vpop.f32.mrf.mxu0
    %v3432 = vpop.f32.mrf.mxu0
    %v3433 = vadd.f32 0.0, %v3432
    %v3434 = vpop.f32.mrf.mxu0
    %3435 = vmatprep.mubr.bf16.mxu0 %v3192
    %3436 = vmatmul.mubr.bf16.gmra.mxu0 %v3191
    %v3437 = vpop.f32.mrf.mxu0
    %v3438 = vadd.f32 0.0, %v3437
    %v3439 = vpop.f32.mrf.mxu0
    %v3440 = vpop.f32.mrf.mxu0
    %v3441 = vadd.f32 0.0, %v3440
    %v3442 = vpop.f32.mrf.mxu0
    %3443 = vmatprep.mubr.bf16.mxu0 %v3195
    %3444 = vmatmul.mubr.bf16.gmra.mxu0 %v3194
    %v3445 = vpop.f32.mrf.mxu0
    %v3446 = vadd.f32 0.0, %v3445
    %v3447 = vpop.f32.mrf.mxu0
    %v3448 = vpop.f32.mrf.mxu0
    %v3449 = vadd.f32 0.0, %v3448
    %v3450 = vpop.f32.mrf.mxu0
    %3451 = vmatprep.mubr.bf16.mxu0 %v3198
    %3452 = vmatmul.mubr.bf16.gmra.mxu0 %v3197
    %v3453 = vpop.f32.mrf.mxu0
    %v3454 = vadd.f32 0.0, %v3453
    %v3455 = vpop.f32.mrf.mxu0
    %v3456 = vpop.f32.mrf.mxu0
    %v3457 = vadd.f32 0.0, %v3456
    %v3458 = vpop.f32.mrf.mxu0
    %3459 = vmatprep.mubr.bf16.mxu0 %v3201
    %3460 = vmatmul.mubr.bf16.gmra.mxu0 %v3200
    %v3461 = vpop.f32.mrf.mxu0
    %v3462 = vadd.f32 0.0, %v3461
    %v3463 = vpop.f32.mrf.mxu0
    %v3464 = vpop.f32.mrf.mxu0
    %v3465 = vadd.f32 0.0, %v3464
    %v3466 = vpop.f32.mrf.mxu0
    %3467 = vdwg.mxu0
    %3468 = vmatprep.subr.bf16.mxu0 0
    %3469 = vmatpush1.bf16.msra.mxu0 0
    %3470 = vmatprep.subr.bf16.mxu0 0
    %3471 = vmatpush1.bf16.msra.mxu0 0
    %3472 = vmatprep.subr.bf16.mxu0 0
    %3473 = vmatpush1.bf16.msra.mxu0 0
    %3474 = vmatprep.subr.bf16.mxu0 0
    %3475 = vmatpush1.bf16.msra.mxu0 0
    %3476 = vmatprep.subr.bf16.mxu0 0
    %3477 = vmatpush1.bf16.msra.mxu0 0
    %3478 = vmatprep.subr.bf16.mxu0 0
    %3479 = vmatpush1.bf16.msra.mxu0 0
    %3480 = vmatprep.subr.bf16.mxu0 0
    %3481 = vmatpush1.bf16.msra.mxu0 %v3328
    %3482 = vmatprep.subr.bf16.mxu0 0
    %3483 = vmatpush1.bf16.msra.mxu0 %v3327
    %3484 = vmatprep.subr.bf16.mxu0 0
    %3485 = vmatpush2.bf16.msra.mxu0 0
    %3486 = vmatprep.subr.bf16.mxu0 0
    %3487 = vmatpush2.bf16.msra.mxu0 0
    %3488 = vmatprep.subr.bf16.mxu0 0
    %3489 = vmatpush2.bf16.msra.mxu0 0
    %3490 = vmatprep.subr.bf16.mxu0 0
    %3491 = vmatpush2.bf16.msra.mxu0 0
    %3492 = vmatprep.subr.bf16.mxu0 0
    %3493 = vmatpush2.bf16.msra.mxu0 0
    %3494 = vmatprep.subr.bf16.mxu0 0
    %3495 = vmatpush2.bf16.msra.mxu0 0
    %3496 = vmatprep.subr.bf16.mxu0 0
    %3497 = vmatpush2.bf16.msra.mxu0 0
    %3498 = vmatprep.subr.bf16.mxu0 0
    %3499 = vmatpush2.bf16.msra.mxu0 0
    %3500 = vmatprep.mubr.bf16.mxu0 0
    %3501 = vmatmul.mubr.bf16.gmra.mxu0 %v3348
    %v3502 = vpop.f32.mrf.mxu0
    %v3503 = vadd.f32 %v3406, %v3502
    %v3504 = vpop.f32.mrf.mxu0
    %v3505 = vpop.f32.mrf.mxu0
    %v3506 = vadd.f32 %v3409, %v3505
    %v3507 = vpop.f32.mrf.mxu0
    %3508 = vmatprep.mubr.bf16.mxu0 0
    %3509 = vmatmul.mubr.bf16.gmra.mxu0 %v3351
    %v3510 = vpop.f32.mrf.mxu0
    %v3511 = vadd.f32 %v3414, %v3510
    %v3512 = vpop.f32.mrf.mxu0
    %v3513 = vpop.f32.mrf.mxu0
    %v3514 = vadd.f32 %v3417, %v3513
    %v3515 = vpop.f32.mrf.mxu0
    %3516 = vmatprep.mubr.bf16.mxu0 0
    %3517 = vmatmul.mubr.bf16.gmra.mxu0 %v3354
    %v3518 = vpop.f32.mrf.mxu0
    %v3519 = vadd.f32 %v3422, %v3518
    %v3520 = vpop.f32.mrf.mxu0
    %v3521 = vpop.f32.mrf.mxu0
    %v3522 = vadd.f32 %v3425, %v3521
    %v3523 = vpop.f32.mrf.mxu0
    %3524 = vmatprep.mubr.bf16.mxu0 0
    %3525 = vmatmul.mubr.bf16.gmra.mxu0 %v3357
    %v3526 = vpop.f32.mrf.mxu0
    %v3527 = vadd.f32 %v3430, %v3526
    %v3528 = vpop.f32.mrf.mxu0
    %v3529 = vpop.f32.mrf.mxu0
    %v3530 = vadd.f32 %v3433, %v3529
    %v3531 = vpop.f32.mrf.mxu0
    %3532 = vmatprep.mubr.bf16.mxu0 0
    %3533 = vmatmul.mubr.bf16.gmra.mxu0 %v3360
    %v3534 = vpop.f32.mrf.mxu0
    %v3535 = vadd.f32 %v3438, %v3534
    %v3536 = vpop.f32.mrf.mxu0
    %v3537 = vpop.f32.mrf.mxu0
    %v3538 = vadd.f32 %v3441, %v3537
    %v3539 = vpop.f32.mrf.mxu0
    %3540 = vmatprep.mubr.bf16.mxu0 0
    %3541 = vmatmul.mubr.bf16.gmra.mxu0 %v3363
    %v3542 = vpop.f32.mrf.mxu0
    %v3543 = vadd.f32 %v3446, %v3542
    %v3544 = vpop.f32.mrf.mxu0
    %v3545 = vpop.f32.mrf.mxu0
    %v3546 = vadd.f32 %v3449, %v3545
    %v3547 = vpop.f32.mrf.mxu0
    %3548 = vmatprep.mubr.bf16.mxu0 0
    %3549 = vmatmul.mubr.bf16.gmra.mxu0 %v3366
    %v3550 = vpop.f32.mrf.mxu0
    %v3551 = vadd.f32 %v3454, %v3550
    %v3552 = vpop.f32.mrf.mxu0
    %v3553 = vpop.f32.mrf.mxu0
    %v3554 = vadd.f32 %v3457, %v3553
    %v3555 = vpop.f32.mrf.mxu0
    %3556 = vmatprep.mubr.bf16.mxu0 0
    %3557 = vmatmul.mubr.bf16.gmra.mxu0 %v3369
    %v3558 = vpop.f32.mrf.mxu0
    %v3559 = vadd.f32 %v3462, %v3558
    %v3560 = vpop.f32.mrf.mxu0
    %v3561 = vpop.f32.mrf.mxu0
    %v3562 = vadd.f32 %v3465, %v3561
    %v3563 = vpop.f32.mrf.mxu0
    %3564 = vdwg.mxu0
    %v3565 = vsel %vm681, %v3503, 0.0
    %v3566 = vsel %vm681, %v3506, 0.0
    %v3567 = vadd.f32 %v3565, %v3566
    %v3568 = vsel %vm681, %v3511, 0.0
    %v3569 = vadd.f32 %v3567, %v3568
    %v3570 = vsel %vm681, %v3514, 0.0
    %v3571 = vadd.f32 %v3569, %v3570
    %v3572 = vsel %vm681, %v3519, 0.0
    %v3573 = vadd.f32 %v3571, %v3572
    %v3574 = vsel %vm681, %v3522, 0.0
    %v3575 = vadd.f32 %v3573, %v3574
    %v3576 = vsel %vm681, %v3527, 0.0
    %v3577 = vadd.f32 %v3575, %v3576
    %v3578 = vsel %vm681, %v3530, 0.0
    %v3579 = vadd.f32 %v3577, %v3578
    %v3580 = vsel %vm681, %v3535, 0.0
    %v3581 = vadd.f32 %v3579, %v3580
    %v3582 = vsel %vm681, %v3538, 0.0
    %v3583 = vadd.f32 %v3581, %v3582
    %v3584 = vsel %vm681, %v3543, 0.0
    %v3585 = vadd.f32 %v3583, %v3584
    %v3586 = vsel %vm681, %v3546, 0.0
    %v3587 = vadd.f32 %v3585, %v3586
    %v3588 = vsel %vm681, %v3551, 0.0
    %v3589 = vadd.f32 %v3587, %v3588
    %v3590 = vsel %vm681, %v3554, 0.0
    %v3591 = vadd.f32 %v3589, %v3590
    %v3592 = vsel %vm681, %v3559, 0.0
    %v3593 = vadd.f32 %v3591, %v3592
    %v3594 = vsel %vm681, %v3562, 0.0
    %v3595 = vadd.f32 %v3593, %v3594
    %v3596 = vrot.slane %v3595, 4
    %v3597 = vadd.f32 %v3595, %v3596
    %v3598 = vrot.slane %v3597, 2
    %v3599 = vadd.f32 %v3597, %v3598
    %v3600 = vrot.slane %v3599, 1
    %v3601 = vadd.f32 %v3599, %v3600
    %v3602 = vmul.f32 %v3601, 0.0078125
    %v3603 = vsub.f32 %v3503, %v3602
    %v3604 = vsub.f32 %v3506, %v3602
    %v3605 = vsub.f32 %v3511, %v3602
    %v3606 = vsub.f32 %v3514, %v3602
    %v3607 = vsub.f32 %v3519, %v3602
    %v3608 = vsub.f32 %v3522, %v3602
    %v3609 = vsub.f32 %v3527, %v3602
    %v3610 = vsub.f32 %v3530, %v3602
    %v3611 = vsub.f32 %v3535, %v3602
    %v3612 = vsub.f32 %v3538, %v3602
    %v3613 = vsub.f32 %v3543, %v3602
    %v3614 = vsub.f32 %v3546, %v3602
    %v3615 = vsub.f32 %v3551, %v3602
    %v3616 = vsub.f32 %v3554, %v3602
    %v3617 = vsub.f32 %v3559, %v3602
    %v3618 = vsub.f32 %v3562, %v3602
    %v3619 = vmul.f32 %v3603, %v3603
    %v3620 = vmul.f32 %v3604, %v3604
    %v3621 = vmul.f32 %v3605, %v3605
    %v3622 = vmul.f32 %v3606, %v3606
    %v3623 = vmul.f32 %v3607, %v3607
    %v3624 = vmul.f32 %v3608, %v3608
    %v3625 = vmul.f32 %v3609, %v3609
    %v3626 = vmul.f32 %v3610, %v3610
    %v3627 = vmul.f32 %v3611, %v3611
    %v3628 = vmul.f32 %v3612, %v3612
    %v3629 = vmul.f32 %v3613, %v3613
    %v3630 = vmul.f32 %v3614, %v3614
    %v3631 = vmul.f32 %v3615, %v3615
    %v3632 = vmul.f32 %v3616, %v3616
    %v3633 = vmul.f32 %v3617, %v3617
    %v3634 = vmul.f32 %v3618, %v3618
    %v3635 = vsel %vm681, %v3619, 0.0
    %v3636 = vsel %vm681, %v3620, 0.0
    %v3637 = vadd.f32 %v3635, %v3636
    %v3638 = vsel %vm681, %v3621, 0.0
    %v3639 = vadd.f32 %v3637, %v3638
    %v3640 = vsel %vm681, %v3622, 0.0
    %v3641 = vadd.f32 %v3639, %v3640
    %v3642 = vsel %vm681, %v3623, 0.0
    %v3643 = vadd.f32 %v3641, %v3642
    %v3644 = vsel %vm681, %v3624, 0.0
    %v3645 = vadd.f32 %v3643, %v3644
    %v3646 = vsel %vm681, %v3625, 0.0
    %v3647 = vadd.f32 %v3645, %v3646
    %v3648 = vsel %vm681, %v3626, 0.0
    %v3649 = vadd.f32 %v3647, %v3648
    %v3650 = vsel %vm681, %v3627, 0.0
    %v3651 = vadd.f32 %v3649, %v3650
    %v3652 = vsel %vm681, %v3628, 0.0
    %v3653 = vadd.f32 %v3651, %v3652
    %v3654 = vsel %vm681, %v3629, 0.0
    %v3655 = vadd.f32 %v3653, %v3654
    %v3656 = vsel %vm681, %v3630, 0.0
    %v3657 = vadd.f32 %v3655, %v3656
    %v3658 = vsel %vm681, %v3631, 0.0
    %v3659 = vadd.f32 %v3657, %v3658
    %v3660 = vsel %vm681, %v3632, 0.0
    %v3661 = vadd.f32 %v3659, %v3660
    %v3662 = vsel %vm681, %v3633, 0.0
    %v3663 = vadd.f32 %v3661, %v3662
    %v3664 = vsel %vm681, %v3634, 0.0
    %v3665 = vadd.f32 %v3663, %v3664
    %v3666 = vrot.slane %v3665, 4
    %v3667 = vadd.f32 %v3665, %v3666
    %v3668 = vrot.slane %v3667, 2
    %v3669 = vadd.f32 %v3667, %v3668
    %v3670 = vrot.slane %v3669, 1
    %v3671 = vadd.f32 %v3669, %v3670
    %v3672 = vmul.f32 %v3671, 0.0078125
    %v3673 = vld [vmem:[%s3 + $0x1] sm:$0x1]
    %v3674 = vadd.f32 %v3672, 1e-05
    %v3675 = vrsqrt.pop %v3674
    %v3676 = vmul.f32 %v3673, %v3675
    %v3677 = vlaneseq
    %v3678 = vshrl.u32 %v3677, 7
    %v3679 = vsub.s32 0, %v3678
    %v3680 = vrot.slane %v3676, %v3679
    %v3681 = vmul.f32 %v3603, %v3680
    %v3682 = vmul.f32 %v3604, %v3680
    %v3683 = vmul.f32 %v3605, %v3680
    %v3684 = vmul.f32 %v3606, %v3680
    %v3685 = vmul.f32 %v3607, %v3680
    %v3686 = vmul.f32 %v3608, %v3680
    %v3687 = vmul.f32 %v3609, %v3680
    %v3688 = vmul.f32 %v3610, %v3680
    %v3689 = vmul.f32 %v3611, %v3680
    %v3690 = vmul.f32 %v3612, %v3680
    %v3691 = vmul.f32 %v3613, %v3680
    %v3692 = vmul.f32 %v3614, %v3680
    %v3693 = vmul.f32 %v3615, %v3680
    %v3694 = vmul.f32 %v3616, %v3680
    %v3695 = vmul.f32 %v3617, %v3680
    %v3696 = vmul.f32 %v3618, %v3680
    %v3697 = vld [vmem:[%s4 + $0x1] sm:$0x1]
    %v3698 = vlaneseq
    %v3699 = vshrl.u32 %v3698, 7
    %v3700 = vsub.s32 0, %v3699
    %v3701 = vrot.slane %v3697, %v3700
    %v3702 = vadd.f32 %v3681, %v3701
    %v3703 = vadd.f32 %v3682, %v3701
    %v3704 = vadd.f32 %v3683, %v3701
    %v3705 = vadd.f32 %v3684, %v3701
    %v3706 = vadd.f32 %v3685, %v3701
    %v3707 = vadd.f32 %v3686, %v3701
    %v3708 = vadd.f32 %v3687, %v3701
    %v3709 = vadd.f32 %v3688, %v3701
    %v3710 = vadd.f32 %v3689, %v3701
    %v3711 = vadd.f32 %v3690, %v3701
    %v3712 = vadd.f32 %v3691, %v3701
    %v3713 = vadd.f32 %v3692, %v3701
    %v3714 = vadd.f32 %v3693, %v3701
    %v3715 = vadd.f32 %v3694, %v3701
    %v3716 = vadd.f32 %v3695, %v3701
    %v3717 = vadd.f32 %v3696, %v3701
    %v3718 = vmax.f32 %v3702, 0.0
    %v3719 = vmax.f32 %v3703, 0.0
    %v3720 = vmax.f32 %v3704, 0.0
    %v3721 = vmax.f32 %v3705, 0.0
    %v3722 = vmax.f32 %v3706, 0.0
    %v3723 = vmax.f32 %v3707, 0.0
    %v3724 = vmax.f32 %v3708, 0.0
    %v3725 = vmax.f32 %v3709, 0.0
    %v3726 = vmax.f32 %v3710, 0.0
    %v3727 = vmax.f32 %v3711, 0.0
    %v3728 = vmax.f32 %v3712, 0.0
    %v3729 = vmax.f32 %v3713, 0.0
    %v3730 = vmax.f32 %v3714, 0.0
    %v3731 = vmax.f32 %v3715, 0.0
    %v3732 = vmax.f32 %v3716, 0.0
    %v3733 = vmax.f32 %v3717, 0.0
    %v3734 = vrot.slane %v3718, 1
    %v3735 = vrot.slane %v3719, 1
    %v3736 = vrot.slane %v3720, 1
    %v3737 = vrot.slane %v3721, 1
    %v3738 = vrot.slane %v3722, 1
    %v3739 = vrot.slane %v3723, 1
    %v3740 = vrot.slane %v3724, 1
    %v3741 = vrot.slane %v3725, 1
    %v3742 = vrot.slane %v3726, 1
    %v3743 = vrot.slane %v3727, 1
    %v3744 = vrot.slane %v3728, 1
    %v3745 = vrot.slane %v3729, 1
    %v3746 = vrot.slane %v3730, 1
    %v3747 = vrot.slane %v3731, 1
    %v3748 = vrot.slane %v3732, 1
    %v3749 = vrot.slane %v3733, 1
    %v3750 = vsel %vm1349, %v3748, %v3749
    %v3751 = vsel %vm1349, %v3747, %v3748
    %v3752 = vsel %vm1349, %v3746, %v3747
    %v3753 = vsel %vm1349, %v3745, %v3746
    %v3754 = vsel %vm1349, %v3744, %v3745
    %v3755 = vsel %vm1349, %v3743, %v3744
    %v3756 = vsel %vm1349, %v3742, %v3743
    %v3757 = vsel %vm1349, %v3741, %v3742
    %v3758 = vsel %vm1349, %v3740, %v3741
    %v3759 = vsel %vm1349, %v3739, %v3740
    %v3760 = vsel %vm1349, %v3738, %v3739
    %v3761 = vsel %vm1349, %v3737, %v3738
    %v3762 = vsel %vm1349, %v3736, %v3737
    %v3763 = vsel %vm1349, %v3735, %v3736
    %v3764 = vsel %vm1349, %v3734, %v3735
    %v3765 = vsel %vm1349, %v3749, %v3734
    %v3766 = vmax.f32 %v3718, %v3764
    %v3767 = vmax.f32 %v3719, %v3763
    %v3768 = vmax.f32 %v3720, %v3762
    %v3769 = vmax.f32 %v3721, %v3761
    %v3770 = vmax.f32 %v3722, %v3760
    %v3771 = vmax.f32 %v3723, %v3759
    %v3772 = vmax.f32 %v3724, %v3758
    %v3773 = vmax.f32 %v3725, %v3757
    %v3774 = vmax.f32 %v3726, %v3756
    %v3775 = vmax.f32 %v3727, %v3755
    %v3776 = vmax.f32 %v3728, %v3754
    %v3777 = vmax.f32 %v3729, %v3753
    %v3778 = vmax.f32 %v3730, %v3752
    %v3779 = vmax.f32 %v3731, %v3751
    %v3780 = vmax.f32 %v3732, %v3750
    %v3781 = vmax.f32 %v3733, %v3765
    %v3782 = vmax.f32 %v3766, %v3719
    %v3783 = vmax.f32 %v3767, %v3720
    %v3784 = vmax.f32 %v3768, %v3721
    %v3785 = vmax.f32 %v3769, %v3722
    %v3786 = vmax.f32 %v3770, %v3723
    %v3787 = vmax.f32 %v3771, %v3724
    %v3788 = vmax.f32 %v3772, %v3725
    %v3789 = vmax.f32 %v3773, %v3726
    %v3790 = vmax.f32 %v3774, %v3727
    %v3791 = vmax.f32 %v3775, %v3728
    %v3792 = vmax.f32 %v3776, %v3729
    %v3793 = vmax.f32 %v3777, %v3730
    %v3794 = vmax.f32 %v3778, %v3731
    %v3795 = vmax.f32 %v3779, %v3732
    %v3796 = vmax.f32 %v3780, %v3733
    %v3797 = vmax.f32 %v3781, %v3718
    %v3798 = vmax.f32 %v3782, %v3763
    %v3799 = vmax.f32 %v3783, %v3762
    %v3800 = vmax.f32 %v3784, %v3761
    %v3801 = vmax.f32 %v3785, %v3760
    %v3802 = vmax.f32 %v3786, %v3759
    %v3803 = vmax.f32 %v3787, %v3758
    %v3804 = vmax.f32 %v3788, %v3757
    %v3805 = vmax.f32 %v3789, %v3756
    %v3806 = vmax.f32 %v3790, %v3755
    %v3807 = vmax.f32 %v3791, %v3754
    %v3808 = vmax.f32 %v3792, %v3753
    %v3809 = vmax.f32 %v3793, %v3752
    %v3810 = vmax.f32 %v3794, %v3751
    %v3811 = vmax.f32 %v3795, %v3750
    %v3812 = vmax.f32 %v3796, %v3765
    %v3813 = vmax.f32 %v3797, %v3764
    %v3814 = vld [vmem:[%s9] sm:$0xff]
    %v3815 = vld [vmem:[%s9 + $0x8] sm:$0xff]
    %v3816 = vld [vmem:[%s9 + $0x10] sm:$0xff]
    %v3817 = vld [vmem:[%s9 + $0x18] sm:$0xff]
    %3818 = vmatprep.subr.mxu0 0.0
    %3819 = vmatpush1.msra.mxu0 %v3813
    %3820 = vmatprep.subr.mxu0 0.0
    %3821 = vmatpush1.msra.mxu0 %v3812
    %3822 = vmatprep.subr.mxu0 0.0
    %3823 = vmatpush1.msra.mxu0 %v3811
    %3824 = vmatprep.subr.mxu0 0.0
    %3825 = vmatpush1.msra.mxu0 %v3810
    %3826 = vmatprep.subr.mxu0 0.0
    %3827 = vmatpush1.msra.mxu0 %v3809
    %3828 = vmatprep.subr.mxu0 0.0
    %3829 = vmatpush1.msra.mxu0 %v3808
    %3830 = vmatprep.subr.mxu0 0.0
    %3831 = vmatpush1.msra.mxu0 %v3807
    %3832 = vmatprep.subr.mxu0 0.0
    %3833 = vmatpush1.msra.mxu0 %v3806
    %3834 = vmatprep.subr.mxu0 0.0
    %3835 = vmatpush1.msra.mxu0 %v3805
    %3836 = vmatprep.subr.mxu0 0.0
    %3837 = vmatpush1.msra.mxu0 %v3804
    %3838 = vmatprep.subr.mxu0 0.0
    %3839 = vmatpush1.msra.mxu0 %v3803
    %3840 = vmatprep.subr.mxu0 0.0
    %3841 = vmatpush1.msra.mxu0 %v3802
    %3842 = vmatprep.subr.mxu0 0.0
    %3843 = vmatpush1.msra.mxu0 %v3801
    %3844 = vmatprep.subr.mxu0 0.0
    %3845 = vmatpush1.msra.mxu0 %v3800
    %3846 = vmatprep.subr.mxu0 0.0
    %3847 = vmatpush1.msra.mxu0 %v3799
    %3848 = vmatprep.subr.mxu0 0.0
    %3849 = vmatpush1.msra.mxu0 %v3798
    %3850 = vmatprep.subr.mxu0 0.0
    %3851 = vmatpush2.msra.mxu0 0.0
    %3852 = vmatprep.subr.mxu0 0.0
    %3853 = vmatpush2.msra.mxu0 0.0
    %3854 = vmatprep.subr.mxu0 0.0
    %3855 = vmatpush2.msra.mxu0 0.0
    %3856 = vmatprep.subr.mxu0 0.0
    %3857 = vmatpush2.msra.mxu0 0.0
    %3858 = vmatprep.subr.mxu0 0.0
    %3859 = vmatpush2.msra.mxu0 0.0
    %3860 = vmatprep.subr.mxu0 0.0
    %3861 = vmatpush2.msra.mxu0 0.0
    %3862 = vmatprep.subr.mxu0 0.0
    %3863 = vmatpush2.msra.mxu0 0.0
    %3864 = vmatprep.subr.mxu0 0.0
    %3865 = vmatpush2.msra.mxu0 0.0
    %3866 = vmatprep.subr.mxu0 0.0
    %3867 = vmatpush2.msra.mxu0 0.0
    %3868 = vmatprep.subr.mxu0 0.0
    %3869 = vmatpush2.msra.mxu0 0.0
    %3870 = vmatprep.subr.mxu0 0.0
    %3871 = vmatpush2.msra.mxu0 0.0
    %3872 = vmatprep.subr.mxu0 0.0
    %3873 = vmatpush2.msra.mxu0 0.0
    %3874 = vmatprep.subr.mxu0 0.0
    %3875 = vmatpush2.msra.mxu0 0.0
    %3876 = vmatprep.subr.mxu0 0.0
    %3877 = vmatpush2.msra.mxu0 0.0
    %3878 = vmatprep.subr.mxu0 0.0
    %3879 = vmatpush2.msra.mxu0 0.0
    %3880 = vmatprep.subr.mxu0 0.0
    %3881 = vmatpush2.msra.mxu0 0.0
    %3882 = vmatprep.mubr.f32.mxu0 0.0
    %3883 = vmatmul.mubr.f32.gmra.mxu0 %v3814
    %v3884 = vpop.f32.mrf.mxu0
    %v3885 = vadd.f32 0.0, %v3884
    %v3886 = vpop.f32.mrf.mxu0
    %3887 = vmatprep.mubr.f32.mxu0 0.0
    %3888 = vmatmul.mubr.f32.gmra.mxu0 %v3815
    %v3889 = vpop.f32.mrf.mxu0
    %v3890 = vadd.f32 0.0, %v3889
    %v3891 = vpop.f32.mrf.mxu0
    %3892 = vmatprep.mubr.f32.mxu0 0.0
    %3893 = vmatmul.mubr.f32.gmra.mxu0 %v3816
    %v3894 = vpop.f32.mrf.mxu0
    %v3895 = vadd.f32 0.0, %v3894
    %v3896 = vpop.f32.mrf.mxu0
    %3897 = vmatprep.mubr.f32.mxu0 0.0
    %3898 = vmatmul.mubr.f32.gmra.mxu0 %v3817
    %v3899 = vpop.f32.mrf.mxu0
    %v3900 = vadd.f32 0.0, %v3899
    %v3901 = vpop.f32.mrf.mxu0
    %3902 = vdwg.mxu0
    %v3903 = vld [vmem:[%s6] sm:$0xff]
    %v3904 = vld [vmem:[%s6 + $0x8] sm:$0xff]
    %v3905 = vld [vmem:[%s6 + $0x10] sm:$0xff]
    %v3906 = vld [vmem:[%s6 + $0x18] sm:$0xff]
    %v3907 = vrot.slane %v3885, 3
    %v3908 = vrot.slane %v3890, 3
    %v3909 = vrot.slane %v3895, 3
    %v3910 = vrot.slane %v3900, 3
    %vm3911 = vcmp.lt.s32.totalorder %v1348, 5
    %v3912 = vsel %vm3911, %v3909, %v3910
    %v3913 = vsel %vm3911, %v3908, %v3909
    %v3914 = vsel %vm3911, %v3907, %v3908
    %v3915 = vsel %vm3911, %v3910, %v3907
    %3917 = vset.pattern.permute.xlu0 0
    %3918 = vperm.xlu0 %3917, %v3903
    %v3919 = vpop.permute.xlu0 %3918
    %3922 = vset.pattern.permute.xlu0 0
    %3923 = vperm.xlu0 %3922, %v3904
    %v3924 = vpop.permute.xlu0 %3923
    %3927 = vset.pattern.permute.xlu0 0
    %3928 = vperm.xlu0 %3927, %v3905
    %v3929 = vpop.permute.xlu0 %3928
    %3932 = vset.pattern.permute.xlu0 0
    %3933 = vperm.xlu0 %3932, %v3906
    %v3934 = vpop.permute.xlu0 %3933
    %v3936 = vmul.f32 %v3915, %v3919
    %v3937 = vmul.f32 %v3914, %v3924
    %v3938 = vmul.f32 %v3913, %v3929
    %v3939 = vmul.f32 %v3912, %v3934
    %v3940 = vrot.slane %v3885, 4
    %v3941 = vrot.slane %v3890, 4
    %v3942 = vrot.slane %v3895, 4
    %v3943 = vrot.slane %v3900, 4
    %vm3944 = vcmp.lt.s32.totalorder %v1348, 4
    %v3945 = vsel %vm3944, %v3942, %v3943
    %v3946 = vsel %vm3944, %v3941, %v3942
    %v3947 = vsel %vm3944, %v3940, %v3941
    %v3948 = vsel %vm3944, %v3943, %v3940
    %3949 = vset.pattern.permute.xlu0 1
    %3950 = vperm.xlu0 %3949, %v3903
    %v3951 = vpop.permute.xlu0 %3950
    %3953 = vset.pattern.permute.xlu0 1
    %3954 = vperm.xlu0 %3953, %v3904
    %v3955 = vpop.permute.xlu0 %3954
    %3957 = vset.pattern.permute.xlu0 1
    %3958 = vperm.xlu0 %3957, %v3905
    %v3959 = vpop.permute.xlu0 %3958
    %3961 = vset.pattern.permute.xlu0 1
    %3962 = vperm.xlu0 %3961, %v3906
    %v3963 = vpop.permute.xlu0 %3962
    %v3965 = vmul.f32 %v3948, %v3951
    %v3966 = vmul.f32 %v3947, %v3955
    %v3967 = vmul.f32 %v3946, %v3959
    %v3968 = vmul.f32 %v3945, %v3963
    %v3969 = vrot.slane %v3885, 5
    %v3970 = vrot.slane %v3890, 5
    %v3971 = vrot.slane %v3895, 5
    %v3972 = vrot.slane %v3900, 5
    %vm3973 = vcmp.lt.s32.totalorder %v1348, 3
    %v3974 = vsel %vm3973, %v3971, %v3972
    %v3975 = vsel %vm3973, %v3970, %v3971
    %v3976 = vsel %vm3973, %v3969, %v3970
    %v3977 = vsel %vm3973, %v3972, %v3969
    %3978 = vset.pattern.permute.xlu0 2
    %3979 = vperm.xlu0 %3978, %v3903
    %v3980 = vpop.permute.xlu0 %3979
    %3982 = vset.pattern.permute.xlu0 2
    %3983 = vperm.xlu0 %3982, %v3904
    %v3984 = vpop.permute.xlu0 %3983
    %3986 = vset.pattern.permute.xlu0 2
    %3987 = vperm.xlu0 %3986, %v3905
    %v3988 = vpop.permute.xlu0 %3987
    %3990 = vset.pattern.permute.xlu0 2
    %3991 = vperm.xlu0 %3990, %v3906
    %v3992 = vpop.permute.xlu0 %3991
    %v3994 = vmul.f32 %v3977, %v3980
    %v3995 = vmul.f32 %v3976, %v3984
    %v3996 = vmul.f32 %v3975, %v3988
    %v3997 = vmul.f32 %v3974, %v3992
    %v3998 = vrot.slane %v3885, 7
    %v3999 = vrot.slane %v3890, 7
    %v4000 = vrot.slane %v3895, 7
    %v4001 = vrot.slane %v3900, 7
    %v4002 = vsel %vm1992, %v4000, %v4001
    %v4003 = vsel %vm1992, %v3999, %v4000
    %v4004 = vsel %vm1992, %v3998, %v3999
    %v4005 = vsel %vm1992, %v4001, %v3998
    %4006 = vset.pattern.permute.xlu0 3
    %4007 = vperm.xlu0 %4006, %v3903
    %v4008 = vpop.permute.xlu0 %4007
    %4010 = vset.pattern.permute.xlu0 3
    %4011 = vperm.xlu0 %4010, %v3904
    %v4012 = vpop.permute.xlu0 %4011
    %4014 = vset.pattern.permute.xlu0 3
    %4015 = vperm.xlu0 %4014, %v3905
    %v4016 = vpop.permute.xlu0 %4015
    %4018 = vset.pattern.permute.xlu0 3
    %4019 = vperm.xlu0 %4018, %v3906
    %v4020 = vpop.permute.xlu0 %4019
    %v4022 = vmul.f32 %v4005, %v4008
    %v4023 = vmul.f32 %v4004, %v4012
    %v4024 = vmul.f32 %v4003, %v4016
    %v4025 = vmul.f32 %v4002, %v4020
    %v4026 = vrot.slane %v3885, 1
    %v4027 = vrot.slane %v3890, 1
    %v4028 = vrot.slane %v3895, 1
    %v4029 = vrot.slane %v3900, 1
    %v4030 = vsel %vm1349, %v4028, %v4029
    %v4031 = vsel %vm1349, %v4027, %v4028
    %v4032 = vsel %vm1349, %v4026, %v4027
    %v4033 = vsel %vm1349, %v4029, %v4026
    %4034 = vset.pattern.permute.xlu0 5
    %4035 = vperm.xlu0 %4034, %v3903
    %v4036 = vpop.permute.xlu0 %4035
    %4038 = vset.pattern.permute.xlu0 5
    %4039 = vperm.xlu0 %4038, %v3904
    %v4040 = vpop.permute.xlu0 %4039
    %4042 = vset.pattern.permute.xlu0 5
    %4043 = vperm.xlu0 %4042, %v3905
    %v4044 = vpop.permute.xlu0 %4043
    %4046 = vset.pattern.permute.xlu0 5
    %4047 = vperm.xlu0 %4046, %v3906
    %v4048 = vpop.permute.xlu0 %4047
    %v4050 = vmul.f32 %v4032, %v4036
    %v4051 = vmul.f32 %v4031, %v4040
    %v4052 = vmul.f32 %v4030, %v4044
    %v4053 = vmul.f32 %v4033, %v4048
    %4054 = vset.pattern.permute.xlu0 6
    %4055 = vperm.xlu0 %4054, %v3903
    %v4056 = vpop.permute.xlu0 %4055
    %4058 = vset.pattern.permute.xlu0 6
    %4059 = vperm.xlu0 %4058, %v3904
    %v4060 = vpop.permute.xlu0 %4059
    %4062 = vset.pattern.permute.xlu0 6
    %4063 = vperm.xlu0 %4062, %v3905
    %v4064 = vpop.permute.xlu0 %4063
    %4066 = vset.pattern.permute.xlu0 6
    %4067 = vperm.xlu0 %4066, %v3906
    %v4068 = vpop.permute.xlu0 %4067
    %v4070 = vmul.f32 %v3914, %v4056
    %v4071 = vmul.f32 %v3913, %v4060
    %v4072 = vmul.f32 %v3912, %v4064
    %v4073 = vmul.f32 %v3915, %v4068
    %4074 = vset.pattern.permute.xlu0 7
    %4075 = vperm.xlu0 %4074, %v3903
    %v4076 = vpop.permute.xlu0 %4075
    %4078 = vset.pattern.permute.xlu0 7
    %4079 = vperm.xlu0 %4078, %v3904
    %v4080 = vpop.permute.xlu0 %4079
    %4082 = vset.pattern.permute.xlu0 7
    %4083 = vperm.xlu0 %4082, %v3905
    %v4084 = vpop.permute.xlu0 %4083
    %4086 = vset.pattern.permute.xlu0 7
    %4087 = vperm.xlu0 %4086, %v3906
    %v4088 = vpop.permute.xlu0 %4087
    %v4090 = vmul.f32 %v3947, %v4076
    %v4091 = vmul.f32 %v3946, %v4080
    %v4092 = vmul.f32 %v3945, %v4084
    %v4093 = vmul.f32 %v3948, %v4088
    %4094 = vset.pattern.permute.xlu0 8
    %4095 = vperm.xlu0 %4094, %v3903
    %v4096 = vpop.permute.xlu0 %4095
    %4098 = vset.pattern.permute.xlu0 8
    %4099 = vperm.xlu0 %4098, %v3904
    %v4100 = vpop.permute.xlu0 %4099
    %4102 = vset.pattern.permute.xlu0 8
    %4103 = vperm.xlu0 %4102, %v3905
    %v4104 = vpop.permute.xlu0 %4103
    %4106 = vset.pattern.permute.xlu0 8
    %4107 = vperm.xlu0 %4106, %v3906
    %v4108 = vpop.permute.xlu0 %4107
    %v4110 = vmul.f32 %v3976, %v4096
    %v4111 = vmul.f32 %v3975, %v4100
    %v4112 = vmul.f32 %v3974, %v4104
    %v4113 = vmul.f32 %v3977, %v4108
    %4118 = vrot.lane.b32.xlu0 %v3965, 32
    %v4119 = vpop.permute.xlu0 %4118
    %4120 = vrot.lane.b32.xlu0 %v3966, 32
    %v4121 = vpop.permute.xlu0 %4120
    %4122 = vrot.lane.b32.xlu0 %v3967, 32
    %v4123 = vpop.permute.xlu0 %4122
    %4124 = vrot.lane.b32.xlu0 %v3968, 32
    %v4125 = vpop.permute.xlu0 %4124
    %4134 = vrot.lane.b32.xlu0 %v3994, 64
    %v4135 = vpop.permute.xlu0 %4134
    %4136 = vrot.lane.b32.xlu0 %v3995, 64
    %v4137 = vpop.permute.xlu0 %4136
    %4138 = vrot.lane.b32.xlu0 %v3996, 64
    %v4139 = vpop.permute.xlu0 %4138
    %4140 = vrot.lane.b32.xlu0 %v3997, 64
    %v4141 = vpop.permute.xlu0 %4140
    %4150 = vrot.lane.b32.xlu0 %v4022, 96
    %v4151 = vpop.permute.xlu0 %4150
    %4152 = vrot.lane.b32.xlu0 %v4023, 96
    %v4153 = vpop.permute.xlu0 %4152
    %4154 = vrot.lane.b32.xlu0 %v4024, 96
    %v4155 = vpop.permute.xlu0 %4154
    %4156 = vrot.lane.b32.xlu0 %v4025, 96
    %v4157 = vpop.permute.xlu0 %4156
    %4166 = vrot.lane.b32.xlu0 %v4050, 32
    %v4167 = vpop.permute.xlu0 %4166
    %4168 = vrot.lane.b32.xlu0 %v4051, 32
    %v4169 = vpop.permute.xlu0 %4168
    %4170 = vrot.lane.b32.xlu0 %v4052, 32
    %v4171 = vpop.permute.xlu0 %4170
    %4172 = vrot.lane.b32.xlu0 %v4053, 32
    %v4173 = vpop.permute.xlu0 %4172
    %4182 = vrot.lane.b32.xlu0 %v4070, 64
    %v4183 = vpop.permute.xlu0 %4182
    %4184 = vrot.lane.b32.xlu0 %v4071, 64
    %v4185 = vpop.permute.xlu0 %4184
    %4186 = vrot.lane.b32.xlu0 %v4072, 64
    %v4187 = vpop.permute.xlu0 %4186
    %4188 = vrot.lane.b32.xlu0 %v4073, 64
    %v4189 = vpop.permute.xlu0 %4188
    %4198 = vrot.lane.b32.xlu0 %v4090, 96
    %v4199 = vpop.permute.xlu0 %4198
    %4200 = vrot.lane.b32.xlu0 %v4091, 96
    %v4201 = vpop.permute.xlu0 %4200
    %4202 = vrot.lane.b32.xlu0 %v4092, 96
    %v4203 = vpop.permute.xlu0 %4202
    %4204 = vrot.lane.b32.xlu0 %v4093, 96
    %v4205 = vpop.permute.xlu0 %4204
    %v4210 = vsel %vm681, %v3936, %v4119
    %v4211 = vsel %vm681, %v3937, %v4121
    %v4212 = vsel %vm681, %v3938, %v4123
    %v4213 = vsel %vm681, %v3939, %v4125
    %v4214 = vsel %vm3097, %v4210, %v4135
    %v4215 = vsel %vm3097, %v4211, %v4137
    %v4216 = vsel %vm3097, %v4212, %v4139
    %v4217 = vsel %vm3097, %v4213, %v4141
    %v4218 = vsel %vm3114, %v4214, %v4151
    %v4219 = vsel %vm3114, %v4215, %v4153
    %v4220 = vsel %vm3114, %v4216, %v4155
    %v4221 = vsel %vm3114, %v4217, %v4157
    %v4222 = vsel %vm681, %v3885, %v4167
    %v4223 = vsel %vm681, %v3890, %v4169
    %v4224 = vsel %vm681, %v3895, %v4171
    %v4225 = vsel %vm681, %v3900, %v4173
    %v4226 = vsel %vm3097, %v4222, %v4183
    %v4227 = vsel %vm3097, %v4223, %v4185
    %v4228 = vsel %vm3097, %v4224, %v4187
    %v4229 = vsel %vm3097, %v4225, %v4189
    %v4230 = vsel %vm3114, %v4226, %v4199
    %v4231 = vsel %vm3114, %v4227, %v4201
    %v4232 = vsel %vm3114, %v4228, %v4203
    %v4233 = vsel %vm3114, %v4229, %v4205
    %v4234 = vpack.c.bf16 %v4219, %v4218
    %v4235 = vpack.c.bf16 %v4231, %v4230
    %v4236 = vpack.c.bf16 %v4111, %v4110
    %v4237 = vpack.c.bf16 %v4221, %v4220
    %v4238 = vpack.c.bf16 %v4233, %v4232
    %v4239 = vpack.c.bf16 %v4113, %v4112
    %s4240 = scalar_lea.vmem %s2, 144
    %v4241 = vld [vmem:[%s4240] sm:$0xf]
    %v4242 = vld [vmem:[%s4240 + $0x4] sm:$0xf]
    %v4243 = vld [vmem:[%s4240 + $0x8] sm:$0xf]
    %v4244 = vld [vmem:[%s4240 + $0xc] sm:$0xf]
    %v4245 = vld [vmem:[%s4240 + $0x10] sm:$0xf]
    %v4246 = vld [vmem:[%s4240 + $0x14] sm:$0xf]
    %v4247 = vld [vmem:[%s4240 + $0x18] sm:$0xf]
    %v4248 = vld [vmem:[%s4240 + $0x1c] sm:$0xf]
    %v4249 = vld [vmem:[%s4240 + $0x20] sm:$0xf]
    %v4250 = vld [vmem:[%s4240 + $0x24] sm:$0xf]
    %v4251 = vld [vmem:[%s4240 + $0x28] sm:$0xf]
    %v4252 = vld [vmem:[%s4240 + $0x2c] sm:$0xf]
    %v4253 = vld [vmem:[%s4240 + $0x30] sm:$0xf]
    %v4254 = vld [vmem:[%s4240 + $0x34] sm:$0xf]
    %v4255 = vld [vmem:[%s4240 + $0x38] sm:$0xf]
    %v4256 = vld [vmem:[%s4240 + $0x3c] sm:$0xf]
    %v4257 = vld [vmem:[%s4240 + $0x40] sm:$0xf]
    %v4258 = vld [vmem:[%s4240 + $0x44] sm:$0xf]
    %v4259 = vld [vmem:[%s4240 + $0x48] sm:$0xf]
    %v4260 = vld [vmem:[%s4240 + $0x4c] sm:$0xf]
    %v4261 = vld [vmem:[%s4240 + $0x50] sm:$0xf]
    %v4262 = vld [vmem:[%s4240 + $0x54] sm:$0xf]
    %v4263 = vld [vmem:[%s4240 + $0x58] sm:$0xf]
    %v4264 = vld [vmem:[%s4240 + $0x5c] sm:$0xf]
    %v4265 = vld [vmem:[%s4240 + $0x60] sm:$0xf]
    %v4266 = vld [vmem:[%s4240 + $0x64] sm:$0xf]
    %v4267 = vld [vmem:[%s4240 + $0x68] sm:$0xf]
    %v4268 = vld [vmem:[%s4240 + $0x6c] sm:$0xf]
    %v4269 = vld [vmem:[%s4240 + $0x70] sm:$0xf]
    %v4270 = vld [vmem:[%s4240 + $0x74] sm:$0xf]
    %v4271 = vld [vmem:[%s4240 + $0x78] sm:$0xf]
    %v4272 = vld [vmem:[%s4240 + $0x7c] sm:$0xf]
    %v4273 = vld [vmem:[%s4240 + $0x80] sm:$0xf]
    %v4274 = vld [vmem:[%s4240 + $0x84] sm:$0xf]
    %v4275 = vld [vmem:[%s4240 + $0x88] sm:$0xf]
    %v4276 = vld [vmem:[%s4240 + $0x8c] sm:$0xf]
    %v4313 = vunpack.c.l.b16 %v4241
    %v4314 = vunpack.c.l.b16 %v4242
    %v4315 = vunpack.c.l.b16 %v4243
    %v4316 = vunpack.c.l.b16 %v4244
    %v4317 = vunpack.c.l.b16 %v4245
    %v4318 = vunpack.c.l.b16 %v4246
    %v4319 = vunpack.c.l.b16 %v4247
    %v4320 = vunpack.c.l.b16 %v4248
    %v4321 = vunpack.c.l.b16 %v4249
    %v4322 = vunpack.c.l.b16 %v4250
    %v4323 = vunpack.c.l.b16 %v4251
    %v4324 = vunpack.c.l.b16 %v4252
    %v4325 = vunpack.c.l.b16 %v4253
    %v4326 = vunpack.c.l.b16 %v4254
    %v4327 = vunpack.c.l.b16 %v4255
    %v4328 = vunpack.c.l.b16 %v4256
    %v4329 = vunpack.c.l.b16 %v4257
    %v4330 = vunpack.c.l.b16 %v4258
    %v4331 = vunpack.c.l.b16 %v4259
    %v4332 = vunpack.c.l.b16 %v4260
    %v4333 = vunpack.c.l.b16 %v4261
    %v4334 = vunpack.c.l.b16 %v4262
    %v4335 = vunpack.c.l.b16 %v4263
    %v4336 = vunpack.c.l.b16 %v4264
    %v4337 = vunpack.c.l.b16 %v4265
    %v4338 = vunpack.c.l.b16 %v4266
    %v4339 = vunpack.c.l.b16 %v4267
    %v4340 = vunpack.c.l.b16 %v4268
    %v4341 = vunpack.c.l.b16 %v4269
    %v4342 = vunpack.c.l.b16 %v4270
    %v4343 = vunpack.c.l.b16 %v4271
    %v4344 = vunpack.c.l.b16 %v4272
    %v4345 = vunpack.c.l.b16 %v4273
    %v4346 = vunpack.c.l.b16 %v4274
    %v4347 = vunpack.c.l.b16 %v4275
    %v4348 = vunpack.c.l.b16 %v4276
    %v4349 = vpack.c.b16 %v4314, %v4313
    %v4350 = vpack.c.b16 %v4316, %v4315
    %v4351 = vpack.c.b16 %v4318, %v4317
    %v4352 = vpack.c.b16 %v4320, %v4319
    %v4353 = vpack.c.b16 %v4322, %v4321
    %v4354 = vpack.c.b16 %v4324, %v4323
    %v4355 = vpack.c.b16 %v4326, %v4325
    %v4356 = vpack.c.b16 %v4328, %v4327
    %v4357 = vpack.c.b16 %v4330, %v4329
    %v4358 = vpack.c.b16 %v4332, %v4331
    %v4359 = vpack.c.b16 %v4334, %v4333
    %v4360 = vpack.c.b16 %v4336, %v4335
    %v4361 = vpack.c.b16 %v4338, %v4337
    %v4362 = vpack.c.b16 %v4340, %v4339
    %v4363 = vpack.c.b16 %v4342, %v4341
    %v4364 = vpack.c.b16 %v4344, %v4343
    %v4365 = vpack.c.b16 %v4346, %v4345
    %v4366 = vpack.c.b16 %v4348, %v4347
    %v4386 = vsel %vm681, %v4236, 0
    %v4389 = vsel %vm681, %v4239, 0
    %4391 = vmatprep.subr.bf16.mxu0 0
    %4392 = vmatpush1.bf16.msra.mxu0 %v4356
    %4393 = vmatprep.subr.bf16.mxu0 0
    %4394 = vmatpush1.bf16.msra.mxu0 %v4355
    %4395 = vmatprep.subr.bf16.mxu0 0
    %4396 = vmatpush1.bf16.msra.mxu0 %v4354
    %4397 = vmatprep.subr.bf16.mxu0 0
    %4398 = vmatpush1.bf16.msra.mxu0 %v4353
    %4399 = vmatprep.subr.bf16.mxu0 0
    %4400 = vmatpush1.bf16.msra.mxu0 %v4352
    %4401 = vmatprep.subr.bf16.mxu0 0
    %4402 = vmatpush1.bf16.msra.mxu0 %v4351
    %4403 = vmatprep.subr.bf16.mxu0 0
    %4404 = vmatpush1.bf16.msra.mxu0 %v4350
    %4405 = vmatprep.subr.bf16.mxu0 0
    %4406 = vmatpush1.bf16.msra.mxu0 %v4349
    %4407 = vmatprep.subr.bf16.mxu0 0
    %4408 = vmatpush2.bf16.msra.mxu0 %v4364
    %4409 = vmatprep.subr.bf16.mxu0 0
    %4410 = vmatpush2.bf16.msra.mxu0 %v4363
    %4411 = vmatprep.subr.bf16.mxu0 0
    %4412 = vmatpush2.bf16.msra.mxu0 %v4362
    %4413 = vmatprep.subr.bf16.mxu0 0
    %4414 = vmatpush2.bf16.msra.mxu0 %v4361
    %4415 = vmatprep.subr.bf16.mxu0 0
    %4416 = vmatpush2.bf16.msra.mxu0 %v4360
    %4417 = vmatprep.subr.bf16.mxu0 0
    %4418 = vmatpush2.bf16.msra.mxu0 %v4359
    %4419 = vmatprep.subr.bf16.mxu0 0
    %4420 = vmatpush2.bf16.msra.mxu0 %v4358
    %4421 = vmatprep.subr.bf16.mxu0 0
    %4422 = vmatpush2.bf16.msra.mxu0 %v4357
    %4423 = vmatprep.mubr.bf16.mxu0 %v4235
    %4424 = vmatmul.mubr.bf16.gmra.mxu0 %v4234
    %v4425 = vpop.f32.mrf.mxu0
    %v4426 = vadd.f32 0.0, %v4425
    %v4427 = vpop.f32.mrf.mxu0
    %v4428 = vpop.f32.mrf.mxu0
    %v4429 = vadd.f32 0.0, %v4428
    %v4430 = vpop.f32.mrf.mxu0
    %4431 = vmatprep.mubr.bf16.mxu0 %v4238
    %4432 = vmatmul.mubr.bf16.gmra.mxu0 %v4237
    %v4433 = vpop.f32.mrf.mxu0
    %v4434 = vadd.f32 0.0, %v4433
    %v4435 = vpop.f32.mrf.mxu0
    %v4436 = vpop.f32.mrf.mxu0
    %v4437 = vadd.f32 0.0, %v4436
    %v4438 = vpop.f32.mrf.mxu0
    %4439 = vdwg.mxu0
    %4440 = vmatprep.subr.bf16.mxu0 0
    %4441 = vmatpush1.bf16.msra.mxu0 0
    %4442 = vmatprep.subr.bf16.mxu0 0
    %4443 = vmatpush1.bf16.msra.mxu0 0
    %4444 = vmatprep.subr.bf16.mxu0 0
    %4445 = vmatpush1.bf16.msra.mxu0 0
    %4446 = vmatprep.subr.bf16.mxu0 0
    %4447 = vmatpush1.bf16.msra.mxu0 0
    %4448 = vmatprep.subr.bf16.mxu0 0
    %4449 = vmatpush1.bf16.msra.mxu0 0
    %4450 = vmatprep.subr.bf16.mxu0 0
    %4451 = vmatpush1.bf16.msra.mxu0 0
    %4452 = vmatprep.subr.bf16.mxu0 0
    %4453 = vmatpush1.bf16.msra.mxu0 %v4366
    %4454 = vmatprep.subr.bf16.mxu0 0
    %4455 = vmatpush1.bf16.msra.mxu0 %v4365
    %4456 = vmatprep.subr.bf16.mxu0 0
    %4457 = vmatpush2.bf16.msra.mxu0 0
    %4458 = vmatprep.subr.bf16.mxu0 0
    %4459 = vmatpush2.bf16.msra.mxu0 0
    %4460 = vmatprep.subr.bf16.mxu0 0
    %4461 = vmatpush2.bf16.msra.mxu0 0
    %4462 = vmatprep.subr.bf16.mxu0 0
    %4463 = vmatpush2.bf16.msra.mxu0 0
    %4464 = vmatprep.subr.bf16.mxu0 0
    %4465 = vmatpush2.bf16.msra.mxu0 0
    %4466 = vmatprep.subr.bf16.mxu0 0
    %4467 = vmatpush2.bf16.msra.mxu0 0
    %4468 = vmatprep.subr.bf16.mxu0 0
    %4469 = vmatpush2.bf16.msra.mxu0 0
    %4470 = vmatprep.subr.bf16.mxu0 0
    %4471 = vmatpush2.bf16.msra.mxu0 0
    %4472 = vmatprep.mubr.bf16.mxu0 0
    %4473 = vmatmul.mubr.bf16.gmra.mxu0 %v4386
    %v4474 = vpop.f32.mrf.mxu0
    %v4475 = vadd.f32 %v4426, %v4474
    %v4476 = vpop.f32.mrf.mxu0
    %v4477 = vpop.f32.mrf.mxu0
    %v4478 = vadd.f32 %v4429, %v4477
    %v4479 = vpop.f32.mrf.mxu0
    %4480 = vmatprep.mubr.bf16.mxu0 0
    %4481 = vmatmul.mubr.bf16.gmra.mxu0 %v4389
    %v4482 = vpop.f32.mrf.mxu0
    %v4483 = vadd.f32 %v4434, %v4482
    %v4484 = vpop.f32.mrf.mxu0
    %v4485 = vpop.f32.mrf.mxu0
    %v4486 = vadd.f32 %v4437, %v4485
    %v4487 = vpop.f32.mrf.mxu0
    %4488 = vdwg.mxu0
    %v4489 = vsel %vm681, %v4475, 0.0
    %v4490 = vsel %vm681, %v4478, 0.0
    %v4491 = vadd.f32 %v4489, %v4490
    %v4492 = vsel %vm681, %v4483, 0.0
    %v4493 = vadd.f32 %v4491, %v4492
    %v4494 = vsel %vm681, %v4486, 0.0
    %v4495 = vadd.f32 %v4493, %v4494
    %v4496 = vrot.slane %v4495, 4
    %v4497 = vadd.f32 %v4495, %v4496
    %v4498 = vrot.slane %v4497, 2
    %v4499 = vadd.f32 %v4497, %v4498
    %v4500 = vrot.slane %v4499, 1
    %v4501 = vadd.f32 %v4499, %v4500
    %v4502 = vmul.f32 %v4501, 0.03125
    %v4503 = vsub.f32 %v4475, %v4502
    %v4504 = vsub.f32 %v4478, %v4502
    %v4505 = vsub.f32 %v4483, %v4502
    %v4506 = vsub.f32 %v4486, %v4502
    %v4507 = vmul.f32 %v4503, %v4503
    %v4508 = vmul.f32 %v4504, %v4504
    %v4509 = vmul.f32 %v4505, %v4505
    %v4510 = vmul.f32 %v4506, %v4506
    %v4511 = vsel %vm681, %v4507, 0.0
    %v4512 = vsel %vm681, %v4508, 0.0
    %v4513 = vadd.f32 %v4511, %v4512
    %v4514 = vsel %vm681, %v4509, 0.0
    %v4515 = vadd.f32 %v4513, %v4514
    %v4516 = vsel %vm681, %v4510, 0.0
    %v4517 = vadd.f32 %v4515, %v4516
    %v4518 = vrot.slane %v4517, 4
    %v4519 = vadd.f32 %v4517, %v4518
    %v4520 = vrot.slane %v4519, 2
    %v4521 = vadd.f32 %v4519, %v4520
    %v4522 = vrot.slane %v4521, 1
    %v4523 = vadd.f32 %v4521, %v4522
    %v4524 = vmul.f32 %v4523, 0.03125
    %v4525 = vld [vmem:[%s3 + $0x2] sm:$0x1]
    %v4526 = vadd.f32 %v4524, 1e-05
    %v4527 = vrsqrt.pop %v4526
    %v4528 = vmul.f32 %v4525, %v4527
    %v4529 = vlaneseq
    %v4530 = vshrl.u32 %v4529, 7
    %v4531 = vsub.s32 0, %v4530
    %v4532 = vrot.slane %v4528, %v4531
    %v4533 = vmul.f32 %v4503, %v4532
    %v4534 = vmul.f32 %v4504, %v4532
    %v4535 = vmul.f32 %v4505, %v4532
    %v4536 = vmul.f32 %v4506, %v4532
    %v4537 = vld [vmem:[%s4 + $0x2] sm:$0x1]
    %v4538 = vlaneseq
    %v4539 = vshrl.u32 %v4538, 7
    %v4540 = vsub.s32 0, %v4539
    %v4541 = vrot.slane %v4537, %v4540
    %v4542 = vadd.f32 %v4533, %v4541
    %v4543 = vadd.f32 %v4534, %v4541
    %v4544 = vadd.f32 %v4535, %v4541
    %v4545 = vadd.f32 %v4536, %v4541
    %v4546 = vmax.f32 %v4542, 0.0
    %v4547 = vmax.f32 %v4543, 0.0
    %v4548 = vmax.f32 %v4544, 0.0
    %v4549 = vmax.f32 %v4545, 0.0
    %v4550 = vrot.slane %v4546, 1
    %v4551 = vrot.slane %v4547, 1
    %v4552 = vrot.slane %v4548, 1
    %v4553 = vrot.slane %v4549, 1
    %v4554 = vsel %vm1349, %v4552, %v4553
    %v4555 = vsel %vm1349, %v4551, %v4552
    %v4556 = vsel %vm1349, %v4550, %v4551
    %v4557 = vsel %vm1349, %v4553, %v4550
    %v4558 = vmax.f32 %v4546, %v4556
    %v4559 = vmax.f32 %v4547, %v4555
    %v4560 = vmax.f32 %v4548, %v4554
    %v4561 = vmax.f32 %v4549, %v4557
    %v4562 = vrot.slane %v4546, 4
    %v4563 = vrot.slane %v4547, 4
    %v4564 = vrot.slane %v4548, 4
    %v4565 = vrot.slane %v4549, 4
    %v4566 = vsel %vm3944, %v4564, %v4565
    %v4567 = vsel %vm3944, %v4563, %v4564
    %v4568 = vsel %vm3944, %v4562, %v4563
    %v4569 = vsel %vm3944, %v4565, %v4562
    %v4570 = vmax.f32 %v4558, %v4568
    %v4571 = vmax.f32 %v4559, %v4567
    %v4572 = vmax.f32 %v4560, %v4566
    %v4573 = vmax.f32 %v4561, %v4569
    %v4574 = vrot.slane %v4546, 5
    %v4575 = vrot.slane %v4547, 5
    %v4576 = vrot.slane %v4548, 5
    %v4577 = vrot.slane %v4549, 5
    %v4578 = vsel %vm3973, %v4576, %v4577
    %v4579 = vsel %vm3973, %v4575, %v4576
    %v4580 = vsel %vm3973, %v4574, %v4575
    %v4581 = vsel %vm3973, %v4577, %v4574
    %v4582 = vmax.f32 %v4570, %v4580
    %v4583 = vmax.f32 %v4571, %v4579
    %v4584 = vmax.f32 %v4572, %v4578
    %v4585 = vmax.f32 %v4573, %v4581
    %v4586 = vld [vmem:[%s10] sm:$0xff]
    %v4588 = vsel %vm681, %v4586, 0
    %4590 = vmatprep.subr.mxu0 0.0
    %4591 = vmatpush1.msra.mxu0 0.0
    %4592 = vmatprep.subr.mxu0 0.0
    %4593 = vmatpush1.msra.mxu0 0.0
    %4594 = vmatprep.subr.mxu0 0.0
    %4595 = vmatpush1.msra.mxu0 0.0
    %4596 = vmatprep.subr.mxu0 0.0
    %4597 = vmatpush1.msra.mxu0 0.0
    %4598 = vmatprep.subr.mxu0 0.0
    %4599 = vmatpush1.msra.mxu0 0.0
    %4600 = vmatprep.subr.mxu0 0.0
    %4601 = vmatpush1.msra.mxu0 0.0
    %4602 = vmatprep.subr.mxu0 0.0
    %4603 = vmatpush1.msra.mxu0 0.0
    %4604 = vmatprep.subr.mxu0 0.0
    %4605 = vmatpush1.msra.mxu0 0.0
    %4606 = vmatprep.subr.mxu0 0.0
    %4607 = vmatpush1.msra.mxu0 0.0
    %4608 = vmatprep.subr.mxu0 0.0
    %4609 = vmatpush1.msra.mxu0 0.0
    %4610 = vmatprep.subr.mxu0 0.0
    %4611 = vmatpush1.msra.mxu0 0.0
    %4612 = vmatprep.subr.mxu0 0.0
    %4613 = vmatpush1.msra.mxu0 0.0
    %4614 = vmatprep.subr.mxu0 0.0
    %4615 = vmatpush1.msra.mxu0 %v4585
    %4616 = vmatprep.subr.mxu0 0.0
    %4617 = vmatpush1.msra.mxu0 %v4584
    %4618 = vmatprep.subr.mxu0 0.0
    %4619 = vmatpush1.msra.mxu0 %v4583
    %4620 = vmatprep.subr.mxu0 0.0
    %4621 = vmatpush1.msra.mxu0 %v4582
    %4622 = vmatprep.subr.mxu0 0.0
    %4623 = vmatpush2.msra.mxu0 0.0
    %4624 = vmatprep.subr.mxu0 0.0
    %4625 = vmatpush2.msra.mxu0 0.0
    %4626 = vmatprep.subr.mxu0 0.0
    %4627 = vmatpush2.msra.mxu0 0.0
    %4628 = vmatprep.subr.mxu0 0.0
    %4629 = vmatpush2.msra.mxu0 0.0
    %4630 = vmatprep.subr.mxu0 0.0
    %4631 = vmatpush2.msra.mxu0 0.0
    %4632 = vmatprep.subr.mxu0 0.0
    %4633 = vmatpush2.msra.mxu0 0.0
    %4634 = vmatprep.subr.mxu0 0.0
    %4635 = vmatpush2.msra.mxu0 0.0
    %4636 = vmatprep.subr.mxu0 0.0
    %4637 = vmatpush2.msra.mxu0 0.0
    %4638 = vmatprep.subr.mxu0 0.0
    %4639 = vmatpush2.msra.mxu0 0.0
    %4640 = vmatprep.subr.mxu0 0.0
    %4641 = vmatpush2.msra.mxu0 0.0
    %4642 = vmatprep.subr.mxu0 0.0
    %4643 = vmatpush2.msra.mxu0 0.0
    %4644 = vmatprep.subr.mxu0 0.0
    %4645 = vmatpush2.msra.mxu0 0.0
    %4646 = vmatprep.subr.mxu0 0.0
    %4647 = vmatpush2.msra.mxu0 0.0
    %4648 = vmatprep.subr.mxu0 0.0
    %4649 = vmatpush2.msra.mxu0 0.0
    %4650 = vmatprep.subr.mxu0 0.0
    %4651 = vmatpush2.msra.mxu0 0.0
    %4652 = vmatprep.subr.mxu0 0.0
    %4653 = vmatpush2.msra.mxu0 0.0
    %4654 = vmatprep.mubr.f32.mxu0 0.0
    %4655 = vmatmul.mubr.f32.gmra.mxu0 %v4588
    %v4656 = vpop.f32.mrf.mxu0
    %v4657 = vadd.f32 0.0, %v4656
    %v4658 = vpop.f32.mrf.mxu0
    %4659 = vdwg.mxu0
    %v4660 = vld [vmem:[%s7] sm:$0xff]
    %v4661 = vrot.slane %v4657, 5
    %4663 = vset.pattern.permute.xlu0 0
    %4664 = vperm.xlu0 %4663, %v4660
    %v4665 = vpop.permute.xlu0 %4664
    %v4667 = vmul.f32 %v4661, %v4665
    %v4668 = vrot.slane %v4657, 6
    %4669 = vset.pattern.permute.xlu0 1
    %4670 = vperm.xlu0 %4669, %v4660
    %v4671 = vpop.permute.xlu0 %4670
    %v4673 = vmul.f32 %v4668, %v4671
    %v4674 = vrot.slane %v4657, 7
    %4675 = vset.pattern.permute.xlu0 2
    %4676 = vperm.xlu0 %4675, %v4660
    %v4677 = vpop.permute.xlu0 %4676
    %v4679 = vmul.f32 %v4674, %v4677
    %4680 = vset.pattern.permute.xlu0 3
    %4681 = vperm.xlu0 %4680, %v4660
    %v4682 = vpop.permute.xlu0 %4681
    %v4684 = vmul.f32 %v4674, %v4682
    %v4685 = vrot.slane %v4657, 1
    %4686 = vset.pattern.permute.xlu0 5
    %4687 = vperm.xlu0 %4686, %v4660
    %v4688 = vpop.permute.xlu0 %4687
    %v4690 = vmul.f32 %v4685, %v4688
    %4691 = vset.pattern.permute.xlu0 6
    %4692 = vperm.xlu0 %4691, %v4660
    %v4693 = vpop.permute.xlu0 %4692
    %v4695 = vmul.f32 %v4685, %v4693
    %v4696 = vrot.slane %v4657, 2
    %4697 = vset.pattern.permute.xlu0 7
    %4698 = vperm.xlu0 %4697, %v4660
    %v4699 = vpop.permute.xlu0 %4698
    %v4701 = vmul.f32 %v4696, %v4699
    %v4702 = vrot.slane %v4657, 3
    %4703 = vset.pattern.permute.xlu0 8
    %4704 = vperm.xlu0 %4703, %v4660
    %v4705 = vpop.permute.xlu0 %4704
    %v4707 = vmul.f32 %v4702, %v4705
    %4709 = vrot.lane.b32.xlu0 %v4673, 32
    %v4710 = vpop.permute.xlu0 %4709
    %4713 = vrot.lane.b32.xlu0 %v4679, 64
    %v4714 = vpop.permute.xlu0 %4713
    %4717 = vrot.lane.b32.xlu0 %v4684, 96
    %v4718 = vpop.permute.xlu0 %4717
    %4721 = vrot.lane.b32.xlu0 %v4690, 32
    %v4722 = vpop.permute.xlu0 %4721
    %4725 = vrot.lane.b32.xlu0 %v4695, 64
    %v4726 = vpop.permute.xlu0 %4725
    %4729 = vrot.lane.b32.xlu0 %v4701, 96
    %v4730 = vpop.permute.xlu0 %4729
    %v4732 = vsel %vm681, %v4667, %v4710
    %v4733 = vsel %vm3097, %v4732, %v4714
    %v4734 = vsel %vm3114, %v4733, %v4718
    %v4735 = vsel %vm681, %v4657, %v4722
    %v4736 = vsel %vm3097, %v4735, %v4726
    %v4737 = vsel %vm3114, %v4736, %v4730
    %v4738 = vpack.c.bf16 %v4734, %v4734
    %v4739 = vpack.c.bf16 %v4737, %v4737
    %v4740 = vpack.c.bf16 %v4707, %v4707
    %s4741 = scalar_lea.vmem %s2, 288
    %v4742 = vld [vmem:[%s4741] sm:$0xf]
    %v4743 = vld [vmem:[%s4741 + $0x4] sm:$0xf]
    %v4744 = vld [vmem:[%s4741 + $0x8] sm:$0xf]
    %v4745 = vld [vmem:[%s4741 + $0xc] sm:$0xf]
    %v4746 = vld [vmem:[%s4741 + $0x10] sm:$0xf]
    %v4747 = vld [vmem:[%s4741 + $0x14] sm:$0xf]
    %v4748 = vld [vmem:[%s4741 + $0x18] sm:$0xf]
    %v4749 = vld [vmem:[%s4741 + $0x1c] sm:$0xf]
    %v4750 = vld [vmem:[%s4741 + $0x20] sm:$0xf]
    %v4751 = vld [vmem:[%s4741 + $0x24] sm:$0xf]
    %v4752 = vld [vmem:[%s4741 + $0x28] sm:$0xf]
    %v4753 = vld [vmem:[%s4741 + $0x2c] sm:$0xf]
    %v4754 = vld [vmem:[%s4741 + $0x30] sm:$0xf]
    %v4755 = vld [vmem:[%s4741 + $0x34] sm:$0xf]
    %v4756 = vld [vmem:[%s4741 + $0x38] sm:$0xf]
    %v4757 = vld [vmem:[%s4741 + $0x3c] sm:$0xf]
    %v4758 = vld [vmem:[%s4741 + $0x40] sm:$0xf]
    %v4759 = vld [vmem:[%s4741 + $0x44] sm:$0xf]
    %v4760 = vld [vmem:[%s4741 + $0x48] sm:$0xf]
    %v4761 = vld [vmem:[%s4741 + $0x4c] sm:$0xf]
    %v4762 = vld [vmem:[%s4741 + $0x50] sm:$0xf]
    %v4763 = vld [vmem:[%s4741 + $0x54] sm:$0xf]
    %v4764 = vld [vmem:[%s4741 + $0x58] sm:$0xf]
    %v4765 = vld [vmem:[%s4741 + $0x5c] sm:$0xf]
    %v4766 = vld [vmem:[%s4741 + $0x60] sm:$0xf]
    %v4767 = vld [vmem:[%s4741 + $0x64] sm:$0xf]
    %v4768 = vld [vmem:[%s4741 + $0x68] sm:$0xf]
    %v4769 = vld [vmem:[%s4741 + $0x6c] sm:$0xf]
    %v4770 = vld [vmem:[%s4741 + $0x70] sm:$0xf]
    %v4771 = vld [vmem:[%s4741 + $0x74] sm:$0xf]
    %v4772 = vld [vmem:[%s4741 + $0x78] sm:$0xf]
    %v4773 = vld [vmem:[%s4741 + $0x7c] sm:$0xf]
    %v4774 = vld [vmem:[%s4741 + $0x80] sm:$0xf]
    %v4775 = vld [vmem:[%s4741 + $0x84] sm:$0xf]
    %v4776 = vld [vmem:[%s4741 + $0x88] sm:$0xf]
    %v4777 = vld [vmem:[%s4741 + $0x8c] sm:$0xf]
    %v4814 = vunpack.c.l.b16 %v4742
    %v4815 = vunpack.c.l.b16 %v4743
    %v4816 = vunpack.c.l.b16 %v4744
    %v4817 = vunpack.c.l.b16 %v4745
    %v4818 = vunpack.c.l.b16 %v4746
    %v4819 = vunpack.c.l.b16 %v4747
    %v4820 = vunpack.c.l.b16 %v4748
    %v4821 = vunpack.c.l.b16 %v4749
    %v4822 = vunpack.c.l.b16 %v4750
    %v4823 = vunpack.c.l.b16 %v4751
    %v4824 = vunpack.c.l.b16 %v4752
    %v4825 = vunpack.c.l.b16 %v4753
    %v4826 = vunpack.c.l.b16 %v4754
    %v4827 = vunpack.c.l.b16 %v4755
    %v4828 = vunpack.c.l.b16 %v4756
    %v4829 = vunpack.c.l.b16 %v4757
    %v4830 = vunpack.c.l.b16 %v4758
    %v4831 = vunpack.c.l.b16 %v4759
    %v4832 = vunpack.c.l.b16 %v4760
    %v4833 = vunpack.c.l.b16 %v4761
    %v4834 = vunpack.c.l.b16 %v4762
    %v4835 = vunpack.c.l.b16 %v4763
    %v4836 = vunpack.c.l.b16 %v4764
    %v4837 = vunpack.c.l.b16 %v4765
    %v4838 = vunpack.c.l.b16 %v4766
    %v4839 = vunpack.c.l.b16 %v4767
    %v4840 = vunpack.c.l.b16 %v4768
    %v4841 = vunpack.c.l.b16 %v4769
    %v4842 = vunpack.c.l.b16 %v4770
    %v4843 = vunpack.c.l.b16 %v4771
    %v4844 = vunpack.c.l.b16 %v4772
    %v4845 = vunpack.c.l.b16 %v4773
    %v4846 = vunpack.c.l.b16 %v4774
    %v4847 = vunpack.c.l.b16 %v4775
    %v4848 = vunpack.c.l.b16 %v4776
    %v4849 = vunpack.c.l.b16 %v4777
    %v4850 = vpack.c.b16 %v4815, %v4814
    %v4851 = vpack.c.b16 %v4817, %v4816
    %v4852 = vpack.c.b16 %v4819, %v4818
    %v4853 = vpack.c.b16 %v4821, %v4820
    %v4854 = vpack.c.b16 %v4823, %v4822
    %v4855 = vpack.c.b16 %v4825, %v4824
    %v4856 = vpack.c.b16 %v4827, %v4826
    %v4857 = vpack.c.b16 %v4829, %v4828
    %v4858 = vpack.c.b16 %v4831, %v4830
    %v4859 = vpack.c.b16 %v4833, %v4832
    %v4860 = vpack.c.b16 %v4835, %v4834
    %v4861 = vpack.c.b16 %v4837, %v4836
    %v4862 = vpack.c.b16 %v4839, %v4838
    %v4863 = vpack.c.b16 %v4841, %v4840
    %v4864 = vpack.c.b16 %v4843, %v4842
    %v4865 = vpack.c.b16 %v4845, %v4844
    %v4866 = vpack.c.b16 %v4847, %v4846
    %v4867 = vpack.c.b16 %v4849, %v4848
    %v4887 = vsel %vm681, %v4740, 0
    %4889 = vmatprep.subr.bf16.mxu0 0
    %4890 = vmatpush1.bf16.msra.mxu0 %v4857
    %4891 = vmatprep.subr.bf16.mxu0 0
    %4892 = vmatpush1.bf16.msra.mxu0 %v4856
    %4893 = vmatprep.subr.bf16.mxu0 0
    %4894 = vmatpush1.bf16.msra.mxu0 %v4855
    %4895 = vmatprep.subr.bf16.mxu0 0
    %4896 = vmatpush1.bf16.msra.mxu0 %v4854
    %4897 = vmatprep.subr.bf16.mxu0 0
    %4898 = vmatpush1.bf16.msra.mxu0 %v4853
    %4899 = vmatprep.subr.bf16.mxu0 0
    %4900 = vmatpush1.bf16.msra.mxu0 %v4852
    %4901 = vmatprep.subr.bf16.mxu0 0
    %4902 = vmatpush1.bf16.msra.mxu0 %v4851
    %4903 = vmatprep.subr.bf16.mxu0 0
    %4904 = vmatpush1.bf16.msra.mxu0 %v4850
    %4905 = vmatprep.subr.bf16.mxu0 0
    %4906 = vmatpush2.bf16.msra.mxu0 %v4865
    %4907 = vmatprep.subr.bf16.mxu0 0
    %4908 = vmatpush2.bf16.msra.mxu0 %v4864
    %4909 = vmatprep.subr.bf16.mxu0 0
    %4910 = vmatpush2.bf16.msra.mxu0 %v4863
    %4911 = vmatprep.subr.bf16.mxu0 0
    %4912 = vmatpush2.bf16.msra.mxu0 %v4862
    %4913 = vmatprep.subr.bf16.mxu0 0
    %4914 = vmatpush2.bf16.msra.mxu0 %v4861
    %4915 = vmatprep.subr.bf16.mxu0 0
    %4916 = vmatpush2.bf16.msra.mxu0 %v4860
    %4917 = vmatprep.subr.bf16.mxu0 0
    %4918 = vmatpush2.bf16.msra.mxu0 %v4859
    %4919 = vmatprep.subr.bf16.mxu0 0
    %4920 = vmatpush2.bf16.msra.mxu0 %v4858
    %4921 = vmatprep.mubr.bf16.mxu0 %v4739
    %4922 = vmatmul.mubr.bf16.gmra.mxu0 %v4738
    %v4923 = vpop.f32.mrf.mxu0
    %v4924 = vadd.f32 0.0, %v4923
    %v4925 = vpop.f32.mrf.mxu0
    %v4926 = vpop.f32.mrf.mxu0
    %v4927 = vpop.f32.mrf.mxu0
    %4928 = vdwg.mxu0
    %4929 = vmatprep.subr.bf16.mxu0 0
    %4930 = vmatpush1.bf16.msra.mxu0 0
    %4931 = vmatprep.subr.bf16.mxu0 0
    %4932 = vmatpush1.bf16.msra.mxu0 0
    %4933 = vmatprep.subr.bf16.mxu0 0
    %4934 = vmatpush1.bf16.msra.mxu0 0
    %4935 = vmatprep.subr.bf16.mxu0 0
    %4936 = vmatpush1.bf16.msra.mxu0 0
    %4937 = vmatprep.subr.bf16.mxu0 0
    %4938 = vmatpush1.bf16.msra.mxu0 0
    %4939 = vmatprep.subr.bf16.mxu0 0
    %4940 = vmatpush1.bf16.msra.mxu0 0
    %4941 = vmatprep.subr.bf16.mxu0 0
    %4942 = vmatpush1.bf16.msra.mxu0 %v4867
    %4943 = vmatprep.subr.bf16.mxu0 0
    %4944 = vmatpush1.bf16.msra.mxu0 %v4866
    %4945 = vmatprep.subr.bf16.mxu0 0
    %4946 = vmatpush2.bf16.msra.mxu0 0
    %4947 = vmatprep.subr.bf16.mxu0 0
    %4948 = vmatpush2.bf16.msra.mxu0 0
    %4949 = vmatprep.subr.bf16.mxu0 0
    %4950 = vmatpush2.bf16.msra.mxu0 0
    %4951 = vmatprep.subr.bf16.mxu0 0
    %4952 = vmatpush2.bf16.msra.mxu0 0
    %4953 = vmatprep.subr.bf16.mxu0 0
    %4954 = vmatpush2.bf16.msra.mxu0 0
    %4955 = vmatprep.subr.bf16.mxu0 0
    %4956 = vmatpush2.bf16.msra.mxu0 0
    %4957 = vmatprep.subr.bf16.mxu0 0
    %4958 = vmatpush2.bf16.msra.mxu0 0
    %4959 = vmatprep.subr.bf16.mxu0 0
    %4960 = vmatpush2.bf16.msra.mxu0 0
    %4961 = vmatprep.mubr.bf16.mxu0 0
    %4962 = vmatmul.mubr.bf16.gmra.mxu0 %v4887
    %v4963 = vpop.f32.mrf.mxu0
    %v4964 = vadd.f32 %v4924, %v4963
    %v4965 = vpop.f32.mrf.mxu0
    %v4966 = vpop.f32.mrf.mxu0
    %v4967 = vpop.f32.mrf.mxu0
    %4968 = vdwg.mxu0
    %v4969 = vsel %vm681, %v4964, 0.0
    %v4970 = vrot.slane %v4969, 4
    %v4971 = vadd.f32 %v4969, %v4970
    %v4972 = vrot.slane %v4971, 2
    %v4973 = vadd.f32 %v4971, %v4972
    %v4974 = vrot.slane %v4973, 1
    %v4975 = vadd.f32 %v4973, %v4974
    %v4976 = vmul.f32 %v4975, 0.125
    %v4977 = vsub.f32 %v4964, %v4976
    %v4978 = vmul.f32 %v4977, %v4977
    %v4979 = vsel %vm681, %v4978, 0.0
    %v4980 = vrot.slane %v4979, 4
    %v4981 = vadd.f32 %v4979, %v4980
    %v4982 = vrot.slane %v4981, 2
    %v4983 = vadd.f32 %v4981, %v4982
    %v4984 = vrot.slane %v4983, 1
    %v4985 = vadd.f32 %v4983, %v4984
    %v4986 = vmul.f32 %v4985, 0.125
    %v4987 = vld [vmem:[%s3 + $0x3] sm:$0x1]
    %v4988 = vadd.f32 %v4986, 1e-05
    %v4989 = vrsqrt.pop %v4988
    %v4990 = vmul.f32 %v4987, %v4989
    %v4991 = vlaneseq
    %v4992 = vshrl.u32 %v4991, 7
    %v4993 = vsub.s32 0, %v4992
    %v4994 = vrot.slane %v4990, %v4993
    %v4995 = vmul.f32 %v4977, %v4994
    %v4996 = vld [vmem:[%s4 + $0x3] sm:$0x1]
    %v4997 = vlaneseq
    %v4998 = vshrl.u32 %v4997, 7
    %v4999 = vsub.s32 0, %v4998
    %v5000 = vrot.slane %v4996, %v4999
    %v5001 = vadd.f32 %v4995, %v5000
    %v5002 = vmax.f32 %v5001, 0.0
    %v5003 = vrot.slane %v5002, 1
    %v5004 = vmax.f32 %v5002, %v5003
    %v5005 = vrot.slane %v5002, 2
    %v5006 = vmax.f32 %v5004, %v5005
    %v5007 = vrot.slane %v5002, 3
    %v5008 = vmax.f32 %v5006, %v5007
    %v5009 = vld [vmem:[%s11] sm:$0x3]
    %vm5010 = vcmask 64512
    %v5012 = vsel %vm5010, %v5009, 0
    %5014 = vmatprep.subr.mxu0 0.0
    %5015 = vmatpush1.msra.mxu0 0.0
    %5016 = vmatprep.subr.mxu0 0.0
    %5017 = vmatpush1.msra.mxu0 0.0
    %5018 = vmatprep.subr.mxu0 0.0
    %5019 = vmatpush1.msra.mxu0 0.0
    %5020 = vmatprep.subr.mxu0 0.0
    %5021 = vmatpush1.msra.mxu0 0.0
    %5022 = vmatprep.subr.mxu0 0.0
    %5023 = vmatpush1.msra.mxu0 0.0
    %5024 = vmatprep.subr.mxu0 0.0
    %5025 = vmatpush1.msra.mxu0 0.0
    %5026 = vmatprep.subr.mxu0 0.0
    %5027 = vmatpush1.msra.mxu0 0.0
    %5028 = vmatprep.subr.mxu0 0.0
    %5029 = vmatpush1.msra.mxu0 0.0
    %5030 = vmatprep.subr.mxu0 0.0
    %5031 = vmatpush1.msra.mxu0 0.0
    %5032 = vmatprep.subr.mxu0 0.0
    %5033 = vmatpush1.msra.mxu0 0.0
    %5034 = vmatprep.subr.mxu0 0.0
    %5035 = vmatpush1.msra.mxu0 0.0
    %5036 = vmatprep.subr.mxu0 0.0
    %5037 = vmatpush1.msra.mxu0 0.0
    %5038 = vmatprep.subr.mxu0 0.0
    %5039 = vmatpush1.msra.mxu0 0.0
    %5040 = vmatprep.subr.mxu0 0.0
    %5041 = vmatpush1.msra.mxu0 0.0
    %5042 = vmatprep.subr.mxu0 0.0
    %5043 = vmatpush1.msra.mxu0 0.0
    %5044 = vmatprep.subr.mxu0 0.0
    %5045 = vmatpush1.msra.mxu0 %v5008
    %5046 = vmatprep.subr.mxu0 0.0
    %5047 = vmatpush2.msra.mxu0 0.0
    %5048 = vmatprep.subr.mxu0 0.0
    %5049 = vmatpush2.msra.mxu0 0.0
    %5050 = vmatprep.subr.mxu0 0.0
    %5051 = vmatpush2.msra.mxu0 0.0
    %5052 = vmatprep.subr.mxu0 0.0
    %5053 = vmatpush2.msra.mxu0 0.0
    %5054 = vmatprep.subr.mxu0 0.0
    %5055 = vmatpush2.msra.mxu0 0.0
    %5056 = vmatprep.subr.mxu0 0.0
    %5057 = vmatpush2.msra.mxu0 0.0
    %5058 = vmatprep.subr.mxu0 0.0
    %5059 = vmatpush2.msra.mxu0 0.0
    %5060 = vmatprep.subr.mxu0 0.0
    %5061 = vmatpush2.msra.mxu0 0.0
    %5062 = vmatprep.subr.mxu0 0.0
    %5063 = vmatpush2.msra.mxu0 0.0
    %5064 = vmatprep.subr.mxu0 0.0
    %5065 = vmatpush2.msra.mxu0 0.0
    %5066 = vmatprep.subr.mxu0 0.0
    %5067 = vmatpush2.msra.mxu0 0.0
    %5068 = vmatprep.subr.mxu0 0.0
    %5069 = vmatpush2.msra.mxu0 0.0
    %5070 = vmatprep.subr.mxu0 0.0
    %5071 = vmatpush2.msra.mxu0 0.0
    %5072 = vmatprep.subr.mxu0 0.0
    %5073 = vmatpush2.msra.mxu0 0.0
    %5074 = vmatprep.subr.mxu0 0.0
    %5075 = vmatpush2.msra.mxu0 0.0
    %5076 = vmatprep.subr.mxu0 0.0
    %5077 = vmatpush2.msra.mxu0 0.0
    %5078 = vmatprep.mubr.f32.mxu0 0.0
    %5079 = vmatmul.mubr.f32.gmra.mxu0 %v5012
    %v5080 = vpop.f32.mrf.mxu0
    %v5081 = vadd.f32 0.0, %v5080
    %v5082 = vpop.f32.mrf.mxu0
    %5083 = vdwg.mxu0
    %v5084 = vld [vmem:[%s12] sm:$0xff]
    %v5085 = vld [vmem:[%s12 + $0x8] sm:$0xff]
    %v5086 = vld [vmem:[%s12 + $0x10] sm:$0xff]
    %v5087 = vld [vmem:[%s12 + $0x18] sm:$0xff]
    %v5088 = vld [vmem:[%s13] sm:$0x1]
    %v5090 = vlaneseq
    %v5091 = vshrl.u32 %v5090, 7
    %v5092 = vsub.s32 0, %v5091
    %v5093 = vrot.slane %v5088, %v5092
    %v5096 = vsel %vm681, %v5081, 0
    %5098 = vmatprep.subr.mxu0 0.0
    %5099 = vmatpush1.msra.mxu0 0.0
    %5100 = vmatprep.subr.mxu0 0.0
    %5101 = vmatpush1.msra.mxu0 0.0
    %5102 = vmatprep.subr.mxu0 0.0
    %5103 = vmatpush1.msra.mxu0 0.0
    %5104 = vmatprep.subr.mxu0 0.0
    %5105 = vmatpush1.msra.mxu0 0.0
    %5106 = vmatprep.subr.mxu0 0.0
    %5107 = vmatpush1.msra.mxu0 0.0
    %5108 = vmatprep.subr.mxu0 0.0
    %5109 = vmatpush1.msra.mxu0 0.0
    %5110 = vmatprep.subr.mxu0 0.0
    %5111 = vmatpush1.msra.mxu0 0.0
    %5112 = vmatprep.subr.mxu0 0.0
    %5113 = vmatpush1.msra.mxu0 0.0
    %5114 = vmatprep.subr.mxu0 0.0
    %5115 = vmatpush1.msra.mxu0 0.0
    %5116 = vmatprep.subr.mxu0 0.0
    %5117 = vmatpush1.msra.mxu0 0.0
    %5118 = vmatprep.subr.mxu0 0.0
    %5119 = vmatpush1.msra.mxu0 0.0
    %5120 = vmatprep.subr.mxu0 0.0
    %5121 = vmatpush1.msra.mxu0 0.0
    %5122 = vmatprep.subr.mxu0 0.0
    %5123 = vmatpush1.msra.mxu0 %v5087
    %5124 = vmatprep.subr.mxu0 0.0
    %5125 = vmatpush1.msra.mxu0 %v5086
    %5126 = vmatprep.subr.mxu0 0.0
    %5127 = vmatpush1.msra.mxu0 %v5085
    %5128 = vmatprep.subr.mxu0 0.0
    %5129 = vmatpush1.msra.mxu0 %v5084
    %5130 = vmatprep.subr.mxu0 0.0
    %5131 = vmatpush2.msra.mxu0 0.0
    %5132 = vmatprep.subr.mxu0 0.0
    %5133 = vmatpush2.msra.mxu0 0.0
    %5134 = vmatprep.subr.mxu0 0.0
    %5135 = vmatpush2.msra.mxu0 0.0
    %5136 = vmatprep.subr.mxu0 0.0
    %5137 = vmatpush2.msra.mxu0 0.0
    %5138 = vmatprep.subr.mxu0 0.0
    %5139 = vmatpush2.msra.mxu0 0.0
    %5140 = vmatprep.subr.mxu0 0.0
    %5141 = vmatpush2.msra.mxu0 0.0
    %5142 = vmatprep.subr.mxu0 0.0
    %5143 = vmatpush2.msra.mxu0 0.0
    %5144 = vmatprep.subr.mxu0 0.0
    %5145 = vmatpush2.msra.mxu0 0.0
    %5146 = vmatprep.subr.mxu0 0.0
    %5147 = vmatpush2.msra.mxu0 0.0
    %5148 = vmatprep.subr.mxu0 0.0
    %5149 = vmatpush2.msra.mxu0 0.0
    %5150 = vmatprep.subr.mxu0 0.0
    %5151 = vmatpush2.msra.mxu0 0.0
    %5152 = vmatprep.subr.mxu0 0.0
    %5153 = vmatpush2.msra.mxu0 0.0
    %5154 = vmatprep.subr.mxu0 0.0
    %5155 = vmatpush2.msra.mxu0 0.0
    %5156 = vmatprep.subr.mxu0 0.0
    %5157 = vmatpush2.msra.mxu0 0.0
    %5158 = vmatprep.subr.mxu0 0.0
    %5159 = vmatpush2.msra.mxu0 0.0
    %5160 = vmatprep.subr.mxu0 0.0
    %5161 = vmatpush2.msra.mxu0 0.0
    %5162 = vmatprep.mubr.f32.mxu0 0.0
    %5163 = vmatmul.mubr.f32.gmra.mxu0 %v5096
    %v5164 = vpop.f32.mrf.mxu0
    %v5165 = vadd.f32 %v5093, %v5164
    %v5166 = vpop.f32.mrf.mxu0
    %5167 = vdwg.mxu0
    %vm5168 = vcmask 33792
    %5169 = vst.msk [vmem:[#allocation2] sm:$0x3] %vm5168, %v5165
    // Predicated region
    $region58: #{forward.1} parent=1 // pred_check
      _
    $region59: #{forward.1} parent=1 // pred_check_branch
      %5171 = sbr.rel (0) target = $region61
    $region60: #{forward.1} parent=1 // pred_region
      %s5173 = ssub.s32 32, 32
      %5174 = vsyncadd [#allocation3], %s5173
      %s5176 = sshll.u32 [#allocation2], 4
      %s5177 = int_to_ptr.vmem [resolvable:$true] %s5176
      %5179 = dma.vmem_to_hbm [thread:$0]  %s5177, 32, %s14, [#allocation3]
    $region61: #{forward.1} parent=1 // pred_fallthru
      _
    // Predicated region
    $region62: #{forward.1} parent=1 // pred_check
      _
    $region63: #{forward.1} parent=1 // pred_check_branch
      %5181 = sbr.rel (0) target = $region65
    $region64: #{forward.1} parent=1 // pred_region
      %5182 = dma.done [#allocation3], 32
    $region65: #{forward.1} parent=1 // pred_fallthru
      _
    %5183 = vsyncpa [#allocation3], 1

</llo_original>
